<compile_context>
chip_gen: v6e
topology: v6e:2x2x1
jax: 0.10.0
libtpu: 0.0.40
codegen_flags: <defaults>
</compile_context>

<pallas_src>
import functools
import math

import jax
import jax.numpy as jnp
from jax.experimental import pallas as pl
from jax.experimental.pallas import tpu as pltpu  # noqa: F401  (TPU backend)


# ---------------------------------------------------------------------------
# fused kernel: IB -> transformer (depth layers, unrolled) -> score + sigmoid
# ---------------------------------------------------------------------------
def _fused_kernel(heads, depth, dv,
                  v_ref, a_ref, eps_ref,
                  we_ref, be_ref, wms_ref, bms_ref,
                  ln1g_ref, ln1b_ref, wqkv_ref, wo_ref, bo_ref,
                  ln2g_ref, ln2b_ref, w1_ref, b1_ref, w2_ref, b2_ref,
                  ws1_ref, bs1_ref, ws2_ref, bs2_ref,
                  score_ref, kl_ref):
    f32 = jnp.float32
    v = v_ref[...]                                   # (B, N, Dv)
    a = a_ref[...]                                   # (B, N, Da)
    eps = eps_ref[...]                               # (B, N, bdim)
    bdim = eps.shape[-1]

    # ---------------- InformationBottleneck ----------------
    # cat([v, a], -1) @ We  ==  v @ We[:Dv] + a @ We[Dv:]   (concat folded away)
    we = we_ref[...]                                 # (Dv+Da, Dv+Da)
    h = (jnp.einsum('bnd,de->bne', v, we[:dv, :], preferred_element_type=f32)
         + jnp.einsum('bnd,de->bne', a, we[dv:, :], preferred_element_type=f32)
         + be_ref[...])
    h = jnp.maximum(h, 0.0)                          # encoder ReLU

    # fused [mu | std] heads: one (D, 2*bdim) matmul
    ms = jnp.einsum('bnd,de->bne', h, wms_ref[...], preferred_element_type=f32) + bms_ref[...]
    mu = ms[:, :, :bdim]
    t = ms[:, :, bdim:] - 5.0                        # F.softplus(x - 5), threshold=20
    s = jnp.where(t > 20.0, t, jnp.log1p(jnp.exp(t)))

    z = mu + eps * s                                 # reparameterize (s used as std)
    # kl_divergence(mu, logvar=s) = -0.5 * sum(1 + s - mu^2 - exp(s))
    kl = -0.5 * jnp.sum(1.0 + s - mu * mu - jnp.exp(s))
    kl_ref[...] = jnp.full((1, 1), kl, dtype=f32)

    # ---------------- Transformer (pre-norm, depth unrolled) ----------------
    dm = z.shape[-1]
    dh = dm // heads
    scale = 1.0 / math.sqrt(dh)

    def _ln(x, g, b):
        mean = jnp.mean(x, axis=-1, keepdims=True)
        var = jnp.mean((x - mean) ** 2, axis=-1, keepdims=True)
        return (x - mean) * jax.lax.rsqrt(var + 1e-5) * g + b

    ln1_g = ln1g_ref[...]
    ln1_b = ln1b_ref[...]
    ln2_g = ln2g_ref[...]
    ln2_b = ln2b_ref[...]
    wqkv_all = wqkv_ref[...]
    wo_all = wo_ref[...]
    bo_all = bo_ref[...]
    w1_all = w1_ref[...]
    b1_all = b1_ref[...]
    w2_all = w2_ref[...]
    b2_all = b2_ref[...]

    x = z
    for l in range(depth):                           # depth is small & static -> unrolled
        # --- multi-head self-attention (fused QKV) ---
        y = _ln(x, ln1_g[l], ln1_b[l])
        qkv = jnp.einsum('bnd,de->bne', y, wqkv_all[l], preferred_element_type=f32)
        wo_l = wo_all[l]
        attn = jnp.zeros_like(x)
        for hd in range(heads):
            lo, hi = hd * dh, (hd + 1) * dh
            qs = qkv[:, :, lo:hi]
            ks = qkv[:, :, dm + lo:dm + hi]
            vs = qkv[:, :, 2 * dm + lo:2 * dm + hi]
            sc = jnp.einsum('bqd,bkd->bqk', qs, ks, preferred_element_type=f32) * scale
            sc = sc - jnp.max(sc, axis=-1, keepdims=True)
            e = jnp.exp(sc)
            p = e * pl.reciprocal(jnp.sum(e, axis=-1, keepdims=True), approx=True)
            ho = jnp.einsum('bqk,bkd->bqd', p, vs, preferred_element_type=f32)
            # fold head output straight into the output projection (no concatenate)
            attn = attn + jnp.einsum('bnd,de->bne', ho, wo_l[lo:hi, :],
                                     preferred_element_type=f32)
        x = x + attn + bo_all[l]

        # --- MLP (ReLU) ---
        y2 = _ln(x, ln2_g[l], ln2_b[l])
        hm = jnp.einsum('bnd,dm->bnm', y2, w1_all[l], preferred_element_type=f32) + b1_all[l]
        hm = jnp.maximum(hm, 0.0)
        x = x + jnp.einsum('bnm,md->bnd', hm, w2_all[l], preferred_element_type=f32) + b2_all[l]

    # ---------------- ScoreFCN (Linear -> ReLU -> Linear(1)) + sigmoid ------
    hs = jnp.einsum('bnd,dk->bnk', x, ws1_ref[...], preferred_element_type=f32) + bs1_ref[...]
    hs = jnp.maximum(hs, 0.0)
    # 1-wide output layer done as a lane reduce (avoids a (M,1) tensor)
    logit = jnp.sum(hs * ws2_ref[...], axis=-1) + bs2_ref[...]        # (B, N)
    score_ref[...] = pl.reciprocal(1.0 + jnp.exp(-logit), approx=True)


# ---------------------------------------------------------------------------
# forward wrapper: one pallas_call for the whole module
# ---------------------------------------------------------------------------
def sl_module_eib_forward(params, v, a, mask, *, heads, depth, rng_key):
    """SL_module_EIB.forward -> (score_m, kl_loss_m)."""
    del mask  # TODO(synk): accepted but unused, matching the reference forward
    B, N, dv = v.shape
    ib, tr, sc = params["ib"], params["tr"], params["sc"]
    d_in = ib["w_enc"].shape[0]
    d_bn = ib["w_ms"].shape[1] // 2
    mlp = tr["w_1"].shape[-1]
    hid = sc["w_1"].shape[-1]

    eps = jax.random.normal(rng_key, (B, N, d_bn), jnp.float32)

    ins = (v, a, eps,
           ib["w_enc"], ib["b_enc"], ib["w_ms"], ib["b_ms"],
           tr["ln1_g"], tr["ln1_b"], tr["w_qkv"], tr["w_o"], tr["b_o"],
           tr["ln2_g"], tr["ln2_b"], tr["w_1"], tr["b_1"], tr["w_2"], tr["b_2"],
           sc["w_1"], sc["b_1"], sc["w_2"], sc["b_2"])

    # advisory cost estimate for XLA scheduling around the custom call
    M = B * N
    flops = int(2 * M * d_in * d_in
                + 2 * M * d_in * 2 * d_bn
                + depth * (2 * M * d_bn * 3 * d_bn
                           + 4 * M * N * d_bn
                           + 2 * M * d_bn * d_bn
                           + 4 * M * d_bn * mlp)
                + 2 * M * d_bn * hid + 2 * M * hid)
    transcend = int(2 * M * d_bn + depth * heads * M * N + M)
    bytes_acc = int(sum(x.size * x.dtype.itemsize for x in ins) + (M + 1) * 4)

    out_shape = (jax.ShapeDtypeStruct((B, N), jnp.float32),   # score (lane = seq)
                 jax.ShapeDtypeStruct((1, 1), jnp.float32))   # kl divergence

    score, kl = pl.pallas_call(
        functools.partial(_fused_kernel, heads, depth, dv),
        out_shape=out_shape,
        cost_estimate=pl.CostEstimate(flops=flops, transcendentals=transcend,
                                      bytes_accessed=bytes_acc),
    )(*ins)
    return score, kl[0, 0]


# ---------------------------------------------------------------------------
# parameter construction (deterministic, PyTorch-default-like uniform init)
# ---------------------------------------------------------------------------
def _linear(key, din, dout):
    kw, kb = jax.random.split(key)
    bound = 1.0 / math.sqrt(din)
    w = jax.random.uniform(kw, (din, dout), jnp.float32, -bound, bound)
    b = jax.random.uniform(kb, (1, dout), jnp.float32, -bound, bound)
    return w, b


def _make_ib(key, input_dim, bottleneck_dim):
    ks = jax.random.split(key, 2)
    w_enc, b_enc = _linear(ks[0], input_dim, input_dim)
    # fused [mu | std] heads: one (D, 2*bdim) weight
    w_ms, b_ms = _linear(ks[1], input_dim, 2 * bottleneck_dim)
    return dict(w_enc=w_enc, b_enc=b_enc, w_ms=w_ms, b_ms=b_ms)


def _make_transformer(key, dim, depth, mlp_dim):
    wqkv, wo, bo, w1, b1, w2, b2 = [], [], [], [], [], [], []
    for lk in jax.random.split(key, depth):
        ks = jax.random.split(lk, 4)
        wq3, _ = _linear(ks[0], dim, 3 * dim)      # fused QKV, no bias (ViT to_qkv style)
        wol, bol = _linear(ks[1], dim, dim)
        w1l, b1l = _linear(ks[2], dim, mlp_dim)
        w2l, b2l = _linear(ks[3], mlp_dim, dim)
        wqkv.append(wq3); wo.append(wol); bo.append(bol)
        w1.append(w1l); b1.append(b1l); w2.append(w2l); b2.append(b2l)
    st = lambda xs: jnp.stack(xs, axis=0)          # per-layer weights stacked on depth axis
    return dict(
        ln1_g=jnp.ones((depth, 1, dim), jnp.float32),
        ln1_b=jnp.zeros((depth, 1, dim), jnp.float32),
        w_qkv=st(wqkv), w_o=st(wo), b_o=st(bo),
        ln2_g=jnp.ones((depth, 1, dim), jnp.float32),
        ln2_b=jnp.zeros((depth, 1, dim), jnp.float32),
        w_1=st(w1), b_1=st(b1), w_2=st(w2), b_2=st(b2))


def _make_score(key, emb_dim):
    k1, k2 = jax.random.split(key)
    w_1, b_1 = _linear(k1, emb_dim, emb_dim // 2)
    w_2, b_2 = _linear(k2, emb_dim // 2, 1)
    # store the 1-wide output layer lane-dense: (1, 1, hid) row + (1, 1) bias
    return dict(w_1=w_1, b_1=b_1,
                w_2=jnp.transpose(w_2).reshape(1, 1, emb_dim // 2),
                b_2=b_2.reshape(1, 1))


def make_params(key, visual_input_dim, audio_input_dim, depth, mlp_dim,
                visual_bottleneck_dim, audio_bottleneck_dim):
    d_in = visual_input_dim + audio_input_dim
    d_bn = visual_bottleneck_dim + audio_bottleneck_dim
    k_ib, k_tr, k_sc = jax.random.split(key, 3)
    return dict(ib=_make_ib(k_ib, d_in, d_bn),
                tr=_make_transformer(k_tr, d_bn, depth, mlp_dim),
                sc=_make_score(k_sc, d_bn))


# ---------------------------------------------------------------------------
# main
# ---------------------------------------------------------------------------
if __name__ == "__main__":
    B, N = 2, 8
    visual_input_dim = 32
    audio_input_dim = 24
    visual_bottleneck_dim = 16
    audio_bottleneck_dim = 16
    depth = 2
    heads = 2
    mlp_dim = 64
    dropout_ratio = 0.1    # dropout is a no-op in this eval-mode forward

    key = jax.random.PRNGKey(0)
    k_par, k_v, k_a, k_eps = jax.random.split(key, 4)

    params = make_params(k_par, visual_input_dim, audio_input_dim, depth,
                         mlp_dim, visual_bottleneck_dim, audio_bottleneck_dim)

    v = jax.random.normal(k_v, (B, N, visual_input_dim), jnp.float32)
    a = jax.random.normal(k_a, (B, N, audio_input_dim), jnp.float32)
    mask = jnp.ones((B, N), jnp.float32)

    fwd = jax.jit(sl_module_eib_forward, static_argnames=("heads", "depth"))
    score_m, kl_loss_m = fwd(params, v, a, mask, heads=heads, depth=depth,
                             rng_key=k_eps)
    score_m, kl_loss_m = jax.block_until_ready((score_m, kl_loss_m))

    assert score_m.shape == (B, N)
    assert kl_loss_m.shape == ()
    assert bool(jnp.all(jnp.isfinite(score_m)))
    assert bool(jnp.isfinite(kl_loss_m))
    print("KERNEL_OK")
</pallas_src>

<mosaic_0001>
module attributes {stable_mosaic.version = 11 : i64} {
  func.func @_fused_kernel(%arg0: memref<2x8x32xf32, #tpu.memory_space<vmem>>, %arg1: memref<2x8x24xf32, #tpu.memory_space<vmem>>, %arg2: memref<2x8x32xf32, #tpu.memory_space<vmem>>, %arg3: memref<56x56xf32, #tpu.memory_space<vmem>>, %arg4: memref<1x56xf32, #tpu.memory_space<vmem>>, %arg5: memref<56x64xf32, #tpu.memory_space<vmem>>, %arg6: memref<1x64xf32, #tpu.memory_space<vmem>>, %arg7: memref<2x1x32xf32, #tpu.memory_space<vmem>>, %arg8: memref<2x1x32xf32, #tpu.memory_space<vmem>>, %arg9: memref<2x32x96xf32, #tpu.memory_space<vmem>>, %arg10: memref<2x32x32xf32, #tpu.memory_space<vmem>>, %arg11: memref<2x1x32xf32, #tpu.memory_space<vmem>>, %arg12: memref<2x1x32xf32, #tpu.memory_space<vmem>>, %arg13: memref<2x1x32xf32, #tpu.memory_space<vmem>>, %arg14: memref<2x32x64xf32, #tpu.memory_space<vmem>>, %arg15: memref<2x1x64xf32, #tpu.memory_space<vmem>>, %arg16: memref<2x64x32xf32, #tpu.memory_space<vmem>>, %arg17: memref<2x1x32xf32, #tpu.memory_space<vmem>>, %arg18: memref<32x16xf32, #tpu.memory_space<vmem>>, %arg19: memref<1x16xf32, #tpu.memory_space<vmem>>, %arg20: memref<1x1x16xf32, #tpu.memory_space<vmem>>, %arg21: memref<1x1xf32, #tpu.memory_space<vmem>>, %arg22: memref<2x8xf32, #tpu.memory_space<vmem>>, %arg23: memref<1x1xf32, #tpu.memory_space<vmem>>) attributes {dimension_semantics = [], scalar_prefetch = 0 : i64, scratch_operands = 0 : i64, tpu.core_type = #tpu.core_type<tc>} {
    %c0 = arith.constant 0 : index
    %c0_0 = arith.constant 0 : index
    %c0_1 = arith.constant 0 : index
    %0 = vector.load %arg0[%c0, %c0_0, %c0_1] : memref<2x8x32xf32, #tpu.memory_space<vmem>>, vector<2x8x32xf32>
    %c0_2 = arith.constant 0 : index
    %c0_3 = arith.constant 0 : index
    %c0_4 = arith.constant 0 : index
    %1 = vector.load %arg1[%c0_2, %c0_3, %c0_4] : memref<2x8x24xf32, #tpu.memory_space<vmem>>, vector<2x8x24xf32>
    %c0_5 = arith.constant 0 : index
    %c0_6 = arith.constant 0 : index
    %c0_7 = arith.constant 0 : index
    %2 = vector.load %arg2[%c0_5, %c0_6, %c0_7] : memref<2x8x32xf32, #tpu.memory_space<vmem>>, vector<2x8x32xf32>
    %c0_8 = arith.constant 0 : index
    %c0_9 = arith.constant 0 : index
    %3 = vector.load %arg3[%c0_8, %c0_9] : memref<56x56xf32, #tpu.memory_space<vmem>>, vector<56x56xf32>
    %4 = vector.extract_strided_slice %3 {offsets = [0, 0], sizes = [32, 56], strides = [1, 1]} : vector<56x56xf32> to vector<32x56xf32>
    "tpu.trace_start"() <{level = 10 : i32, message = "bnd,de->bne"}> : () -> ()
    %cst = arith.constant dense<0.000000e+00> : vector<2x8x56xf32>
    %5 = tpu.matmul %0, %4, %cst {dimension_numbers = #tpu.dot_dimension_numbers<[2], [0], [0, 1], [1], [0, 0, 0, 1, 1, 1], [], []>} : vector<2x8x32xf32>, vector<32x56xf32>, vector<2x8x56xf32> -> vector<2x8x56xf32>
    "tpu.trace_stop"() : () -> ()
    %6 = vector.extract_strided_slice %3 {offsets = [32, 0], sizes = [24, 56], strides = [1, 1]} : vector<56x56xf32> to vector<24x56xf32>
    "tpu.trace_start"() <{level = 10 : i32, message = "bnd,de->bne"}> : () -> ()
    %cst_10 = arith.constant dense<0.000000e+00> : vector<2x8x56xf32>
    %7 = tpu.matmul %1, %6, %cst_10 {dimension_numbers = #tpu.dot_dimension_numbers<[2], [0], [0, 1], [1], [0, 0, 0, 1, 1, 1], [], []>} : vector<2x8x24xf32>, vector<24x56xf32>, vector<2x8x56xf32> -> vector<2x8x56xf32>
    "tpu.trace_stop"() : () -> ()
    %8 = arith.addf %5, %7 : vector<2x8x56xf32>
    %c0_11 = arith.constant 0 : index
    %c0_12 = arith.constant 0 : index
    %9 = vector.load %arg4[%c0_11, %c0_12] : memref<1x56xf32, #tpu.memory_space<vmem>>, vector<1x56xf32>
    %10 = vector.shape_cast %9 : vector<1x56xf32> to vector<1x1x56xf32>
    %11 = vector.broadcast %10 : vector<1x1x56xf32> to vector<2x8x56xf32>
    %12 = arith.addf %8, %11 : vector<2x8x56xf32>
    %cst_13 = arith.constant 0.000000e+00 : f32
    %13 = vector.broadcast %cst_13 : f32 to vector<2x8x56xf32>
    %14 = arith.maximumf %12, %13 : vector<2x8x56xf32>
    %c0_14 = arith.constant 0 : index
    %c0_15 = arith.constant 0 : index
    %15 = vector.load %arg5[%c0_14, %c0_15] : memref<56x64xf32, #tpu.memory_space<vmem>>, vector<56x64xf32>
    "tpu.trace_start"() <{level = 10 : i32, message = "bnd,de->bne"}> : () -> ()
    %cst_16 = arith.constant dense<0.000000e+00> : vector<2x8x64xf32>
    %16 = tpu.matmul %14, %15, %cst_16 {dimension_numbers = #tpu.dot_dimension_numbers<[2], [0], [0, 1], [1], [0, 0, 0, 1, 1, 1], [], []>} : vector<2x8x56xf32>, vector<56x64xf32>, vector<2x8x64xf32> -> vector<2x8x64xf32>
    "tpu.trace_stop"() : () -> ()
    %c0_17 = arith.constant 0 : index
    %c0_18 = arith.constant 0 : index
    %17 = vector.load %arg6[%c0_17, %c0_18] : memref<1x64xf32, #tpu.memory_space<vmem>>, vector<1x64xf32>
    %18 = vector.shape_cast %17 : vector<1x64xf32> to vector<1x1x64xf32>
    %19 = vector.broadcast %18 : vector<1x1x64xf32> to vector<2x8x64xf32>
    %20 = arith.addf %16, %19 : vector<2x8x64xf32>
    %21 = vector.extract_strided_slice %20 {offsets = [0, 0, 0], sizes = [2, 8, 32], strides = [1, 1, 1]} : vector<2x8x64xf32> to vector<2x8x32xf32>
    %22 = vector.extract_strided_slice %20 {offsets = [0, 0, 32], sizes = [2, 8, 32], strides = [1, 1, 1]} : vector<2x8x64xf32> to vector<2x8x32xf32>
    %cst_19 = arith.constant 5.000000e+00 : f32
    %23 = vector.broadcast %cst_19 : f32 to vector<2x8x32xf32>
    %24 = arith.subf %22, %23 : vector<2x8x32xf32>
    %cst_20 = arith.constant 2.000000e+01 : f32
    %25 = vector.broadcast %cst_20 : f32 to vector<2x8x32xf32>
    %26 = arith.cmpf ogt, %24, %25 : vector<2x8x32xf32>
    %27 = math.exp %24 : vector<2x8x32xf32>
    %28 = math.log1p %27 : vector<2x8x32xf32>
    %29 = arith.select %26, %24, %28 : vector<2x8x32xi1>, vector<2x8x32xf32>
    %30 = arith.mulf %2, %29 : vector<2x8x32xf32>
    %31 = arith.addf %21, %30 : vector<2x8x32xf32>
    %cst_21 = arith.constant 1.000000e+00 : f32
    %32 = vector.broadcast %cst_21 : f32 to vector<2x8x32xf32>
    %33 = arith.addf %32, %29 : vector<2x8x32xf32>
    %34 = arith.mulf %21, %21 : vector<2x8x32xf32>
    %35 = arith.subf %33, %34 : vector<2x8x32xf32>
    %36 = math.exp %29 : vector<2x8x32xf32>
    %37 = arith.subf %35, %36 : vector<2x8x32xf32>
    %38 = vector.shape_cast %37 : vector<2x8x32xf32> to vector<1x2x8x32xf32>
    %cst_22 = arith.constant dense<0.000000e+00> : vector<1xf32>
    %39 = vector.multi_reduction <add>, %38, %cst_22 [1, 2, 3] : vector<1x2x8x32xf32> to vector<1xf32>
    %40 = vector.shape_cast %39 : vector<1xf32> to vector<1x1x1x1xf32>
    %41 = vector.extract %40[0, 0, 0, 0] : f32 from vector<1x1x1x1xf32>
    %cst_23 = arith.constant -5.000000e-01 : f32
    %42 = arith.mulf %cst_23, %41 : f32
    %43 = vector.broadcast %42 : f32 to vector<1x1xf32>
    %c0_24 = arith.constant 0 : index
    %c0_25 = arith.constant 0 : index
    %44 = vector.load %arg23[%c0_24, %c0_25] : memref<1x1xf32, #tpu.memory_space<vmem>>, vector<1x1xf32>
    tpu.vector_store %arg23[%c0_24, %c0_25], %43 {strides = array<i32>} : memref<1x1xf32, #tpu.memory_space<vmem>>, vector<1x1xf32>,
    %c0_26 = arith.constant 0 : index
    %c0_27 = arith.constant 0 : index
    %c0_28 = arith.constant 0 : index
    %45 = vector.load %arg7[%c0_26, %c0_27, %c0_28] : memref<2x1x32xf32, #tpu.memory_space<vmem>>, vector<2x1x32xf32>
    %c0_29 = arith.constant 0 : index
    %c0_30 = arith.constant 0 : index
    %c0_31 = arith.constant 0 : index
    %46 = vector.load %arg8[%c0_29, %c0_30, %c0_31] : memref<2x1x32xf32, #tpu.memory_space<vmem>>, vector<2x1x32xf32>
    %c0_32 = arith.constant 0 : index
    %c0_33 = arith.constant 0 : index
    %c0_34 = arith.constant 0 : index
    %47 = vector.load %arg12[%c0_32, %c0_33, %c0_34] : memref<2x1x32xf32, #tpu.memory_space<vmem>>, vector<2x1x32xf32>
    %c0_35 = arith.constant 0 : index
    %c0_36 = arith.constant 0 : index
    %c0_37 = arith.constant 0 : index
    %48 = vector.load %arg13[%c0_35, %c0_36, %c0_37] : memref<2x1x32xf32, #tpu.memory_space<vmem>>, vector<2x1x32xf32>
    %c0_38 = arith.constant 0 : index
    %c0_39 = arith.constant 0 : index
    %c0_40 = arith.constant 0 : index
    %49 = vector.load %arg9[%c0_38, %c0_39, %c0_40] : memref<2x32x96xf32, #tpu.memory_space<vmem>>, vector<2x32x96xf32>
    %c0_41 = arith.constant 0 : index
    %c0_42 = arith.constant 0 : index
    %c0_43 = arith.constant 0 : index
    %50 = vector.load %arg10[%c0_41, %c0_42, %c0_43] : memref<2x32x32xf32, #tpu.memory_space<vmem>>, vector<2x32x32xf32>
    %c0_44 = arith.constant 0 : index
    %c0_45 = arith.constant 0 : index
    %c0_46 = arith.constant 0 : index
    %51 = vector.load %arg11[%c0_44, %c0_45, %c0_46] : memref<2x1x32xf32, #tpu.memory_space<vmem>>, vector<2x1x32xf32>
    %c0_47 = arith.constant 0 : index
    %c0_48 = arith.constant 0 : index
    %c0_49 = arith.constant 0 : index
    %52 = vector.load %arg14[%c0_47, %c0_48, %c0_49] : memref<2x32x64xf32, #tpu.memory_space<vmem>>, vector<2x32x64xf32>
    %c0_50 = arith.constant 0 : index
    %c0_51 = arith.constant 0 : index
    %c0_52 = arith.constant 0 : index
    %53 = vector.load %arg15[%c0_50, %c0_51, %c0_52] : memref<2x1x64xf32, #tpu.memory_space<vmem>>, vector<2x1x64xf32>
    %c0_53 = arith.constant 0 : index
    %c0_54 = arith.constant 0 : index
    %c0_55 = arith.constant 0 : index
    %54 = vector.load %arg16[%c0_53, %c0_54, %c0_55] : memref<2x64x32xf32, #tpu.memory_space<vmem>>, vector<2x64x32xf32>
    %c0_56 = arith.constant 0 : index
    %c0_57 = arith.constant 0 : index
    %c0_58 = arith.constant 0 : index
    %55 = vector.load %arg17[%c0_56, %c0_57, %c0_58] : memref<2x1x32xf32, #tpu.memory_space<vmem>>, vector<2x1x32xf32>
    %56 = vector.extract_strided_slice %45 {offsets = [0, 0, 0], sizes = [1, 1, 32], strides = [1, 1, 1]} : vector<2x1x32xf32> to vector<1x1x32xf32>
    %57 = vector.shape_cast %56 : vector<1x1x32xf32> to vector<1x32xf32>
    %58 = vector.extract_strided_slice %46 {offsets = [0, 0, 0], sizes = [1, 1, 32], strides = [1, 1, 1]} : vector<2x1x32xf32> to vector<1x1x32xf32>
    %59 = vector.shape_cast %58 : vector<1x1x32xf32> to vector<1x32xf32>
    %cst_59 = arith.constant dense<0.000000e+00> : vector<2x8xf32>
    %60 = vector.multi_reduction <add>, %31, %cst_59 [2] : vector<2x8x32xf32> to vector<2x8xf32>
    %61 = vector.shape_cast %60 : vector<2x8xf32> to vector<2x8x1xf32>
    %cst_60 = arith.constant 3.200000e+01 : f32
    %62 = vector.broadcast %cst_60 : f32 to vector<2x8x1xf32>
    %63 = arith.divf %61, %62 : vector<2x8x1xf32>
    %64 = vector.broadcast %63 : vector<2x8x1xf32> to vector<2x8x32xf32>
    %65 = arith.subf %31, %64 : vector<2x8x32xf32>
    %66 = arith.mulf %65, %65 : vector<2x8x32xf32>
    %cst_61 = arith.constant dense<0.000000e+00> : vector<2x8xf32>
    %67 = vector.multi_reduction <add>, %66, %cst_61 [2] : vector<2x8x32xf32> to vector<2x8xf32>
    %68 = vector.shape_cast %67 : vector<2x8xf32> to vector<2x8x1xf32>
    %cst_62 = arith.constant 3.200000e+01 : f32
    %69 = vector.broadcast %cst_62 : f32 to vector<2x8x1xf32>
    %70 = arith.divf %68, %69 : vector<2x8x1xf32>
    %71 = vector.broadcast %63 : vector<2x8x1xf32> to vector<2x8x32xf32>
    %72 = arith.subf %31, %71 : vector<2x8x32xf32>
    %cst_63 = arith.constant 9.99999974E-6 : f32
    %73 = vector.broadcast %cst_63 : f32 to vector<2x8x1xf32>
    %74 = arith.addf %70, %73 : vector<2x8x1xf32>
    %75 = math.rsqrt %74 : vector<2x8x1xf32>
    %76 = vector.broadcast %75 : vector<2x8x1xf32> to vector<2x8x32xf32>
    %77 = arith.mulf %72, %76 : vector<2x8x32xf32>
    %78 = vector.shape_cast %57 : vector<1x32xf32> to vector<1x1x32xf32>
    %79 = vector.broadcast %78 : vector<1x1x32xf32> to vector<2x8x32xf32>
    %80 = arith.mulf %77, %79 : vector<2x8x32xf32>
    %81 = vector.shape_cast %59 : vector<1x32xf32> to vector<1x1x32xf32>
    %82 = vector.broadcast %81 : vector<1x1x32xf32> to vector<2x8x32xf32>
    %83 = arith.addf %80, %82 : vector<2x8x32xf32>
    %84 = vector.extract_strided_slice %49 {offsets = [0, 0, 0], sizes = [1, 32, 96], strides = [1, 1, 1]} : vector<2x32x96xf32> to vector<1x32x96xf32>
    %85 = vector.shape_cast %84 : vector<1x32x96xf32> to vector<32x96xf32>
    "tpu.trace_start"() <{level = 10 : i32, message = "bnd,de->bne"}> : () -> ()
    %cst_64 = arith.constant dense<0.000000e+00> : vector<2x8x96xf32>
    %86 = tpu.matmul %83, %85, %cst_64 {dimension_numbers = #tpu.dot_dimension_numbers<[2], [0], [0, 1], [1], [0, 0, 0, 1, 1, 1], [], []>} : vector<2x8x32xf32>, vector<32x96xf32>, vector<2x8x96xf32> -> vector<2x8x96xf32>
    "tpu.trace_stop"() : () -> ()
    %87 = vector.extract_strided_slice %50 {offsets = [0, 0, 0], sizes = [1, 32, 32], strides = [1, 1, 1]} : vector<2x32x32xf32> to vector<1x32x32xf32>
    %88 = vector.shape_cast %87 : vector<1x32x32xf32> to vector<32x32xf32>
    %cst_65 = arith.constant 0.000000e+00 : f32
    %89 = vector.broadcast %cst_65 : f32 to vector<2x8x32xf32>
    %90 = vector.extract_strided_slice %86 {offsets = [0, 0, 0], sizes = [2, 8, 16], strides = [1, 1, 1]} : vector<2x8x96xf32> to vector<2x8x16xf32>
    %91 = vector.extract_strided_slice %86 {offsets = [0, 0, 32], sizes = [2, 8, 16], strides = [1, 1, 1]} : vector<2x8x96xf32> to vector<2x8x16xf32>
    %92 = vector.extract_strided_slice %86 {offsets = [0, 0, 64], sizes = [2, 8, 16], strides = [1, 1, 1]} : vector<2x8x96xf32> to vector<2x8x16xf32>
    "tpu.trace_start"() <{level = 10 : i32, message = "bqd,bkd->bqk"}> : () -> ()
    %cst_66 = arith.constant dense<0.000000e+00> : vector<2x8x8xf32>
    %93 = tpu.matmul %90, %91, %cst_66 {dimension_numbers = #tpu.dot_dimension_numbers<[2], [2], [1], [1], [0, 0, 0, 1, 1, 1], [0], [0]>} : vector<2x8x16xf32>, vector<2x8x16xf32>, vector<2x8x8xf32> -> vector<2x8x8xf32>
    "tpu.trace_stop"() : () -> ()
    %cst_67 = arith.constant 2.500000e-01 : f32
    %94 = vector.broadcast %cst_67 : f32 to vector<2x8x8xf32>
    %95 = arith.mulf %93, %94 : vector<2x8x8xf32>
    %cst_68 = arith.constant dense<0xFF800000> : vector<2x8xf32>
    %96 = vector.multi_reduction <maximumf>, %95, %cst_68 [2] : vector<2x8x8xf32> to vector<2x8xf32>
    %97 = vector.shape_cast %96 : vector<2x8xf32> to vector<2x8x1xf32>
    %98 = vector.broadcast %97 : vector<2x8x1xf32> to vector<2x8x8xf32>
    %99 = arith.subf %95, %98 : vector<2x8x8xf32>
    %100 = math.exp %99 : vector<2x8x8xf32>
    %cst_69 = arith.constant dense<0.000000e+00> : vector<2x8xf32>
    %101 = vector.multi_reduction <add>, %100, %cst_69 [2] : vector<2x8x8xf32> to vector<2x8xf32>
    %102 = vector.shape_cast %101 : vector<2x8xf32> to vector<2x8x1xf32>
    %103 = tpu.reciprocal %102 {approx = true} : vector<2x8x1xf32> -> vector<2x8x1xf32>
    %104 = vector.broadcast %103 : vector<2x8x1xf32> to vector<2x8x8xf32>
    %105 = arith.mulf %100, %104 : vector<2x8x8xf32>
    "tpu.trace_start"() <{level = 10 : i32, message = "bqk,bkd->bqd"}> : () -> ()
    %cst_70 = arith.constant dense<0.000000e+00> : vector<2x8x16xf32>
    %106 = tpu.matmul %105, %92, %cst_70 {dimension_numbers = #tpu.dot_dimension_numbers<[2], [1], [1], [2], [0, 0, 0, 1, 1, 2], [0], [0]>} : vector<2x8x8xf32>, vector<2x8x16xf32>, vector<2x8x16xf32> -> vector<2x8x16xf32>
    "tpu.trace_stop"() : () -> ()
    %107 = vector.extract_strided_slice %88 {offsets = [0, 0], sizes = [16, 32], strides = [1, 1]} : vector<32x32xf32> to vector<16x32xf32>
    "tpu.trace_start"() <{level = 10 : i32, message = "bnd,de->bne"}> : () -> ()
    %cst_71 = arith.constant dense<0.000000e+00> : vector<2x8x32xf32>
    %108 = tpu.matmul %106, %107, %cst_71 {dimension_numbers = #tpu.dot_dimension_numbers<[2], [0], [0, 1], [1], [0, 0, 0, 1, 1, 1], [], []>} : vector<2x8x16xf32>, vector<16x32xf32>, vector<2x8x32xf32> -> vector<2x8x32xf32>
    "tpu.trace_stop"() : () -> ()
    %109 = arith.addf %89, %108 : vector<2x8x32xf32>
    %110 = vector.extract_strided_slice %86 {offsets = [0, 0, 16], sizes = [2, 8, 16], strides = [1, 1, 1]} : vector<2x8x96xf32> to vector<2x8x16xf32>
    %111 = vector.extract_strided_slice %86 {offsets = [0, 0, 48], sizes = [2, 8, 16], strides = [1, 1, 1]} : vector<2x8x96xf32> to vector<2x8x16xf32>
    %112 = vector.extract_strided_slice %86 {offsets = [0, 0, 80], sizes = [2, 8, 16], strides = [1, 1, 1]} : vector<2x8x96xf32> to vector<2x8x16xf32>
    "tpu.trace_start"() <{level = 10 : i32, message = "bqd,bkd->bqk"}> : () -> ()
    %cst_72 = arith.constant dense<0.000000e+00> : vector<2x8x8xf32>
    %113 = tpu.matmul %110, %111, %cst_72 {dimension_numbers = #tpu.dot_dimension_numbers<[2], [2], [1], [1], [0, 0, 0, 1, 1, 1], [0], [0]>} : vector<2x8x16xf32>, vector<2x8x16xf32>, vector<2x8x8xf32> -> vector<2x8x8xf32>
    "tpu.trace_stop"() : () -> ()
    %cst_73 = arith.constant 2.500000e-01 : f32
    %114 = vector.broadcast %cst_73 : f32 to vector<2x8x8xf32>
    %115 = arith.mulf %113, %114 : vector<2x8x8xf32>
    %cst_74 = arith.constant dense<0xFF800000> : vector<2x8xf32>
    %116 = vector.multi_reduction <maximumf>, %115, %cst_74 [2] : vector<2x8x8xf32> to vector<2x8xf32>
    %117 = vector.shape_cast %116 : vector<2x8xf32> to vector<2x8x1xf32>
    %118 = vector.broadcast %117 : vector<2x8x1xf32> to vector<2x8x8xf32>
    %119 = arith.subf %115, %118 : vector<2x8x8xf32>
    %120 = math.exp %119 : vector<2x8x8xf32>
    %cst_75 = arith.constant dense<0.000000e+00> : vector<2x8xf32>
    %121 = vector.multi_reduction <add>, %120, %cst_75 [2] : vector<2x8x8xf32> to vector<2x8xf32>
    %122 = vector.shape_cast %121 : vector<2x8xf32> to vector<2x8x1xf32>
    %123 = tpu.reciprocal %122 {approx = true} : vector<2x8x1xf32> -> vector<2x8x1xf32>
    %124 = vector.broadcast %123 : vector<2x8x1xf32> to vector<2x8x8xf32>
    %125 = arith.mulf %120, %124 : vector<2x8x8xf32>
    "tpu.trace_start"() <{level = 10 : i32, message = "bqk,bkd->bqd"}> : () -> ()
    %cst_76 = arith.constant dense<0.000000e+00> : vector<2x8x16xf32>
    %126 = tpu.matmul %125, %112, %cst_76 {dimension_numbers = #tpu.dot_dimension_numbers<[2], [1], [1], [2], [0, 0, 0, 1, 1, 2], [0], [0]>} : vector<2x8x8xf32>, vector<2x8x16xf32>, vector<2x8x16xf32> -> vector<2x8x16xf32>
    "tpu.trace_stop"() : () -> ()
    %127 = vector.extract_strided_slice %88 {offsets = [16, 0], sizes = [16, 32], strides = [1, 1]} : vector<32x32xf32> to vector<16x32xf32>
    "tpu.trace_start"() <{level = 10 : i32, message = "bnd,de->bne"}> : () -> ()
    %cst_77 = arith.constant dense<0.000000e+00> : vector<2x8x32xf32>
    %128 = tpu.matmul %126, %127, %cst_77 {dimension_numbers = #tpu.dot_dimension_numbers<[2], [0], [0, 1], [1], [0, 0, 0, 1, 1, 1], [], []>} : vector<2x8x16xf32>, vector<16x32xf32>, vector<2x8x32xf32> -> vector<2x8x32xf32>
    "tpu.trace_stop"() : () -> ()
    %129 = arith.addf %109, %128 : vector<2x8x32xf32>
    %130 = arith.addf %31, %129 : vector<2x8x32xf32>
    %131 = vector.extract_strided_slice %51 {offsets = [0, 0, 0], sizes = [1, 1, 32], strides = [1, 1, 1]} : vector<2x1x32xf32> to vector<1x1x32xf32>
    %132 = vector.shape_cast %131 : vector<1x1x32xf32> to vector<1x32xf32>
    %133 = vector.shape_cast %132 : vector<1x32xf32> to vector<1x1x32xf32>
    %134 = vector.broadcast %133 : vector<1x1x32xf32> to vector<2x8x32xf32>
    %135 = arith.addf %130, %134 : vector<2x8x32xf32>
    %136 = vector.extract_strided_slice %47 {offsets = [0, 0, 0], sizes = [1, 1, 32], strides = [1, 1, 1]} : vector<2x1x32xf32> to vector<1x1x32xf32>
    %137 = vector.shape_cast %136 : vector<1x1x32xf32> to vector<1x32xf32>
    %138 = vector.extract_strided_slice %48 {offsets = [0, 0, 0], sizes = [1, 1, 32], strides = [1, 1, 1]} : vector<2x1x32xf32> to vector<1x1x32xf32>
    %139 = vector.shape_cast %138 : vector<1x1x32xf32> to vector<1x32xf32>
    %cst_78 = arith.constant dense<0.000000e+00> : vector<2x8xf32>
    %140 = vector.multi_reduction <add>, %135, %cst_78 [2] : vector<2x8x32xf32> to vector<2x8xf32>
    %141 = vector.shape_cast %140 : vector<2x8xf32> to vector<2x8x1xf32>
    %cst_79 = arith.constant 3.200000e+01 : f32
    %142 = vector.broadcast %cst_79 : f32 to vector<2x8x1xf32>
    %143 = arith.divf %141, %142 : vector<2x8x1xf32>
    %144 = vector.broadcast %143 : vector<2x8x1xf32> to vector<2x8x32xf32>
    %145 = arith.subf %135, %144 : vector<2x8x32xf32>
    %146 = arith.mulf %145, %145 : vector<2x8x32xf32>
    %cst_80 = arith.constant dense<0.000000e+00> : vector<2x8xf32>
    %147 = vector.multi_reduction <add>, %146, %cst_80 [2] : vector<2x8x32xf32> to vector<2x8xf32>
    %148 = vector.shape_cast %147 : vector<2x8xf32> to vector<2x8x1xf32>
    %cst_81 = arith.constant 3.200000e+01 : f32
    %149 = vector.broadcast %cst_81 : f32 to vector<2x8x1xf32>
    %150 = arith.divf %148, %149 : vector<2x8x1xf32>
    %151 = vector.broadcast %143 : vector<2x8x1xf32> to vector<2x8x32xf32>
    %152 = arith.subf %135, %151 : vector<2x8x32xf32>
    %cst_82 = arith.constant 9.99999974E-6 : f32
    %153 = vector.broadcast %cst_82 : f32 to vector<2x8x1xf32>
    %154 = arith.addf %150, %153 : vector<2x8x1xf32>
    %155 = math.rsqrt %154 : vector<2x8x1xf32>
    %156 = vector.broadcast %155 : vector<2x8x1xf32> to vector<2x8x32xf32>
    %157 = arith.mulf %152, %156 : vector<2x8x32xf32>
    %158 = vector.shape_cast %137 : vector<1x32xf32> to vector<1x1x32xf32>
    %159 = vector.broadcast %158 : vector<1x1x32xf32> to vector<2x8x32xf32>
    %160 = arith.mulf %157, %159 : vector<2x8x32xf32>
    %161 = vector.shape_cast %139 : vector<1x32xf32> to vector<1x1x32xf32>
    %162 = vector.broadcast %161 : vector<1x1x32xf32> to vector<2x8x32xf32>
    %163 = arith.addf %160, %162 : vector<2x8x32xf32>
    %164 = vector.extract_strided_slice %52 {offsets = [0, 0, 0], sizes = [1, 32, 64], strides = [1, 1, 1]} : vector<2x32x64xf32> to vector<1x32x64xf32>
    %165 = vector.shape_cast %164 : vector<1x32x64xf32> to vector<32x64xf32>
    "tpu.trace_start"() <{level = 10 : i32, message = "bnd,dm->bnm"}> : () -> ()
    %cst_83 = arith.constant dense<0.000000e+00> : vector<2x8x64xf32>
    %166 = tpu.matmul %163, %165, %cst_83 {dimension_numbers = #tpu.dot_dimension_numbers<[2], [0], [0, 1], [1], [0, 0, 0, 1, 1, 1], [], []>} : vector<2x8x32xf32>, vector<32x64xf32>, vector<2x8x64xf32> -> vector<2x8x64xf32>
    "tpu.trace_stop"() : () -> ()
    %167 = vector.extract_strided_slice %53 {offsets = [0, 0, 0], sizes = [1, 1, 64], strides = [1, 1, 1]} : vector<2x1x64xf32> to vector<1x1x64xf32>
    %168 = vector.shape_cast %167 : vector<1x1x64xf32> to vector<1x64xf32>
    %169 = vector.shape_cast %168 : vector<1x64xf32> to vector<1x1x64xf32>
    %170 = vector.broadcast %169 : vector<1x1x64xf32> to vector<2x8x64xf32>
    %171 = arith.addf %166, %170 : vector<2x8x64xf32>
    %cst_84 = arith.constant 0.000000e+00 : f32
    %172 = vector.broadcast %cst_84 : f32 to vector<2x8x64xf32>
    %173 = arith.maximumf %171, %172 : vector<2x8x64xf32>
    %174 = vector.extract_strided_slice %54 {offsets = [0, 0, 0], sizes = [1, 64, 32], strides = [1, 1, 1]} : vector<2x64x32xf32> to vector<1x64x32xf32>
    %175 = vector.shape_cast %174 : vector<1x64x32xf32> to vector<64x32xf32>
    "tpu.trace_start"() <{level = 10 : i32, message = "bnm,md->bnd"}> : () -> ()
    %cst_85 = arith.constant dense<0.000000e+00> : vector<2x8x32xf32>
    %176 = tpu.matmul %173, %175, %cst_85 {dimension_numbers = #tpu.dot_dimension_numbers<[2], [0], [0, 1], [1], [0, 0, 0, 1, 1, 1], [], []>} : vector<2x8x64xf32>, vector<64x32xf32>, vector<2x8x32xf32> -> vector<2x8x32xf32>
    "tpu.trace_stop"() : () -> ()
    %177 = arith.addf %135, %176 : vector<2x8x32xf32>
    %178 = vector.extract_strided_slice %55 {offsets = [0, 0, 0], sizes = [1, 1, 32], strides = [1, 1, 1]} : vector<2x1x32xf32> to vector<1x1x32xf32>
    %179 = vector.shape_cast %178 : vector<1x1x32xf32> to vector<1x32xf32>
    %180 = vector.shape_cast %179 : vector<1x32xf32> to vector<1x1x32xf32>
    %181 = vector.broadcast %180 : vector<1x1x32xf32> to vector<2x8x32xf32>
    %182 = arith.addf %177, %181 : vector<2x8x32xf32>
    %183 = vector.extract_strided_slice %45 {offsets = [1, 0, 0], sizes = [1, 1, 32], strides = [1, 1, 1]} : vector<2x1x32xf32> to vector<1x1x32xf32>
    %184 = vector.shape_cast %183 : vector<1x1x32xf32> to vector<1x32xf32>
    %185 = vector.extract_strided_slice %46 {offsets = [1, 0, 0], sizes = [1, 1, 32], strides = [1, 1, 1]} : vector<2x1x32xf32> to vector<1x1x32xf32>
    %186 = vector.shape_cast %185 : vector<1x1x32xf32> to vector<1x32xf32>
    %cst_86 = arith.constant dense<0.000000e+00> : vector<2x8xf32>
    %187 = vector.multi_reduction <add>, %182, %cst_86 [2] : vector<2x8x32xf32> to vector<2x8xf32>
    %188 = vector.shape_cast %187 : vector<2x8xf32> to vector<2x8x1xf32>
    %cst_87 = arith.constant 3.200000e+01 : f32
    %189 = vector.broadcast %cst_87 : f32 to vector<2x8x1xf32>
    %190 = arith.divf %188, %189 : vector<2x8x1xf32>
    %191 = vector.broadcast %190 : vector<2x8x1xf32> to vector<2x8x32xf32>
    %192 = arith.subf %182, %191 : vector<2x8x32xf32>
    %193 = arith.mulf %192, %192 : vector<2x8x32xf32>
    %cst_88 = arith.constant dense<0.000000e+00> : vector<2x8xf32>
    %194 = vector.multi_reduction <add>, %193, %cst_88 [2] : vector<2x8x32xf32> to vector<2x8xf32>
    %195 = vector.shape_cast %194 : vector<2x8xf32> to vector<2x8x1xf32>
    %cst_89 = arith.constant 3.200000e+01 : f32
    %196 = vector.broadcast %cst_89 : f32 to vector<2x8x1xf32>
    %197 = arith.divf %195, %196 : vector<2x8x1xf32>
    %198 = vector.broadcast %190 : vector<2x8x1xf32> to vector<2x8x32xf32>
    %199 = arith.subf %182, %198 : vector<2x8x32xf32>
    %cst_90 = arith.constant 9.99999974E-6 : f32
    %200 = vector.broadcast %cst_90 : f32 to vector<2x8x1xf32>
    %201 = arith.addf %197, %200 : vector<2x8x1xf32>
    %202 = math.rsqrt %201 : vector<2x8x1xf32>
    %203 = vector.broadcast %202 : vector<2x8x1xf32> to vector<2x8x32xf32>
    %204 = arith.mulf %199, %203 : vector<2x8x32xf32>
    %205 = vector.shape_cast %184 : vector<1x32xf32> to vector<1x1x32xf32>
    %206 = vector.broadcast %205 : vector<1x1x32xf32> to vector<2x8x32xf32>
    %207 = arith.mulf %204, %206 : vector<2x8x32xf32>
    %208 = vector.shape_cast %186 : vector<1x32xf32> to vector<1x1x32xf32>
    %209 = vector.broadcast %208 : vector<1x1x32xf32> to vector<2x8x32xf32>
    %210 = arith.addf %207, %209 : vector<2x8x32xf32>
    %211 = vector.extract_strided_slice %49 {offsets = [1, 0, 0], sizes = [1, 32, 96], strides = [1, 1, 1]} : vector<2x32x96xf32> to vector<1x32x96xf32>
    %212 = vector.shape_cast %211 : vector<1x32x96xf32> to vector<32x96xf32>
    "tpu.trace_start"() <{level = 10 : i32, message = "bnd,de->bne"}> : () -> ()
    %cst_91 = arith.constant dense<0.000000e+00> : vector<2x8x96xf32>
    %213 = tpu.matmul %210, %212, %cst_91 {dimension_numbers = #tpu.dot_dimension_numbers<[2], [0], [0, 1], [1], [0, 0, 0, 1, 1, 1], [], []>} : vector<2x8x32xf32>, vector<32x96xf32>, vector<2x8x96xf32> -> vector<2x8x96xf32>
    "tpu.trace_stop"() : () -> ()
    %214 = vector.extract_strided_slice %50 {offsets = [1, 0, 0], sizes = [1, 32, 32], strides = [1, 1, 1]} : vector<2x32x32xf32> to vector<1x32x32xf32>
    %215 = vector.shape_cast %214 : vector<1x32x32xf32> to vector<32x32xf32>
    %cst_92 = arith.constant 0.000000e+00 : f32
    %216 = vector.broadcast %cst_92 : f32 to vector<2x8x32xf32>
    %217 = vector.extract_strided_slice %213 {offsets = [0, 0, 0], sizes = [2, 8, 16], strides = [1, 1, 1]} : vector<2x8x96xf32> to vector<2x8x16xf32>
    %218 = vector.extract_strided_slice %213 {offsets = [0, 0, 32], sizes = [2, 8, 16], strides = [1, 1, 1]} : vector<2x8x96xf32> to vector<2x8x16xf32>
    %219 = vector.extract_strided_slice %213 {offsets = [0, 0, 64], sizes = [2, 8, 16], strides = [1, 1, 1]} : vector<2x8x96xf32> to vector<2x8x16xf32>
    "tpu.trace_start"() <{level = 10 : i32, message = "bqd,bkd->bqk"}> : () -> ()
    %cst_93 = arith.constant dense<0.000000e+00> : vector<2x8x8xf32>
    %220 = tpu.matmul %217, %218, %cst_93 {dimension_numbers = #tpu.dot_dimension_numbers<[2], [2], [1], [1], [0, 0, 0, 1, 1, 1], [0], [0]>} : vector<2x8x16xf32>, vector<2x8x16xf32>, vector<2x8x8xf32> -> vector<2x8x8xf32>
    "tpu.trace_stop"() : () -> ()
    %cst_94 = arith.constant 2.500000e-01 : f32
    %221 = vector.broadcast %cst_94 : f32 to vector<2x8x8xf32>
    %222 = arith.mulf %220, %221 : vector<2x8x8xf32>
    %cst_95 = arith.constant dense<0xFF800000> : vector<2x8xf32>
    %223 = vector.multi_reduction <maximumf>, %222, %cst_95 [2] : vector<2x8x8xf32> to vector<2x8xf32>
    %224 = vector.shape_cast %223 : vector<2x8xf32> to vector<2x8x1xf32>
    %225 = vector.broadcast %224 : vector<2x8x1xf32> to vector<2x8x8xf32>
    %226 = arith.subf %222, %225 : vector<2x8x8xf32>
    %227 = math.exp %226 : vector<2x8x8xf32>
    %cst_96 = arith.constant dense<0.000000e+00> : vector<2x8xf32>
    %228 = vector.multi_reduction <add>, %227, %cst_96 [2] : vector<2x8x8xf32> to vector<2x8xf32>
    %229 = vector.shape_cast %228 : vector<2x8xf32> to vector<2x8x1xf32>
    %230 = tpu.reciprocal %229 {approx = true} : vector<2x8x1xf32> -> vector<2x8x1xf32>
    %231 = vector.broadcast %230 : vector<2x8x1xf32> to vector<2x8x8xf32>
    %232 = arith.mulf %227, %231 : vector<2x8x8xf32>
    "tpu.trace_start"() <{level = 10 : i32, message = "bqk,bkd->bqd"}> : () -> ()
    %cst_97 = arith.constant dense<0.000000e+00> : vector<2x8x16xf32>
    %233 = tpu.matmul %232, %219, %cst_97 {dimension_numbers = #tpu.dot_dimension_numbers<[2], [1], [1], [2], [0, 0, 0, 1, 1, 2], [0], [0]>} : vector<2x8x8xf32>, vector<2x8x16xf32>, vector<2x8x16xf32> -> vector<2x8x16xf32>
    "tpu.trace_stop"() : () -> ()
    %234 = vector.extract_strided_slice %215 {offsets = [0, 0], sizes = [16, 32], strides = [1, 1]} : vector<32x32xf32> to vector<16x32xf32>
    "tpu.trace_start"() <{level = 10 : i32, message = "bnd,de->bne"}> : () -> ()
    %cst_98 = arith.constant dense<0.000000e+00> : vector<2x8x32xf32>
    %235 = tpu.matmul %233, %234, %cst_98 {dimension_numbers = #tpu.dot_dimension_numbers<[2], [0], [0, 1], [1], [0, 0, 0, 1, 1, 1], [], []>} : vector<2x8x16xf32>, vector<16x32xf32>, vector<2x8x32xf32> -> vector<2x8x32xf32>
    "tpu.trace_stop"() : () -> ()
    %236 = arith.addf %216, %235 : vector<2x8x32xf32>
    %237 = vector.extract_strided_slice %213 {offsets = [0, 0, 16], sizes = [2, 8, 16], strides = [1, 1, 1]} : vector<2x8x96xf32> to vector<2x8x16xf32>
    %238 = vector.extract_strided_slice %213 {offsets = [0, 0, 48], sizes = [2, 8, 16], strides = [1, 1, 1]} : vector<2x8x96xf32> to vector<2x8x16xf32>
    %239 = vector.extract_strided_slice %213 {offsets = [0, 0, 80], sizes = [2, 8, 16], strides = [1, 1, 1]} : vector<2x8x96xf32> to vector<2x8x16xf32>
    "tpu.trace_start"() <{level = 10 : i32, message = "bqd,bkd->bqk"}> : () -> ()
    %cst_99 = arith.constant dense<0.000000e+00> : vector<2x8x8xf32>
    %240 = tpu.matmul %237, %238, %cst_99 {dimension_numbers = #tpu.dot_dimension_numbers<[2], [2], [1], [1], [0, 0, 0, 1, 1, 1], [0], [0]>} : vector<2x8x16xf32>, vector<2x8x16xf32>, vector<2x8x8xf32> -> vector<2x8x8xf32>
    "tpu.trace_stop"() : () -> ()
    %cst_100 = arith.constant 2.500000e-01 : f32
    %241 = vector.broadcast %cst_100 : f32 to vector<2x8x8xf32>
    %242 = arith.mulf %240, %241 : vector<2x8x8xf32>
    %cst_101 = arith.constant dense<0xFF800000> : vector<2x8xf32>
    %243 = vector.multi_reduction <maximumf>, %242, %cst_101 [2] : vector<2x8x8xf32> to vector<2x8xf32>
    %244 = vector.shape_cast %243 : vector<2x8xf32> to vector<2x8x1xf32>
    %245 = vector.broadcast %244 : vector<2x8x1xf32> to vector<2x8x8xf32>
    %246 = arith.subf %242, %245 : vector<2x8x8xf32>
    %247 = math.exp %246 : vector<2x8x8xf32>
    %cst_102 = arith.constant dense<0.000000e+00> : vector<2x8xf32>
    %248 = vector.multi_reduction <add>, %247, %cst_102 [2] : vector<2x8x8xf32> to vector<2x8xf32>
    %249 = vector.shape_cast %248 : vector<2x8xf32> to vector<2x8x1xf32>
    %250 = tpu.reciprocal %249 {approx = true} : vector<2x8x1xf32> -> vector<2x8x1xf32>
    %251 = vector.broadcast %250 : vector<2x8x1xf32> to vector<2x8x8xf32>
    %252 = arith.mulf %247, %251 : vector<2x8x8xf32>
    "tpu.trace_start"() <{level = 10 : i32, message = "bqk,bkd->bqd"}> : () -> ()
    %cst_103 = arith.constant dense<0.000000e+00> : vector<2x8x16xf32>
    %253 = tpu.matmul %252, %239, %cst_103 {dimension_numbers = #tpu.dot_dimension_numbers<[2], [1], [1], [2], [0, 0, 0, 1, 1, 2], [0], [0]>} : vector<2x8x8xf32>, vector<2x8x16xf32>, vector<2x8x16xf32> -> vector<2x8x16xf32>
    "tpu.trace_stop"() : () -> ()
    %254 = vector.extract_strided_slice %215 {offsets = [16, 0], sizes = [16, 32], strides = [1, 1]} : vector<32x32xf32> to vector<16x32xf32>
    "tpu.trace_start"() <{level = 10 : i32, message = "bnd,de->bne"}> : () -> ()
    %cst_104 = arith.constant dense<0.000000e+00> : vector<2x8x32xf32>
    %255 = tpu.matmul %253, %254, %cst_104 {dimension_numbers = #tpu.dot_dimension_numbers<[2], [0], [0, 1], [1], [0, 0, 0, 1, 1, 1], [], []>} : vector<2x8x16xf32>, vector<16x32xf32>, vector<2x8x32xf32> -> vector<2x8x32xf32>
    "tpu.trace_stop"() : () -> ()
    %256 = arith.addf %236, %255 : vector<2x8x32xf32>
    %257 = arith.addf %182, %256 : vector<2x8x32xf32>
    %258 = vector.extract_strided_slice %51 {offsets = [1, 0, 0], sizes = [1, 1, 32], strides = [1, 1, 1]} : vector<2x1x32xf32> to vector<1x1x32xf32>
    %259 = vector.shape_cast %258 : vector<1x1x32xf32> to vector<1x32xf32>
    %260 = vector.shape_cast %259 : vector<1x32xf32> to vector<1x1x32xf32>
    %261 = vector.broadcast %260 : vector<1x1x32xf32> to vector<2x8x32xf32>
    %262 = arith.addf %257, %261 : vector<2x8x32xf32>
    %263 = vector.extract_strided_slice %47 {offsets = [1, 0, 0], sizes = [1, 1, 32], strides = [1, 1, 1]} : vector<2x1x32xf32> to vector<1x1x32xf32>
    %264 = vector.shape_cast %263 : vector<1x1x32xf32> to vector<1x32xf32>
    %265 = vector.extract_strided_slice %48 {offsets = [1, 0, 0], sizes = [1, 1, 32], strides = [1, 1, 1]} : vector<2x1x32xf32> to vector<1x1x32xf32>
    %266 = vector.shape_cast %265 : vector<1x1x32xf32> to vector<1x32xf32>
    %cst_105 = arith.constant dense<0.000000e+00> : vector<2x8xf32>
    %267 = vector.multi_reduction <add>, %262, %cst_105 [2] : vector<2x8x32xf32> to vector<2x8xf32>
    %268 = vector.shape_cast %267 : vector<2x8xf32> to vector<2x8x1xf32>
    %cst_106 = arith.constant 3.200000e+01 : f32
    %269 = vector.broadcast %cst_106 : f32 to vector<2x8x1xf32>
    %270 = arith.divf %268, %269 : vector<2x8x1xf32>
    %271 = vector.broadcast %270 : vector<2x8x1xf32> to vector<2x8x32xf32>
    %272 = arith.subf %262, %271 : vector<2x8x32xf32>
    %273 = arith.mulf %272, %272 : vector<2x8x32xf32>
    %cst_107 = arith.constant dense<0.000000e+00> : vector<2x8xf32>
    %274 = vector.multi_reduction <add>, %273, %cst_107 [2] : vector<2x8x32xf32> to vector<2x8xf32>
    %275 = vector.shape_cast %274 : vector<2x8xf32> to vector<2x8x1xf32>
    %cst_108 = arith.constant 3.200000e+01 : f32
    %276 = vector.broadcast %cst_108 : f32 to vector<2x8x1xf32>
    %277 = arith.divf %275, %276 : vector<2x8x1xf32>
    %278 = vector.broadcast %270 : vector<2x8x1xf32> to vector<2x8x32xf32>
    %279 = arith.subf %262, %278 : vector<2x8x32xf32>
    %cst_109 = arith.constant 9.99999974E-6 : f32
    %280 = vector.broadcast %cst_109 : f32 to vector<2x8x1xf32>
    %281 = arith.addf %277, %280 : vector<2x8x1xf32>
    %282 = math.rsqrt %281 : vector<2x8x1xf32>
    %283 = vector.broadcast %282 : vector<2x8x1xf32> to vector<2x8x32xf32>
    %284 = arith.mulf %279, %283 : vector<2x8x32xf32>
    %285 = vector.shape_cast %264 : vector<1x32xf32> to vector<1x1x32xf32>
    %286 = vector.broadcast %285 : vector<1x1x32xf32> to vector<2x8x32xf32>
    %287 = arith.mulf %284, %286 : vector<2x8x32xf32>
    %288 = vector.shape_cast %266 : vector<1x32xf32> to vector<1x1x32xf32>
    %289 = vector.broadcast %288 : vector<1x1x32xf32> to vector<2x8x32xf32>
    %290 = arith.addf %287, %289 : vector<2x8x32xf32>
    %291 = vector.extract_strided_slice %52 {offsets = [1, 0, 0], sizes = [1, 32, 64], strides = [1, 1, 1]} : vector<2x32x64xf32> to vector<1x32x64xf32>
    %292 = vector.shape_cast %291 : vector<1x32x64xf32> to vector<32x64xf32>
    "tpu.trace_start"() <{level = 10 : i32, message = "bnd,dm->bnm"}> : () -> ()
    %cst_110 = arith.constant dense<0.000000e+00> : vector<2x8x64xf32>
    %293 = tpu.matmul %290, %292, %cst_110 {dimension_numbers = #tpu.dot_dimension_numbers<[2], [0], [0, 1], [1], [0, 0, 0, 1, 1, 1], [], []>} : vector<2x8x32xf32>, vector<32x64xf32>, vector<2x8x64xf32> -> vector<2x8x64xf32>
    "tpu.trace_stop"() : () -> ()
    %294 = vector.extract_strided_slice %53 {offsets = [1, 0, 0], sizes = [1, 1, 64], strides = [1, 1, 1]} : vector<2x1x64xf32> to vector<1x1x64xf32>
    %295 = vector.shape_cast %294 : vector<1x1x64xf32> to vector<1x64xf32>
    %296 = vector.shape_cast %295 : vector<1x64xf32> to vector<1x1x64xf32>
    %297 = vector.broadcast %296 : vector<1x1x64xf32> to vector<2x8x64xf32>
    %298 = arith.addf %293, %297 : vector<2x8x64xf32>
    %cst_111 = arith.constant 0.000000e+00 : f32
    %299 = vector.broadcast %cst_111 : f32 to vector<2x8x64xf32>
    %300 = arith.maximumf %298, %299 : vector<2x8x64xf32>
    %301 = vector.extract_strided_slice %54 {offsets = [1, 0, 0], sizes = [1, 64, 32], strides = [1, 1, 1]} : vector<2x64x32xf32> to vector<1x64x32xf32>
    %302 = vector.shape_cast %301 : vector<1x64x32xf32> to vector<64x32xf32>
    "tpu.trace_start"() <{level = 10 : i32, message = "bnm,md->bnd"}> : () -> ()
    %cst_112 = arith.constant dense<0.000000e+00> : vector<2x8x32xf32>
    %303 = tpu.matmul %300, %302, %cst_112 {dimension_numbers = #tpu.dot_dimension_numbers<[2], [0], [0, 1], [1], [0, 0, 0, 1, 1, 1], [], []>} : vector<2x8x64xf32>, vector<64x32xf32>, vector<2x8x32xf32> -> vector<2x8x32xf32>
    "tpu.trace_stop"() : () -> ()
    %304 = arith.addf %262, %303 : vector<2x8x32xf32>
    %305 = vector.extract_strided_slice %55 {offsets = [1, 0, 0], sizes = [1, 1, 32], strides = [1, 1, 1]} : vector<2x1x32xf32> to vector<1x1x32xf32>
    %306 = vector.shape_cast %305 : vector<1x1x32xf32> to vector<1x32xf32>
    %307 = vector.shape_cast %306 : vector<1x32xf32> to vector<1x1x32xf32>
    %308 = vector.broadcast %307 : vector<1x1x32xf32> to vector<2x8x32xf32>
    %309 = arith.addf %304, %308 : vector<2x8x32xf32>
    %c0_113 = arith.constant 0 : index
    %c0_114 = arith.constant 0 : index
    %310 = vector.load %arg18[%c0_113, %c0_114] : memref<32x16xf32, #tpu.memory_space<vmem>>, vector<32x16xf32>
    "tpu.trace_start"() <{level = 10 : i32, message = "bnd,dk->bnk"}> : () -> ()
    %cst_115 = arith.constant dense<0.000000e+00> : vector<2x8x16xf32>
    %311 = tpu.matmul %309, %310, %cst_115 {dimension_numbers = #tpu.dot_dimension_numbers<[2], [0], [0, 1], [1], [0, 0, 0, 1, 1, 1], [], []>} : vector<2x8x32xf32>, vector<32x16xf32>, vector<2x8x16xf32> -> vector<2x8x16xf32>
    "tpu.trace_stop"() : () -> ()
    %c0_116 = arith.constant 0 : index
    %c0_117 = arith.constant 0 : index
    %312 = vector.load %arg19[%c0_116, %c0_117] : memref<1x16xf32, #tpu.memory_space<vmem>>, vector<1x16xf32>
    %313 = vector.shape_cast %312 : vector<1x16xf32> to vector<1x1x16xf32>
    %314 = vector.broadcast %313 : vector<1x1x16xf32> to vector<2x8x16xf32>
    %315 = arith.addf %311, %314 : vector<2x8x16xf32>
    %cst_118 = arith.constant 0.000000e+00 : f32
    %316 = vector.broadcast %cst_118 : f32 to vector<2x8x16xf32>
    %317 = arith.maximumf %315, %316 : vector<2x8x16xf32>
    %c0_119 = arith.constant 0 : index
    %c0_120 = arith.constant 0 : index
    %c0_121 = arith.constant 0 : index
    %318 = vector.load %arg20[%c0_119, %c0_120, %c0_121] : memref<1x1x16xf32, #tpu.memory_space<vmem>>, vector<1x1x16xf32>
    %319 = vector.broadcast %318 : vector<1x1x16xf32> to vector<2x8x16xf32>
    %320 = arith.mulf %317, %319 : vector<2x8x16xf32>
    %cst_122 = arith.constant dense<0.000000e+00> : vector<2x8xf32>
    %321 = vector.multi_reduction <add>, %320, %cst_122 [2] : vector<2x8x16xf32> to vector<2x8xf32>
    %c0_123 = arith.constant 0 : index
    %c0_124 = arith.constant 0 : index
    %322 = vector.load %arg21[%c0_123, %c0_124] : memref<1x1xf32, #tpu.memory_space<vmem>>, vector<1x1xf32>
    %323 = vector.broadcast %322 : vector<1x1xf32> to vector<2x8xf32>
    %324 = arith.addf %321, %323 : vector<2x8xf32>
    %cst_125 = arith.constant 0.000000e+00 : f32
    %325 = vector.broadcast %cst_125 : f32 to vector<2x8xf32>
    %326 = arith.subf %325, %324 : vector<2x8xf32>
    %327 = math.exp %326 : vector<2x8xf32>
    %cst_126 = arith.constant 1.000000e+00 : f32
    %328 = vector.broadcast %cst_126 : f32 to vector<2x8xf32>
    %329 = arith.addf %328, %327 : vector<2x8xf32>
    %330 = tpu.reciprocal %329 {approx = true} : vector<2x8xf32> -> vector<2x8xf32>
    %c0_127 = arith.constant 0 : index
    %c0_128 = arith.constant 0 : index
    %331 = vector.load %arg22[%c0_127, %c0_128] : memref<2x8xf32, #tpu.memory_space<vmem>>, vector<2x8xf32>
    tpu.vector_store %arg22[%c0_127, %c0_128], %330 {strides = array<i32>} : memref<2x8xf32, #tpu.memory_space<vmem>>, vector<2x8xf32>,
    return
  }
}

</mosaic_0001>

<llo_original>
// kernel: sl_module_eib_forward.1
$region0: #{sl_module_eib_forward.1}
  #allocation0 [shape = 'u32[]', space=smem, size = 0x4, offset = 0x4, fixed_abs, tag = 'smem constant byte address 0x4 - core index']
  #allocation1 [shape = 'u32[144,128]{1,0:T(1,128)}', space=vmem, size = 0x12000, scoped, tag = 'internal scratch']
  #allocation2 [shape = 'f32[1,1]{1,0:T(1,128)S(1)}', space=vmem, size = 0x200, scoped, tag = 'scoped memory for sl_module_eib_forward.1']
  %s0 = inlined_call_operand.hbm [shape: f32[2,8,32], index: 0, kind: input, shape index: {}]
  %s1 = inlined_call_operand.hbm [shape: f32[2,8,24], index: 1, kind: input, shape index: {}]
  %s2 = inlined_call_operand.vmem [shape: f32[2,8,32], index: 2, kind: input, shape index: {}]
  %s3 = inlined_call_operand.vmem [shape: f32[56,56], index: 3, kind: input, shape index: {}]
  %s4 = inlined_call_operand.vmem [shape: f32[1,56], index: 4, kind: input, shape index: {}]
  %s5 = inlined_call_operand.hbm [shape: f32[56,64], index: 5, kind: input, shape index: {}]
  %s6 = inlined_call_operand.hbm [shape: f32[1,64], index: 6, kind: input, shape index: {}]
  %s7 = inlined_call_operand.vmem [shape: f32[2,1,32], index: 7, kind: input, shape index: {}]
  %s8 = inlined_call_operand.vmem [shape: f32[2,1,32], index: 8, kind: input, shape index: {}]
  %s9 = inlined_call_operand.vmem [shape: f32[2,32,96], index: 9, kind: input, shape index: {}]
  %s10 = inlined_call_operand.vmem [shape: f32[2,32,32], index: 10, kind: input, shape index: {}]
  %s11 = inlined_call_operand.vmem [shape: f32[2,1,32], index: 11, kind: input, shape index: {}]
  %s12 = inlined_call_operand.hbm [shape: f32[2,1,32], index: 12, kind: input, shape index: {}]
  %s13 = inlined_call_operand.hbm [shape: f32[2,1,32], index: 13, kind: input, shape index: {}]
  %s14 = inlined_call_operand.vmem [shape: f32[2,32,64], index: 14, kind: input, shape index: {}]
  %s15 = inlined_call_operand.vmem [shape: f32[2,1,64], index: 15, kind: input, shape index: {}]
  %s16 = inlined_call_operand.vmem [shape: f32[2,64,32], index: 16, kind: input, shape index: {}]
  %s17 = inlined_call_operand.vmem [shape: f32[2,1,32], index: 17, kind: input, shape index: {}]
  %s18 = inlined_call_operand.vmem [shape: f32[32,16], index: 18, kind: input, shape index: {}]
  %s19 = inlined_call_operand.vmem [shape: f32[1,16], index: 19, kind: input, shape index: {}]
  %s20 = inlined_call_operand.vmem [shape: f32[1,1,16], index: 20, kind: input, shape index: {}]
  %s21 = inlined_call_operand.<no memory space> [shape: f32[1,1], index: 21, kind: input, shape index: {}]
  %s22 = inlined_call_operand.hbm [shape: f32[2,8], index: 22, kind: output, shape index: {0}]
  %s23 = inlined_call_operand.hbm [shape: f32[1,1], index: 23, kind: output, shape index: {1}]
  %24 = xla_tuple %s22, %s23
  %s25 = sld [smem:[#allocation0]]
  $region130: #{sl_module_eib_forward.1} parent=0
    _
  %s27 = ssub.s32 1, %s25
  %s28 = scalar_select 0, %s27, %s25
  %v29 = vstv %s21
  %30 = vst [vmem:[#allocation2] sm:$0x1] %v29
  $region1: #{sl_module_eib_forward.1} parent=0
    #allocation3 [shape = 'u8[8192]{0}', space=vmem, size = 0x2000, scoped, tag = 'input window, operand 0, single buffered']
    #allocation4 [shape = 's32[1]{0}', space=sflag, size = 0x4, scoped, tag = 'scoped memory for sl_module_eib_forward.1']
    #allocation5 [shape = 's32[1]{0}', space=sflag, size = 0x4, scoped, tag = 'scoped memory for sl_module_eib_forward.1']
    #allocation6 [shape = 'u8[8192]{0}', space=vmem, size = 0x2000, scoped, tag = 'input window, operand 1, single buffered']
    #allocation7 [shape = 's32[1]{0}', space=sflag, size = 0x4, scoped, tag = 'scoped memory for sl_module_eib_forward.1']
    #allocation8 [shape = 'u8[28672]{0}', space=vmem, size = 0x7000, scoped, tag = 'input window, operand 5, single buffered']
    #allocation9 [shape = 'u8[512]{0}', space=vmem, size = 0x400, scoped, tag = 'input window, operand 6, single buffered']
    #allocation10 [shape = 's32[1]{0}', space=sflag, size = 0x4, scoped, tag = 'scoped memory for sl_module_eib_forward.1']
    #allocation11 [shape = 'u8[1024]{0}', space=vmem, size = 0x400, scoped, tag = 'input window, operand 12, single buffered']
    #allocation12 [shape = 'u8[1024]{0}', space=vmem, size = 0x400, scoped, tag = 'input window, operand 13, single buffered']
    #allocation13 [shape = 's32[1]{0}', space=sflag, size = 0x4, scoped, tag = 'scoped memory for sl_module_eib_forward.1']
    #allocation14 [shape = 'u8[1024]{0}', space=vmem, size = 0x400, scoped, tag = 'output window, operand 0, single buffered']
    #allocation15 [shape = 'u8[512]{0}', space=vmem, size = 0x400, scoped, tag = 'output window, operand 1, single buffered']
    #allocation16 [shape = 's32[1]{0}', space=sflag, size = 0x4, scoped, tag = 'scoped memory for sl_module_eib_forward.1']
    %31 = vsyncpa [#allocation4], 0
    %32 = vsyncpa [#allocation7], 0
    %33 = vsyncpa [#allocation10], 0
    %34 = vsyncpa [#allocation13], 0
    %35 = vsyncpa [#allocation5], 0
    %36 = vsyncpa [#allocation16], 0
    // Predicated region
    $region2: #{sl_module_eib_forward.1} parent=1 // pred_check
      _
    $region3: #{sl_module_eib_forward.1} parent=1 // pred_check_branch
      %38 = sbr.rel (0) target = $region5
    $region4: #{sl_module_eib_forward.1} parent=1 // pred_region
      %s40 = ssub.s32 256, 256
      %41 = vsyncadd [#allocation4], %s40
      %s42 = sshll.u32 [#allocation3], 4
      %s43 = int_to_ptr.vmem [resolvable:$true] %s42
      %48 = dma.hbm_to_vmem [thread:$0]  %s0, 256, %s43, [#allocation4], 128, 128, 8
    $region5: #{sl_module_eib_forward.1} parent=1 // pred_fallthru
      _
    // Predicated region
    $region6: #{sl_module_eib_forward.1} parent=1 // pred_check
      _
    $region7: #{sl_module_eib_forward.1} parent=1 // pred_check_branch
      %50 = sbr.rel (0) target = $region9
    $region8: #{sl_module_eib_forward.1} parent=1 // pred_region
      %s52 = ssub.s32 256, 256
      %53 = vsyncadd [#allocation7], %s52
      %s54 = sshll.u32 [#allocation6], 4
      %s55 = int_to_ptr.vmem [resolvable:$true] %s54
      %60 = dma.hbm_to_vmem [thread:$0]  %s1, 256, %s55, [#allocation7], 128, 128, 8
    $region9: #{sl_module_eib_forward.1} parent=1 // pred_fallthru
      _
    // Predicated region
    $region10: #{sl_module_eib_forward.1} parent=1 // pred_check
      _
    $region11: #{sl_module_eib_forward.1} parent=1 // pred_check_branch
      %62 = sbr.rel (0) target = $region13
    $region12: #{sl_module_eib_forward.1} parent=1 // pred_region
      _
    $region13: #{sl_module_eib_forward.1} parent=1 // pred_fallthru
      _
    // Predicated region
    $region14: #{sl_module_eib_forward.1} parent=1 // pred_check
      _
    $region15: #{sl_module_eib_forward.1} parent=1 // pred_check_branch
      %64 = sbr.rel (0) target = $region17
    $region16: #{sl_module_eib_forward.1} parent=1 // pred_region
      _
    $region17: #{sl_module_eib_forward.1} parent=1 // pred_fallthru
      _
    // Predicated region
    $region18: #{sl_module_eib_forward.1} parent=1 // pred_check
      _
    $region19: #{sl_module_eib_forward.1} parent=1 // pred_check_branch
      %66 = sbr.rel (0) target = $region21
    $region20: #{sl_module_eib_forward.1} parent=1 // pred_region
      _
    $region21: #{sl_module_eib_forward.1} parent=1 // pred_fallthru
      _
    // Predicated region
    $region22: #{sl_module_eib_forward.1} parent=1 // pred_check
      _
    $region23: #{sl_module_eib_forward.1} parent=1 // pred_check_branch
      %68 = sbr.rel (0) target = $region25
    $region24: #{sl_module_eib_forward.1} parent=1 // pred_region
      %s70 = ssub.s32 896, 896
      %71 = vsyncadd [#allocation7], %s70
      %s72 = sshll.u32 [#allocation8], 4
      %s73 = int_to_ptr.vmem [resolvable:$true] %s72
      %78 = dma.hbm_to_vmem [thread:$0]  %s5, 896, %s73, [#allocation7], 128, 128, 8
    $region25: #{sl_module_eib_forward.1} parent=1 // pred_fallthru
      _
    // Predicated region
    $region26: #{sl_module_eib_forward.1} parent=1 // pred_check
      _
    $region27: #{sl_module_eib_forward.1} parent=1 // pred_check_branch
      %80 = sbr.rel (0) target = $region29
    $region28: #{sl_module_eib_forward.1} parent=1 // pred_region
      %s82 = ssub.s32 16, 16
      %83 = vsyncadd [#allocation10], %s82
      %s85 = sshll.u32 [#allocation9], 4
      %s86 = int_to_ptr.vmem [resolvable:$true] %s85
      %88 = dma.hbm_to_vmem [thread:$0]  %s6, 16, %s86, [#allocation10]
    $region29: #{sl_module_eib_forward.1} parent=1 // pred_fallthru
      _
    // Predicated region
    $region30: #{sl_module_eib_forward.1} parent=1 // pred_check
      _
    $region31: #{sl_module_eib_forward.1} parent=1 // pred_check_branch
      %90 = sbr.rel (0) target = $region33
    $region32: #{sl_module_eib_forward.1} parent=1 // pred_region
      _
    $region33: #{sl_module_eib_forward.1} parent=1 // pred_fallthru
      _
    // Predicated region
    $region34: #{sl_module_eib_forward.1} parent=1 // pred_check
      _
    $region35: #{sl_module_eib_forward.1} parent=1 // pred_check_branch
      %92 = sbr.rel (0) target = $region37
    $region36: #{sl_module_eib_forward.1} parent=1 // pred_region
      _
    $region37: #{sl_module_eib_forward.1} parent=1 // pred_fallthru
      _
    // Predicated region
    $region38: #{sl_module_eib_forward.1} parent=1 // pred_check
      _
    $region39: #{sl_module_eib_forward.1} parent=1 // pred_check_branch
      %94 = sbr.rel (0) target = $region41
    $region40: #{sl_module_eib_forward.1} parent=1 // pred_region
      _
    $region41: #{sl_module_eib_forward.1} parent=1 // pred_fallthru
      _
    // Predicated region
    $region42: #{sl_module_eib_forward.1} parent=1 // pred_check
      _
    $region43: #{sl_module_eib_forward.1} parent=1 // pred_check_branch
      %96 = sbr.rel (0) target = $region45
    $region44: #{sl_module_eib_forward.1} parent=1 // pred_region
      _
    $region45: #{sl_module_eib_forward.1} parent=1 // pred_fallthru
      _
    // Predicated region
    $region46: #{sl_module_eib_forward.1} parent=1 // pred_check
      _
    $region47: #{sl_module_eib_forward.1} parent=1 // pred_check_branch
      %98 = sbr.rel (0) target = $region49
    $region48: #{sl_module_eib_forward.1} parent=1 // pred_region
      _
    $region49: #{sl_module_eib_forward.1} parent=1 // pred_fallthru
      _
    // Predicated region
    $region50: #{sl_module_eib_forward.1} parent=1 // pred_check
      _
    $region51: #{sl_module_eib_forward.1} parent=1 // pred_check_branch
      %100 = sbr.rel (0) target = $region53
    $region52: #{sl_module_eib_forward.1} parent=1 // pred_region
      %s102 = ssub.s32 32, 32
      %103 = vsyncadd [#allocation10], %s102
      %s104 = sshll.u32 [#allocation11], 4
      %s105 = int_to_ptr.vmem [resolvable:$true] %s104
      %110 = dma.hbm_to_vmem [thread:$0]  %s12, 32, %s105, [#allocation10], 16, 16, 1
    $region53: #{sl_module_eib_forward.1} parent=1 // pred_fallthru
      _
    // Predicated region
    $region54: #{sl_module_eib_forward.1} parent=1 // pred_check
      _
    $region55: #{sl_module_eib_forward.1} parent=1 // pred_check_branch
      %112 = sbr.rel (0) target = $region57
    $region56: #{sl_module_eib_forward.1} parent=1 // pred_region
      %s114 = ssub.s32 32, 32
      %115 = vsyncadd [#allocation13], %s114
      %s116 = sshll.u32 [#allocation12], 4
      %s117 = int_to_ptr.vmem [resolvable:$true] %s116
      %122 = dma.hbm_to_vmem [thread:$0]  %s13, 32, %s117, [#allocation13], 16, 16, 1
    $region57: #{sl_module_eib_forward.1} parent=1 // pred_fallthru
      _
    // Predicated region
    $region58: #{sl_module_eib_forward.1} parent=1 // pred_check
      _
    $region59: #{sl_module_eib_forward.1} parent=1 // pred_check_branch
      %124 = sbr.rel (0) target = $region61
    $region60: #{sl_module_eib_forward.1} parent=1 // pred_region
      _
    $region61: #{sl_module_eib_forward.1} parent=1 // pred_fallthru
      _
    // Predicated region
    $region62: #{sl_module_eib_forward.1} parent=1 // pred_check
      _
    $region63: #{sl_module_eib_forward.1} parent=1 // pred_check_branch
      %126 = sbr.rel (0) target = $region65
    $region64: #{sl_module_eib_forward.1} parent=1 // pred_region
      _
    $region65: #{sl_module_eib_forward.1} parent=1 // pred_fallthru
      _
    // Predicated region
    $region66: #{sl_module_eib_forward.1} parent=1 // pred_check
      _
    $region67: #{sl_module_eib_forward.1} parent=1 // pred_check_branch
      %128 = sbr.rel (0) target = $region69
    $region68: #{sl_module_eib_forward.1} parent=1 // pred_region
      _
    $region69: #{sl_module_eib_forward.1} parent=1 // pred_fallthru
      _
    // Predicated region
    $region70: #{sl_module_eib_forward.1} parent=1 // pred_check
      _
    $region71: #{sl_module_eib_forward.1} parent=1 // pred_check_branch
      %130 = sbr.rel (0) target = $region73
    $region72: #{sl_module_eib_forward.1} parent=1 // pred_region
      _
    $region73: #{sl_module_eib_forward.1} parent=1 // pred_fallthru
      _
    // Predicated region
    $region74: #{sl_module_eib_forward.1} parent=1 // pred_check
      _
    $region75: #{sl_module_eib_forward.1} parent=1 // pred_check_branch
      %132 = sbr.rel (0) target = $region77
    $region76: #{sl_module_eib_forward.1} parent=1 // pred_region
      _
    $region77: #{sl_module_eib_forward.1} parent=1 // pred_fallthru
      _
    // Predicated region
    $region78: #{sl_module_eib_forward.1} parent=1 // pred_check
      _
    $region79: #{sl_module_eib_forward.1} parent=1 // pred_check_branch
      %134 = sbr.rel (0) target = $region81
    $region80: #{sl_module_eib_forward.1} parent=1 // pred_region
      _
    $region81: #{sl_module_eib_forward.1} parent=1 // pred_fallthru
      _
    // Predicated region
    $region82: #{sl_module_eib_forward.1} parent=1 // pred_check
      _
    $region83: #{sl_module_eib_forward.1} parent=1 // pred_check_branch
      %136 = sbr.rel (0) target = $region85
    $region84: #{sl_module_eib_forward.1} parent=1 // pred_region
      _
    $region85: #{sl_module_eib_forward.1} parent=1 // pred_fallthru
      _
    // Predicated region
    $region86: #{sl_module_eib_forward.1} parent=1 // pred_check
      _
    $region87: #{sl_module_eib_forward.1} parent=1 // pred_check_branch
      %138 = sbr.rel (0) target = $region89
    $region88: #{sl_module_eib_forward.1} parent=1 // pred_region
      _
    $region89: #{sl_module_eib_forward.1} parent=1 // pred_fallthru
      _
    // Predicated region
    $region90: #{sl_module_eib_forward.1} parent=1 // pred_check
      _
    $region91: #{sl_module_eib_forward.1} parent=1 // pred_check_branch
      %140 = sbr.rel (0) target = $region93
    $region92: #{sl_module_eib_forward.1} parent=1 // pred_region
      %141 = dma.done [#allocation4], 256
    $region93: #{sl_module_eib_forward.1} parent=1 // pred_fallthru
      _
    // Predicated region
    $region94: #{sl_module_eib_forward.1} parent=1 // pred_check
      _
    $region95: #{sl_module_eib_forward.1} parent=1 // pred_check_branch
      %143 = sbr.rel (0) target = $region97
    $region96: #{sl_module_eib_forward.1} parent=1 // pred_region
      %144 = dma.done [#allocation7], 256
    $region97: #{sl_module_eib_forward.1} parent=1 // pred_fallthru
      _
    // Predicated region
    $region98: #{sl_module_eib_forward.1} parent=1 // pred_check
      _
    $region99: #{sl_module_eib_forward.1} parent=1 // pred_check_branch
      %146 = sbr.rel (0) target = $region101
    $region100: #{sl_module_eib_forward.1} parent=1 // pred_region
      %147 = dma.done [#allocation7], 896
    $region101: #{sl_module_eib_forward.1} parent=1 // pred_fallthru
      _
    // Predicated region
    $region102: #{sl_module_eib_forward.1} parent=1 // pred_check
      _
    $region103: #{sl_module_eib_forward.1} parent=1 // pred_check_branch
      %149 = sbr.rel (0) target = $region105
    $region104: #{sl_module_eib_forward.1} parent=1 // pred_region
      %150 = dma.done [#allocation10], 16
    $region105: #{sl_module_eib_forward.1} parent=1 // pred_fallthru
      _
    // Predicated region
    $region106: #{sl_module_eib_forward.1} parent=1 // pred_check
      _
    $region107: #{sl_module_eib_forward.1} parent=1 // pred_check_branch
      %152 = sbr.rel (0) target = $region109
    $region108: #{sl_module_eib_forward.1} parent=1 // pred_region
      %153 = dma.done [#allocation10], 32
    $region109: #{sl_module_eib_forward.1} parent=1 // pred_fallthru
      _
    // Predicated region
    $region110: #{sl_module_eib_forward.1} parent=1 // pred_check
      _
    $region111: #{sl_module_eib_forward.1} parent=1 // pred_check_branch
      %155 = sbr.rel (0) target = $region113
    $region112: #{sl_module_eib_forward.1} parent=1 // pred_region
      %156 = dma.done [#allocation13], 32
    $region113: #{sl_module_eib_forward.1} parent=1 // pred_fallthru
      _
    %v157 = vld [vmem:[#allocation3] sm:$0xff]
    %v158 = vld [vmem:[#allocation3 + $0x8] sm:$0xff]
    %v159 = vld [vmem:[#allocation6] sm:$0xff]
    %v160 = vld [vmem:[#allocation6 + $0x8] sm:$0xff]
    %v161 = vld [vmem:[%s2] sm:$0xff]
    %v162 = vld [vmem:[%s2 + $0x8] sm:$0xff]
    %v163 = vld [vmem:[%s3] sm:$0xff]
    %v164 = vld [vmem:[%s3 + $0x8] sm:$0xff]
    %v165 = vld [vmem:[%s3 + $0x10] sm:$0xff]
    %v166 = vld [vmem:[%s3 + $0x18] sm:$0xff]
    %v167 = vld [vmem:[%s3 + $0x20] sm:$0xff]
    %v168 = vld [vmem:[%s3 + $0x28] sm:$0xff]
    %v169 = vld [vmem:[%s3 + $0x30] sm:$0xff]
    %vm170 = vcmask 195584
    %v172 = vsel %vm170, %v159, 0
    %v175 = vsel %vm170, %v160, 0
    %177 = vmatprep.subr.mxu0 0.0
    %178 = vmatpush1.msra.mxu0 0.0
    %179 = vmatprep.subr.mxu0 0.0
    %180 = vmatpush1.msra.mxu0 0.0
    %181 = vmatprep.subr.mxu0 0.0
    %182 = vmatpush1.msra.mxu0 0.0
    %183 = vmatprep.subr.mxu0 0.0
    %184 = vmatpush1.msra.mxu0 0.0
    %185 = vmatprep.subr.mxu0 0.0
    %186 = vmatpush1.msra.mxu0 0.0
    %187 = vmatprep.subr.mxu0 0.0
    %188 = vmatpush1.msra.mxu0 0.0
    %189 = vmatprep.subr.mxu0 0.0
    %190 = vmatpush1.msra.mxu0 0.0
    %191 = vmatprep.subr.mxu0 0.0
    %192 = vmatpush1.msra.mxu0 0.0
    %193 = vmatprep.subr.mxu0 0.0
    %194 = vmatpush1.msra.mxu0 0.0
    %195 = vmatprep.subr.mxu0 0.0
    %196 = vmatpush1.msra.mxu0 0.0
    %197 = vmatprep.subr.mxu0 0.0
    %198 = vmatpush1.msra.mxu0 0.0
    %199 = vmatprep.subr.mxu0 0.0
    %200 = vmatpush1.msra.mxu0 0.0
    %201 = vmatprep.subr.mxu0 0.0
    %202 = vmatpush1.msra.mxu0 0.0
    %203 = vmatprep.subr.mxu0 0.0
    %204 = vmatpush1.msra.mxu0 %v169
    %205 = vmatprep.subr.mxu0 0.0
    %206 = vmatpush1.msra.mxu0 %v168
    %207 = vmatprep.subr.mxu0 0.0
    %208 = vmatpush1.msra.mxu0 %v167
    %209 = vmatprep.subr.mxu0 0.0
    %210 = vmatpush2.msra.mxu0 0.0
    %211 = vmatprep.subr.mxu0 0.0
    %212 = vmatpush2.msra.mxu0 0.0
    %213 = vmatprep.subr.mxu0 0.0
    %214 = vmatpush2.msra.mxu0 0.0
    %215 = vmatprep.subr.mxu0 0.0
    %216 = vmatpush2.msra.mxu0 0.0
    %217 = vmatprep.subr.mxu0 0.0
    %218 = vmatpush2.msra.mxu0 0.0
    %219 = vmatprep.subr.mxu0 0.0
    %220 = vmatpush2.msra.mxu0 0.0
    %221 = vmatprep.subr.mxu0 0.0
    %222 = vmatpush2.msra.mxu0 0.0
    %223 = vmatprep.subr.mxu0 0.0
    %224 = vmatpush2.msra.mxu0 0.0
    %225 = vmatprep.subr.mxu0 0.0
    %226 = vmatpush2.msra.mxu0 0.0
    %227 = vmatprep.subr.mxu0 0.0
    %228 = vmatpush2.msra.mxu0 0.0
    %229 = vmatprep.subr.mxu0 0.0
    %230 = vmatpush2.msra.mxu0 0.0
    %231 = vmatprep.subr.mxu0 0.0
    %232 = vmatpush2.msra.mxu0 0.0
    %233 = vmatprep.subr.mxu0 0.0
    %234 = vmatpush2.msra.mxu0 0.0
    %235 = vmatprep.subr.mxu0 0.0
    %236 = vmatpush2.msra.mxu0 0.0
    %237 = vmatprep.subr.mxu0 0.0
    %238 = vmatpush2.msra.mxu0 0.0
    %239 = vmatprep.subr.mxu0 0.0
    %240 = vmatpush2.msra.mxu0 0.0
    %241 = vmatprep.mubr.f32.mxu0 0.0
    %242 = vmatmul.mubr.f32.gmra.mxu0 %v172
    %v243 = vpop.f32.mrf.mxu0
    %v244 = vadd.f32 0.0, %v243
    %v245 = vpop.f32.mrf.mxu0
    %246 = vmatprep.mubr.f32.mxu0 0.0
    %247 = vmatmul.mubr.f32.gmra.mxu0 %v175
    %v248 = vpop.f32.mrf.mxu0
    %v249 = vadd.f32 0.0, %v248
    %v250 = vpop.f32.mrf.mxu0
    %251 = vdwg.mxu0
    %vm252 = vcmask 261120
    %v254 = vsel %vm252, %v157, 0
    %v257 = vsel %vm252, %v158, 0
    %259 = vmatprep.subr.mxu0 0.0
    %260 = vmatpush1.msra.mxu0 0.0
    %261 = vmatprep.subr.mxu0 0.0
    %262 = vmatpush1.msra.mxu0 0.0
    %263 = vmatprep.subr.mxu0 0.0
    %264 = vmatpush1.msra.mxu0 0.0
    %265 = vmatprep.subr.mxu0 0.0
    %266 = vmatpush1.msra.mxu0 0.0
    %267 = vmatprep.subr.mxu0 0.0
    %268 = vmatpush1.msra.mxu0 0.0
    %269 = vmatprep.subr.mxu0 0.0
    %270 = vmatpush1.msra.mxu0 0.0
    %271 = vmatprep.subr.mxu0 0.0
    %272 = vmatpush1.msra.mxu0 0.0
    %273 = vmatprep.subr.mxu0 0.0
    %274 = vmatpush1.msra.mxu0 0.0
    %275 = vmatprep.subr.mxu0 0.0
    %276 = vmatpush1.msra.mxu0 0.0
    %277 = vmatprep.subr.mxu0 0.0
    %278 = vmatpush1.msra.mxu0 0.0
    %279 = vmatprep.subr.mxu0 0.0
    %280 = vmatpush1.msra.mxu0 0.0
    %281 = vmatprep.subr.mxu0 0.0
    %282 = vmatpush1.msra.mxu0 0.0
    %283 = vmatprep.subr.mxu0 0.0
    %284 = vmatpush1.msra.mxu0 %v166
    %285 = vmatprep.subr.mxu0 0.0
    %286 = vmatpush1.msra.mxu0 %v165
    %287 = vmatprep.subr.mxu0 0.0
    %288 = vmatpush1.msra.mxu0 %v164
    %289 = vmatprep.subr.mxu0 0.0
    %290 = vmatpush1.msra.mxu0 %v163
    %291 = vmatprep.subr.mxu0 0.0
    %292 = vmatpush2.msra.mxu0 0.0
    %293 = vmatprep.subr.mxu0 0.0
    %294 = vmatpush2.msra.mxu0 0.0
    %295 = vmatprep.subr.mxu0 0.0
    %296 = vmatpush2.msra.mxu0 0.0
    %297 = vmatprep.subr.mxu0 0.0
    %298 = vmatpush2.msra.mxu0 0.0
    %299 = vmatprep.subr.mxu0 0.0
    %300 = vmatpush2.msra.mxu0 0.0
    %301 = vmatprep.subr.mxu0 0.0
    %302 = vmatpush2.msra.mxu0 0.0
    %303 = vmatprep.subr.mxu0 0.0
    %304 = vmatpush2.msra.mxu0 0.0
    %305 = vmatprep.subr.mxu0 0.0
    %306 = vmatpush2.msra.mxu0 0.0
    %307 = vmatprep.subr.mxu0 0.0
    %308 = vmatpush2.msra.mxu0 0.0
    %309 = vmatprep.subr.mxu0 0.0
    %310 = vmatpush2.msra.mxu0 0.0
    %311 = vmatprep.subr.mxu0 0.0
    %312 = vmatpush2.msra.mxu0 0.0
    %313 = vmatprep.subr.mxu0 0.0
    %314 = vmatpush2.msra.mxu0 0.0
    %315 = vmatprep.subr.mxu0 0.0
    %316 = vmatpush2.msra.mxu0 0.0
    %317 = vmatprep.subr.mxu0 0.0
    %318 = vmatpush2.msra.mxu0 0.0
    %319 = vmatprep.subr.mxu0 0.0
    %320 = vmatpush2.msra.mxu0 0.0
    %321 = vmatprep.subr.mxu0 0.0
    %322 = vmatpush2.msra.mxu0 0.0
    %323 = vmatprep.mubr.f32.mxu0 0.0
    %324 = vmatmul.mubr.f32.gmra.mxu0 %v254
    %v325 = vpop.f32.mrf.mxu0
    %v326 = vadd.f32 %v244, %v325
    %v327 = vpop.f32.mrf.mxu0
    %328 = vmatprep.mubr.f32.mxu0 0.0
    %329 = vmatmul.mubr.f32.gmra.mxu0 %v257
    %v330 = vpop.f32.mrf.mxu0
    %v331 = vadd.f32 %v249, %v330
    %v332 = vpop.f32.mrf.mxu0
    %333 = vdwg.mxu0
    %v334 = vld [vmem:[%s4] sm:$0x1]
    %v336 = vlaneseq
    %v337 = vshrl.u32 %v336, 7
    %v338 = vsub.s32 0, %v337
    %v339 = vrot.slane %v334, %v338
    %v341 = vadd.f32 %v326, %v339
    %v342 = vadd.f32 %v331, %v339
    %v343 = vmax.f32 %v341, 0.0
    %v344 = vmax.f32 %v342, 0.0
    %v345 = vld [vmem:[#allocation8] sm:$0xff]
    %v346 = vld [vmem:[#allocation8 + $0x8] sm:$0xff]
    %v347 = vld [vmem:[#allocation8 + $0x10] sm:$0xff]
    %v348 = vld [vmem:[#allocation8 + $0x18] sm:$0xff]
    %v349 = vld [vmem:[#allocation8 + $0x20] sm:$0xff]
    %v350 = vld [vmem:[#allocation8 + $0x28] sm:$0xff]
    %v351 = vld [vmem:[#allocation8 + $0x30] sm:$0xff]
    %v352 = vld [vmem:[#allocation9] sm:$0x1]
    %v354 = vlaneseq
    %v355 = vshrl.u32 %v354, 7
    %v356 = vsub.s32 0, %v355
    %v357 = vrot.slane %v352, %v356
    %vm359 = vcmask 457728
    %v361 = vsel %vm359, %v343, 0
    %v364 = vsel %vm359, %v344, 0
    %366 = vmatprep.subr.mxu0 0.0
    %367 = vmatpush1.msra.mxu0 0.0
    %368 = vmatprep.subr.mxu0 0.0
    %369 = vmatpush1.msra.mxu0 0.0
    %370 = vmatprep.subr.mxu0 0.0
    %371 = vmatpush1.msra.mxu0 0.0
    %372 = vmatprep.subr.mxu0 0.0
    %373 = vmatpush1.msra.mxu0 0.0
    %374 = vmatprep.subr.mxu0 0.0
    %375 = vmatpush1.msra.mxu0 0.0
    %376 = vmatprep.subr.mxu0 0.0
    %377 = vmatpush1.msra.mxu0 0.0
    %378 = vmatprep.subr.mxu0 0.0
    %379 = vmatpush1.msra.mxu0 0.0
    %380 = vmatprep.subr.mxu0 0.0
    %381 = vmatpush1.msra.mxu0 0.0
    %382 = vmatprep.subr.mxu0 0.0
    %383 = vmatpush1.msra.mxu0 0.0
    %384 = vmatprep.subr.mxu0 0.0
    %385 = vmatpush1.msra.mxu0 %v351
    %386 = vmatprep.subr.mxu0 0.0
    %387 = vmatpush1.msra.mxu0 %v350
    %388 = vmatprep.subr.mxu0 0.0
    %389 = vmatpush1.msra.mxu0 %v349
    %390 = vmatprep.subr.mxu0 0.0
    %391 = vmatpush1.msra.mxu0 %v348
    %392 = vmatprep.subr.mxu0 0.0
    %393 = vmatpush1.msra.mxu0 %v347
    %394 = vmatprep.subr.mxu0 0.0
    %395 = vmatpush1.msra.mxu0 %v346
    %396 = vmatprep.subr.mxu0 0.0
    %397 = vmatpush1.msra.mxu0 %v345
    %398 = vmatprep.subr.mxu0 0.0
    %399 = vmatpush2.msra.mxu0 0.0
    %400 = vmatprep.subr.mxu0 0.0
    %401 = vmatpush2.msra.mxu0 0.0
    %402 = vmatprep.subr.mxu0 0.0
    %403 = vmatpush2.msra.mxu0 0.0
    %404 = vmatprep.subr.mxu0 0.0
    %405 = vmatpush2.msra.mxu0 0.0
    %406 = vmatprep.subr.mxu0 0.0
    %407 = vmatpush2.msra.mxu0 0.0
    %408 = vmatprep.subr.mxu0 0.0
    %409 = vmatpush2.msra.mxu0 0.0
    %410 = vmatprep.subr.mxu0 0.0
    %411 = vmatpush2.msra.mxu0 0.0
    %412 = vmatprep.subr.mxu0 0.0
    %413 = vmatpush2.msra.mxu0 0.0
    %414 = vmatprep.subr.mxu0 0.0
    %415 = vmatpush2.msra.mxu0 0.0
    %416 = vmatprep.subr.mxu0 0.0
    %417 = vmatpush2.msra.mxu0 0.0
    %418 = vmatprep.subr.mxu0 0.0
    %419 = vmatpush2.msra.mxu0 0.0
    %420 = vmatprep.subr.mxu0 0.0
    %421 = vmatpush2.msra.mxu0 0.0
    %422 = vmatprep.subr.mxu0 0.0
    %423 = vmatpush2.msra.mxu0 0.0
    %424 = vmatprep.subr.mxu0 0.0
    %425 = vmatpush2.msra.mxu0 0.0
    %426 = vmatprep.subr.mxu0 0.0
    %427 = vmatpush2.msra.mxu0 0.0
    %428 = vmatprep.subr.mxu0 0.0
    %429 = vmatpush2.msra.mxu0 0.0
    %430 = vmatprep.mubr.f32.mxu0 0.0
    %431 = vmatmul.mubr.f32.gmra.mxu0 %v361
    %v432 = vpop.f32.mrf.mxu0
    %v433 = vadd.f32 %v357, %v432
    %v434 = vpop.f32.mrf.mxu0
    %435 = vmatprep.mubr.f32.mxu0 0.0
    %436 = vmatmul.mubr.f32.gmra.mxu0 %v364
    %v437 = vpop.f32.mrf.mxu0
    %v438 = vadd.f32 %v357, %v437
    %v439 = vpop.f32.mrf.mxu0
    %440 = vdwg.mxu0
    %v441 = vsub.f32 %v433, 5.0
    %v442 = vsub.f32 %v438, 5.0
    %vm443 = vcmp.gt.f32.partialorder %v441, 20.0
    %vm444 = vcmp.gt.f32.partialorder %v442, 20.0
    %v445 = vmul.f32 %v441, 1.442695
    %v446 = vpow.pop %v445
    %v447 = vmul.f32 %v442, 1.442695
    %v448 = vpow.pop %v447
    %v449 = vadd.f32 %v446, 1.0
    %v450 = vlog2.pop %v449
    %v451 = vmul.f32 %v450, 0.6931472
    %v452 = vmul.f32 -0.5, %v446
    %v453 = vadd.f32 %v452, 1.0
    %v454 = vmul.f32 %v453, %v446
    %v455 = vand.u32 2147483647, %v446
    %vm456 = vcmp.lt.f32.partialorder %v455, 0.0004427343
    %v457 = vsel %vm456, %v454, %v451
    %v458 = vadd.f32 %v448, 1.0
    %v459 = vlog2.pop %v458
    %v460 = vmul.f32 %v459, 0.6931472
    %v461 = vmul.f32 -0.5, %v448
    %v462 = vadd.f32 %v461, 1.0
    %v463 = vmul.f32 %v462, %v448
    %v464 = vand.u32 2147483647, %v448
    %vm465 = vcmp.lt.f32.partialorder %v464, 0.0004427343
    %v466 = vsel %vm465, %v463, %v460
    %v467 = vsel %vm443, %v441, %v457
    %v468 = vsel %vm444, %v442, %v466
    %471 = vrot.lane.b32.xlu0 %v467, 96
    %v472 = vpop.permute.xlu0 %471
    %473 = vrot.lane.b32.xlu0 %v468, 96
    %v474 = vpop.permute.xlu0 %473
    %v477 = vmul.f32 %v161, %v472
    %v478 = vmul.f32 %v162, %v474
    %v479 = vadd.f32 %v433, %v477
    %v480 = vadd.f32 %v438, %v478
    %v481 = vadd.f32 %v467, 1.0
    %v482 = vadd.f32 %v468, 1.0
    %v483 = vmul.f32 %v433, %v433
    %v484 = vmul.f32 %v438, %v438
    %487 = vrot.lane.b32.xlu0 %v483, 32
    %v488 = vpop.permute.xlu0 %487
    %489 = vrot.lane.b32.xlu0 %v484, 32
    %v490 = vpop.permute.xlu0 %489
    %v493 = vsub.f32 %v481, %v488
    %v494 = vsub.f32 %v482, %v490
    %v495 = vmul.f32 %v467, 1.442695
    %v496 = vpow.pop %v495
    %v497 = vmul.f32 %v468, 1.442695
    %v498 = vpow.pop %v497
    %v499 = vsub.f32 %v493, %v496
    %v500 = vsub.f32 %v494, %v498
    %503 = vrot.lane.b32.xlu0 %v499, 96
    %v504 = vpop.permute.xlu0 %503
    %505 = vrot.lane.b32.xlu0 %v500, 96
    %v506 = vpop.permute.xlu0 %505
    %v509 = vsel %vm252, %v504, 0.0
    %v510 = vsel %vm252, %v506, 0.0
    %v511 = vadd.f32 %v509, %v510
    %512 = vadd.xlane.f32.xlu0 %v511
    %v513 = vpop.xlane.xlu0 %512
    %v514 = vrot.slane %v513, 4
    %v515 = vadd.f32 %v513, %v514
    %v516 = vrot.slane %v515, 2
    %v517 = vadd.f32 %v515, %v516
    %v518 = vrot.slane %v517, 1
    %v519 = vadd.f32 %v517, %v518
    %s520 = vtos %v519
    %s521 = smul.f32 %s520, -0.5
    %v522 = vstv %s521
    %vm523 = vcmask 0
    %524 = vst.msk [vmem:[#allocation15] sm:$0x1] %vm523, %v522
    %v525 = vld [vmem:[%s7] sm:$0x1]
    %v526 = vld [vmem:[%s7 + $0x1] sm:$0x1]
    %v527 = vld [vmem:[%s8] sm:$0x1]
    %v528 = vld [vmem:[%s8 + $0x1] sm:$0x1]
    %v529 = vld [vmem:[#allocation11] sm:$0x1]
    %v530 = vld [vmem:[#allocation11 + $0x1] sm:$0x1]
    %v531 = vld [vmem:[#allocation12] sm:$0x1]
    %v532 = vld [vmem:[#allocation12 + $0x1] sm:$0x1]
    %v533 = vld [vmem:[%s9] sm:$0xff]
    %v534 = vld [vmem:[%s9 + $0x8] sm:$0xff]
    %v535 = vld [vmem:[%s9 + $0x10] sm:$0xff]
    %v536 = vld [vmem:[%s9 + $0x18] sm:$0xff]
    %v537 = vld [vmem:[%s9 + $0x20] sm:$0xff]
    %v538 = vld [vmem:[%s9 + $0x28] sm:$0xff]
    %v539 = vld [vmem:[%s9 + $0x30] sm:$0xff]
    %v540 = vld [vmem:[%s9 + $0x38] sm:$0xff]
    %v541 = vld [vmem:[%s10] sm:$0xff]
    %v542 = vld [vmem:[%s10 + $0x8] sm:$0xff]
    %v543 = vld [vmem:[%s10 + $0x10] sm:$0xff]
    %v544 = vld [vmem:[%s10 + $0x18] sm:$0xff]
    %v545 = vld [vmem:[%s10 + $0x20] sm:$0xff]
    %v546 = vld [vmem:[%s10 + $0x28] sm:$0xff]
    %v547 = vld [vmem:[%s10 + $0x30] sm:$0xff]
    %v548 = vld [vmem:[%s10 + $0x38] sm:$0xff]
    %v549 = vld [vmem:[%s11] sm:$0x1]
    %v550 = vld [vmem:[%s11 + $0x1] sm:$0x1]
    %v551 = vld [vmem:[%s14] sm:$0xff]
    %v552 = vld [vmem:[%s14 + $0x8] sm:$0xff]
    %v553 = vld [vmem:[%s14 + $0x10] sm:$0xff]
    %v554 = vld [vmem:[%s14 + $0x18] sm:$0xff]
    %v555 = vld [vmem:[%s14 + $0x20] sm:$0xff]
    %v556 = vld [vmem:[%s14 + $0x28] sm:$0xff]
    %v557 = vld [vmem:[%s14 + $0x30] sm:$0xff]
    %v558 = vld [vmem:[%s14 + $0x38] sm:$0xff]
    %v559 = vld [vmem:[%s15] sm:$0x1]
    %v560 = vld [vmem:[%s15 + $0x1] sm:$0x1]
    %v561 = vld [vmem:[%s16] sm:$0xff]
    %v562 = vld [vmem:[%s16 + $0x8] sm:$0xff]
    %v563 = vld [vmem:[%s16 + $0x10] sm:$0xff]
    %v564 = vld [vmem:[%s16 + $0x18] sm:$0xff]
    %v565 = vld [vmem:[%s16 + $0x20] sm:$0xff]
    %v566 = vld [vmem:[%s16 + $0x28] sm:$0xff]
    %v567 = vld [vmem:[%s16 + $0x30] sm:$0xff]
    %v568 = vld [vmem:[%s16 + $0x38] sm:$0xff]
    %v569 = vld [vmem:[%s16 + $0x40] sm:$0xff]
    %v570 = vld [vmem:[%s16 + $0x48] sm:$0xff]
    %v571 = vld [vmem:[%s16 + $0x50] sm:$0xff]
    %v572 = vld [vmem:[%s16 + $0x58] sm:$0xff]
    %v573 = vld [vmem:[%s16 + $0x60] sm:$0xff]
    %v574 = vld [vmem:[%s16 + $0x68] sm:$0xff]
    %v575 = vld [vmem:[%s16 + $0x70] sm:$0xff]
    %v576 = vld [vmem:[%s16 + $0x78] sm:$0xff]
    %v577 = vld [vmem:[%s17] sm:$0x1]
    %v578 = vld [vmem:[%s17 + $0x1] sm:$0x1]
    %v579 = vsel %vm252, %v479, 0.0
    %580 = vadd.xlane.f32.xlu0 %v579
    %v581 = vpop.xlane.xlu0 %580
    %v582 = vsel %vm252, %v480, 0.0
    %583 = vadd.xlane.f32.xlu0 %v582
    %v584 = vpop.xlane.xlu0 %583
    %v585 = vrcp.pop 32.0
    %v586 = vmul.f32 %v581, %v585
    %v587 = vmul.f32 %v584, %v585
    %v588 = vsub.f32 %v479, %v586
    %v589 = vsub.f32 %v480, %v587
    %v590 = vmul.f32 %v588, %v588
    %v591 = vmul.f32 %v589, %v589
    %v592 = vsel %vm252, %v590, 0.0
    %593 = vadd.xlane.f32.xlu0 %v592
    %v594 = vpop.xlane.xlu0 %593
    %v595 = vsel %vm252, %v591, 0.0
    %596 = vadd.xlane.f32.xlu0 %v595
    %v597 = vpop.xlane.xlu0 %596
    %v598 = vmul.f32 %v594, %v585
    %v599 = vmul.f32 %v597, %v585
    %v600 = vadd.f32 %v598, 1e-05
    %v601 = vadd.f32 %v599, 1e-05
    %v602 = vrsqrt.pop %v600
    %v603 = vrsqrt.pop %v601
    %v604 = vmul.f32 %v588, %v602
    %v605 = vmul.f32 %v589, %v603
    %v607 = vlaneseq
    %v608 = vshrl.u32 %v607, 7
    %v609 = vsub.s32 0, %v608
    %v610 = vrot.slane %v525, %v609
    %v612 = vmul.f32 %v604, %v610
    %v613 = vmul.f32 %v605, %v610
    %v615 = vlaneseq
    %v616 = vshrl.u32 %v615, 7
    %v617 = vsub.s32 0, %v616
    %v618 = vrot.slane %v527, %v617
    %v620 = vadd.f32 %v612, %v618
    %v621 = vadd.f32 %v613, %v618
    %v623 = vsel %vm252, %v620, 0
    %v626 = vsel %vm252, %v621, 0
    %628 = vmatprep.subr.mxu0 0.0
    %629 = vmatpush1.msra.mxu0 0.0
    %630 = vmatprep.subr.mxu0 0.0
    %631 = vmatpush1.msra.mxu0 0.0
    %632 = vmatprep.subr.mxu0 0.0
    %633 = vmatpush1.msra.mxu0 0.0
    %634 = vmatprep.subr.mxu0 0.0
    %635 = vmatpush1.msra.mxu0 0.0
    %636 = vmatprep.subr.mxu0 0.0
    %637 = vmatpush1.msra.mxu0 0.0
    %638 = vmatprep.subr.mxu0 0.0
    %639 = vmatpush1.msra.mxu0 0.0
    %640 = vmatprep.subr.mxu0 0.0
    %641 = vmatpush1.msra.mxu0 0.0
    %642 = vmatprep.subr.mxu0 0.0
    %643 = vmatpush1.msra.mxu0 0.0
    %644 = vmatprep.subr.mxu0 0.0
    %645 = vmatpush1.msra.mxu0 0.0
    %646 = vmatprep.subr.mxu0 0.0
    %647 = vmatpush1.msra.mxu0 0.0
    %648 = vmatprep.subr.mxu0 0.0
    %649 = vmatpush1.msra.mxu0 0.0
    %650 = vmatprep.subr.mxu0 0.0
    %651 = vmatpush1.msra.mxu0 0.0
    %652 = vmatprep.subr.mxu0 0.0
    %653 = vmatpush1.msra.mxu0 %v536
    %654 = vmatprep.subr.mxu0 0.0
    %655 = vmatpush1.msra.mxu0 %v535
    %656 = vmatprep.subr.mxu0 0.0
    %657 = vmatpush1.msra.mxu0 %v534
    %658 = vmatprep.subr.mxu0 0.0
    %659 = vmatpush1.msra.mxu0 %v533
    %660 = vmatprep.subr.mxu0 0.0
    %661 = vmatpush2.msra.mxu0 0.0
    %662 = vmatprep.subr.mxu0 0.0
    %663 = vmatpush2.msra.mxu0 0.0
    %664 = vmatprep.subr.mxu0 0.0
    %665 = vmatpush2.msra.mxu0 0.0
    %666 = vmatprep.subr.mxu0 0.0
    %667 = vmatpush2.msra.mxu0 0.0
    %668 = vmatprep.subr.mxu0 0.0
    %669 = vmatpush2.msra.mxu0 0.0
    %670 = vmatprep.subr.mxu0 0.0
    %671 = vmatpush2.msra.mxu0 0.0
    %672 = vmatprep.subr.mxu0 0.0
    %673 = vmatpush2.msra.mxu0 0.0
    %674 = vmatprep.subr.mxu0 0.0
    %675 = vmatpush2.msra.mxu0 0.0
    %676 = vmatprep.subr.mxu0 0.0
    %677 = vmatpush2.msra.mxu0 0.0
    %678 = vmatprep.subr.mxu0 0.0
    %679 = vmatpush2.msra.mxu0 0.0
    %680 = vmatprep.subr.mxu0 0.0
    %681 = vmatpush2.msra.mxu0 0.0
    %682 = vmatprep.subr.mxu0 0.0
    %683 = vmatpush2.msra.mxu0 0.0
    %684 = vmatprep.subr.mxu0 0.0
    %685 = vmatpush2.msra.mxu0 0.0
    %686 = vmatprep.subr.mxu0 0.0
    %687 = vmatpush2.msra.mxu0 0.0
    %688 = vmatprep.subr.mxu0 0.0
    %689 = vmatpush2.msra.mxu0 0.0
    %690 = vmatprep.subr.mxu0 0.0
    %691 = vmatpush2.msra.mxu0 0.0
    %692 = vmatprep.mubr.f32.mxu0 0.0
    %693 = vmatmul.mubr.f32.gmra.mxu0 %v623
    %v694 = vpop.f32.mrf.mxu0
    %v695 = vadd.f32 0.0, %v694
    %v696 = vpop.f32.mrf.mxu0
    %697 = vmatprep.mubr.f32.mxu0 0.0
    %698 = vmatmul.mubr.f32.gmra.mxu0 %v626
    %v699 = vpop.f32.mrf.mxu0
    %v700 = vadd.f32 0.0, %v699
    %v701 = vpop.f32.mrf.mxu0
    %702 = vdwg.mxu0
    %704 = vrot.lane.b32.xlu0 %v695, 96
    %v705 = vpop.permute.xlu0 %704
    %vm706 = vcmask 130048
    %v707 = vsel %vm706, %v695, 0
    %v709 = vsel %vm706, %v705, 0
    %711 = vmatprep.subr.mxu0 0.0
    %712 = vmatpush1.xpose.msra.mxu0 0.0
    %713 = vmatprep.subr.mxu0 0.0
    %714 = vmatpush1.xpose.msra.mxu0 0.0
    %715 = vmatprep.subr.mxu0 0.0
    %716 = vmatpush1.xpose.msra.mxu0 0.0
    %717 = vmatprep.subr.mxu0 0.0
    %718 = vmatpush1.xpose.msra.mxu0 0.0
    %719 = vmatprep.subr.mxu0 0.0
    %720 = vmatpush1.xpose.msra.mxu0 0.0
    %721 = vmatprep.subr.mxu0 0.0
    %722 = vmatpush1.xpose.msra.mxu0 0.0
    %723 = vmatprep.subr.mxu0 0.0
    %724 = vmatpush1.xpose.msra.mxu0 0.0
    %725 = vmatprep.subr.mxu0 0.0
    %726 = vmatpush1.xpose.msra.mxu0 0.0
    %727 = vmatprep.subr.mxu0 0.0
    %728 = vmatpush1.xpose.msra.mxu0 0.0
    %729 = vmatprep.subr.mxu0 0.0
    %730 = vmatpush1.xpose.msra.mxu0 0.0
    %731 = vmatprep.subr.mxu0 0.0
    %732 = vmatpush1.xpose.msra.mxu0 0.0
    %733 = vmatprep.subr.mxu0 0.0
    %734 = vmatpush1.xpose.msra.mxu0 0.0
    %735 = vmatprep.subr.mxu0 0.0
    %736 = vmatpush1.xpose.msra.mxu0 0.0
    %737 = vmatprep.subr.mxu0 0.0
    %738 = vmatpush1.xpose.msra.mxu0 0.0
    %739 = vmatprep.subr.mxu0 0.0
    %740 = vmatpush1.xpose.msra.mxu0 0.0
    %741 = vmatprep.subr.mxu0 0.0
    %742 = vmatpush1.xpose.msra.mxu0 %v709
    %743 = vmatprep.subr.mxu0 0.0
    %744 = vmatpush2.xpose.msra.mxu0 0.0
    %745 = vmatprep.subr.mxu0 0.0
    %746 = vmatpush2.xpose.msra.mxu0 0.0
    %747 = vmatprep.subr.mxu0 0.0
    %748 = vmatpush2.xpose.msra.mxu0 0.0
    %749 = vmatprep.subr.mxu0 0.0
    %750 = vmatpush2.xpose.msra.mxu0 0.0
    %751 = vmatprep.subr.mxu0 0.0
    %752 = vmatpush2.xpose.msra.mxu0 0.0
    %753 = vmatprep.subr.mxu0 0.0
    %754 = vmatpush2.xpose.msra.mxu0 0.0
    %755 = vmatprep.subr.mxu0 0.0
    %756 = vmatpush2.xpose.msra.mxu0 0.0
    %757 = vmatprep.subr.mxu0 0.0
    %758 = vmatpush2.xpose.msra.mxu0 0.0
    %759 = vmatprep.subr.mxu0 0.0
    %760 = vmatpush2.xpose.msra.mxu0 0.0
    %761 = vmatprep.subr.mxu0 0.0
    %762 = vmatpush2.xpose.msra.mxu0 0.0
    %763 = vmatprep.subr.mxu0 0.0
    %764 = vmatpush2.xpose.msra.mxu0 0.0
    %765 = vmatprep.subr.mxu0 0.0
    %766 = vmatpush2.xpose.msra.mxu0 0.0
    %767 = vmatprep.subr.mxu0 0.0
    %768 = vmatpush2.xpose.msra.mxu0 0.0
    %769 = vmatprep.subr.mxu0 0.0
    %770 = vmatpush2.xpose.msra.mxu0 0.0
    %771 = vmatprep.subr.mxu0 0.0
    %772 = vmatpush2.xpose.msra.mxu0 0.0
    %773 = vmatprep.subr.mxu0 0.0
    %774 = vmatpush2.xpose.msra.mxu0 0.0
    %775 = vmatprep.mubr.f32.mxu0 0.0
    %776 = vmatmul.mubr.f32.gmra.mxu0 %v707
    %v777 = vpop.f32.mrf.mxu0
    %v778 = vadd.f32 0.0, %v777
    %v779 = vpop.f32.mrf.mxu0
    %780 = vdwg.mxu0
    %782 = vrot.lane.b32.xlu0 %v700, 96
    %v783 = vpop.permute.xlu0 %782
    %v784 = vsel %vm706, %v700, 0
    %v786 = vsel %vm706, %v783, 0
    %788 = vmatprep.subr.mxu0 0.0
    %789 = vmatpush1.xpose.msra.mxu0 0.0
    %790 = vmatprep.subr.mxu0 0.0
    %791 = vmatpush1.xpose.msra.mxu0 0.0
    %792 = vmatprep.subr.mxu0 0.0
    %793 = vmatpush1.xpose.msra.mxu0 0.0
    %794 = vmatprep.subr.mxu0 0.0
    %795 = vmatpush1.xpose.msra.mxu0 0.0
    %796 = vmatprep.subr.mxu0 0.0
    %797 = vmatpush1.xpose.msra.mxu0 0.0
    %798 = vmatprep.subr.mxu0 0.0
    %799 = vmatpush1.xpose.msra.mxu0 0.0
    %800 = vmatprep.subr.mxu0 0.0
    %801 = vmatpush1.xpose.msra.mxu0 0.0
    %802 = vmatprep.subr.mxu0 0.0
    %803 = vmatpush1.xpose.msra.mxu0 0.0
    %804 = vmatprep.subr.mxu0 0.0
    %805 = vmatpush1.xpose.msra.mxu0 0.0
    %806 = vmatprep.subr.mxu0 0.0
    %807 = vmatpush1.xpose.msra.mxu0 0.0
    %808 = vmatprep.subr.mxu0 0.0
    %809 = vmatpush1.xpose.msra.mxu0 0.0
    %810 = vmatprep.subr.mxu0 0.0
    %811 = vmatpush1.xpose.msra.mxu0 0.0
    %812 = vmatprep.subr.mxu0 0.0
    %813 = vmatpush1.xpose.msra.mxu0 0.0
    %814 = vmatprep.subr.mxu0 0.0
    %815 = vmatpush1.xpose.msra.mxu0 0.0
    %816 = vmatprep.subr.mxu0 0.0
    %817 = vmatpush1.xpose.msra.mxu0 0.0
    %818 = vmatprep.subr.mxu0 0.0
    %819 = vmatpush1.xpose.msra.mxu0 %v786
    %820 = vmatprep.subr.mxu0 0.0
    %821 = vmatpush2.xpose.msra.mxu0 0.0
    %822 = vmatprep.subr.mxu0 0.0
    %823 = vmatpush2.xpose.msra.mxu0 0.0
    %824 = vmatprep.subr.mxu0 0.0
    %825 = vmatpush2.xpose.msra.mxu0 0.0
    %826 = vmatprep.subr.mxu0 0.0
    %827 = vmatpush2.xpose.msra.mxu0 0.0
    %828 = vmatprep.subr.mxu0 0.0
    %829 = vmatpush2.xpose.msra.mxu0 0.0
    %830 = vmatprep.subr.mxu0 0.0
    %831 = vmatpush2.xpose.msra.mxu0 0.0
    %832 = vmatprep.subr.mxu0 0.0
    %833 = vmatpush2.xpose.msra.mxu0 0.0
    %834 = vmatprep.subr.mxu0 0.0
    %835 = vmatpush2.xpose.msra.mxu0 0.0
    %836 = vmatprep.subr.mxu0 0.0
    %837 = vmatpush2.xpose.msra.mxu0 0.0
    %838 = vmatprep.subr.mxu0 0.0
    %839 = vmatpush2.xpose.msra.mxu0 0.0
    %840 = vmatprep.subr.mxu0 0.0
    %841 = vmatpush2.xpose.msra.mxu0 0.0
    %842 = vmatprep.subr.mxu0 0.0
    %843 = vmatpush2.xpose.msra.mxu0 0.0
    %844 = vmatprep.subr.mxu0 0.0
    %845 = vmatpush2.xpose.msra.mxu0 0.0
    %846 = vmatprep.subr.mxu0 0.0
    %847 = vmatpush2.xpose.msra.mxu0 0.0
    %848 = vmatprep.subr.mxu0 0.0
    %849 = vmatpush2.xpose.msra.mxu0 0.0
    %850 = vmatprep.subr.mxu0 0.0
    %851 = vmatpush2.xpose.msra.mxu0 0.0
    %852 = vmatprep.mubr.f32.mxu0 0.0
    %853 = vmatmul.mubr.f32.gmra.mxu0 %v784
    %v854 = vpop.f32.mrf.mxu0
    %v855 = vadd.f32 0.0, %v854
    %v856 = vpop.f32.mrf.mxu0
    %857 = vdwg.mxu0
    %v858 = vmul.f32 %v778, 0.25
    %v859 = vmul.f32 %v855, 0.25
    %vm860 = vcmask 64512
    %v861 = vsel %vm860, %v858, -inf
    %862 = vmax.xlane.f32.xlu0 %v861
    %v863 = vpop.xlane.xlu0 %862
    %v864 = vsel %vm860, %v859, -inf
    %865 = vmax.xlane.f32.xlu0 %v864
    %v866 = vpop.xlane.xlu0 %865
    %v867 = vsub.f32 %v858, %v863
    %v868 = vsub.f32 %v859, %v866
    %v869 = vmul.f32 %v867, 1.442695
    %v870 = vpow.pop %v869
    %v871 = vmul.f32 %v868, 1.442695
    %v872 = vpow.pop %v871
    %v873 = vsel %vm860, %v870, 0.0
    %874 = vadd.xlane.f32.xlu0 %v873
    %v875 = vpop.xlane.xlu0 %874
    %v876 = vsel %vm860, %v872, 0.0
    %877 = vadd.xlane.f32.xlu0 %v876
    %v878 = vpop.xlane.xlu0 %877
    %v879 = vrcp.pop %v875
    %v880 = vrcp.pop %v878
    %v881 = vmul.f32 %v870, %v879
    %v882 = vmul.f32 %v872, %v880
    %883 = vrot.lane.b32.xlu0 %v695, 64
    %v884 = vpop.permute.xlu0 %883
    %v887 = vsel %vm860, %v881, 0
    %889 = vmatprep.subr.mxu0 0.0
    %890 = vmatpush1.msra.mxu0 0.0
    %891 = vmatprep.subr.mxu0 0.0
    %892 = vmatpush1.msra.mxu0 0.0
    %893 = vmatprep.subr.mxu0 0.0
    %894 = vmatpush1.msra.mxu0 0.0
    %895 = vmatprep.subr.mxu0 0.0
    %896 = vmatpush1.msra.mxu0 0.0
    %897 = vmatprep.subr.mxu0 0.0
    %898 = vmatpush1.msra.mxu0 0.0
    %899 = vmatprep.subr.mxu0 0.0
    %900 = vmatpush1.msra.mxu0 0.0
    %901 = vmatprep.subr.mxu0 0.0
    %902 = vmatpush1.msra.mxu0 0.0
    %903 = vmatprep.subr.mxu0 0.0
    %904 = vmatpush1.msra.mxu0 0.0
    %905 = vmatprep.subr.mxu0 0.0
    %906 = vmatpush1.msra.mxu0 0.0
    %907 = vmatprep.subr.mxu0 0.0
    %908 = vmatpush1.msra.mxu0 0.0
    %909 = vmatprep.subr.mxu0 0.0
    %910 = vmatpush1.msra.mxu0 0.0
    %911 = vmatprep.subr.mxu0 0.0
    %912 = vmatpush1.msra.mxu0 0.0
    %913 = vmatprep.subr.mxu0 0.0
    %914 = vmatpush1.msra.mxu0 0.0
    %915 = vmatprep.subr.mxu0 0.0
    %916 = vmatpush1.msra.mxu0 0.0
    %917 = vmatprep.subr.mxu0 0.0
    %918 = vmatpush1.msra.mxu0 0.0
    %919 = vmatprep.subr.mxu0 0.0
    %920 = vmatpush1.msra.mxu0 %v884
    %921 = vmatprep.subr.mxu0 0.0
    %922 = vmatpush2.msra.mxu0 0.0
    %923 = vmatprep.subr.mxu0 0.0
    %924 = vmatpush2.msra.mxu0 0.0
    %925 = vmatprep.subr.mxu0 0.0
    %926 = vmatpush2.msra.mxu0 0.0
    %927 = vmatprep.subr.mxu0 0.0
    %928 = vmatpush2.msra.mxu0 0.0
    %929 = vmatprep.subr.mxu0 0.0
    %930 = vmatpush2.msra.mxu0 0.0
    %931 = vmatprep.subr.mxu0 0.0
    %932 = vmatpush2.msra.mxu0 0.0
    %933 = vmatprep.subr.mxu0 0.0
    %934 = vmatpush2.msra.mxu0 0.0
    %935 = vmatprep.subr.mxu0 0.0
    %936 = vmatpush2.msra.mxu0 0.0
    %937 = vmatprep.subr.mxu0 0.0
    %938 = vmatpush2.msra.mxu0 0.0
    %939 = vmatprep.subr.mxu0 0.0
    %940 = vmatpush2.msra.mxu0 0.0
    %941 = vmatprep.subr.mxu0 0.0
    %942 = vmatpush2.msra.mxu0 0.0
    %943 = vmatprep.subr.mxu0 0.0
    %944 = vmatpush2.msra.mxu0 0.0
    %945 = vmatprep.subr.mxu0 0.0
    %946 = vmatpush2.msra.mxu0 0.0
    %947 = vmatprep.subr.mxu0 0.0
    %948 = vmatpush2.msra.mxu0 0.0
    %949 = vmatprep.subr.mxu0 0.0
    %950 = vmatpush2.msra.mxu0 0.0
    %951 = vmatprep.subr.mxu0 0.0
    %952 = vmatpush2.msra.mxu0 0.0
    %953 = vmatprep.mubr.f32.mxu0 0.0
    %954 = vmatmul.mubr.f32.gmra.mxu0 %v887
    %v955 = vpop.f32.mrf.mxu0
    %v956 = vadd.f32 0.0, %v955
    %v957 = vpop.f32.mrf.mxu0
    %958 = vdwg.mxu0
    %959 = vrot.lane.b32.xlu0 %v700, 64
    %v960 = vpop.permute.xlu0 %959
    %v963 = vsel %vm860, %v882, 0
    %965 = vmatprep.subr.mxu0 0.0
    %966 = vmatpush1.msra.mxu0 0.0
    %967 = vmatprep.subr.mxu0 0.0
    %968 = vmatpush1.msra.mxu0 0.0
    %969 = vmatprep.subr.mxu0 0.0
    %970 = vmatpush1.msra.mxu0 0.0
    %971 = vmatprep.subr.mxu0 0.0
    %972 = vmatpush1.msra.mxu0 0.0
    %973 = vmatprep.subr.mxu0 0.0
    %974 = vmatpush1.msra.mxu0 0.0
    %975 = vmatprep.subr.mxu0 0.0
    %976 = vmatpush1.msra.mxu0 0.0
    %977 = vmatprep.subr.mxu0 0.0
    %978 = vmatpush1.msra.mxu0 0.0
    %979 = vmatprep.subr.mxu0 0.0
    %980 = vmatpush1.msra.mxu0 0.0
    %981 = vmatprep.subr.mxu0 0.0
    %982 = vmatpush1.msra.mxu0 0.0
    %983 = vmatprep.subr.mxu0 0.0
    %984 = vmatpush1.msra.mxu0 0.0
    %985 = vmatprep.subr.mxu0 0.0
    %986 = vmatpush1.msra.mxu0 0.0
    %987 = vmatprep.subr.mxu0 0.0
    %988 = vmatpush1.msra.mxu0 0.0
    %989 = vmatprep.subr.mxu0 0.0
    %990 = vmatpush1.msra.mxu0 0.0
    %991 = vmatprep.subr.mxu0 0.0
    %992 = vmatpush1.msra.mxu0 0.0
    %993 = vmatprep.subr.mxu0 0.0
    %994 = vmatpush1.msra.mxu0 0.0
    %995 = vmatprep.subr.mxu0 0.0
    %996 = vmatpush1.msra.mxu0 %v960
    %997 = vmatprep.subr.mxu0 0.0
    %998 = vmatpush2.msra.mxu0 0.0
    %999 = vmatprep.subr.mxu0 0.0
    %1000 = vmatpush2.msra.mxu0 0.0
    %1001 = vmatprep.subr.mxu0 0.0
    %1002 = vmatpush2.msra.mxu0 0.0
    %1003 = vmatprep.subr.mxu0 0.0
    %1004 = vmatpush2.msra.mxu0 0.0
    %1005 = vmatprep.subr.mxu0 0.0
    %1006 = vmatpush2.msra.mxu0 0.0
    %1007 = vmatprep.subr.mxu0 0.0
    %1008 = vmatpush2.msra.mxu0 0.0
    %1009 = vmatprep.subr.mxu0 0.0
    %1010 = vmatpush2.msra.mxu0 0.0
    %1011 = vmatprep.subr.mxu0 0.0
    %1012 = vmatpush2.msra.mxu0 0.0
    %1013 = vmatprep.subr.mxu0 0.0
    %1014 = vmatpush2.msra.mxu0 0.0
    %1015 = vmatprep.subr.mxu0 0.0
    %1016 = vmatpush2.msra.mxu0 0.0
    %1017 = vmatprep.subr.mxu0 0.0
    %1018 = vmatpush2.msra.mxu0 0.0
    %1019 = vmatprep.subr.mxu0 0.0
    %1020 = vmatpush2.msra.mxu0 0.0
    %1021 = vmatprep.subr.mxu0 0.0
    %1022 = vmatpush2.msra.mxu0 0.0
    %1023 = vmatprep.subr.mxu0 0.0
    %1024 = vmatpush2.msra.mxu0 0.0
    %1025 = vmatprep.subr.mxu0 0.0
    %1026 = vmatpush2.msra.mxu0 0.0
    %1027 = vmatprep.subr.mxu0 0.0
    %1028 = vmatpush2.msra.mxu0 0.0
    %1029 = vmatprep.mubr.f32.mxu0 0.0
    %1030 = vmatmul.mubr.f32.gmra.mxu0 %v963
    %v1031 = vpop.f32.mrf.mxu0
    %v1032 = vadd.f32 0.0, %v1031
    %v1033 = vpop.f32.mrf.mxu0
    %1034 = vdwg.mxu0
    %1035 = vrot.lane.b32.xlu0 %v695, 112
    %v1036 = vpop.permute.xlu0 %1035
    %1037 = vrot.lane.b32.xlu0 %v695, 80
    %v1038 = vpop.permute.xlu0 %1037
    %v1039 = vsel %vm706, %v1036, 0
    %v1041 = vsel %vm706, %v1038, 0
    %1043 = vmatprep.subr.mxu0 0.0
    %1044 = vmatpush1.xpose.msra.mxu0 0.0
    %1045 = vmatprep.subr.mxu0 0.0
    %1046 = vmatpush1.xpose.msra.mxu0 0.0
    %1047 = vmatprep.subr.mxu0 0.0
    %1048 = vmatpush1.xpose.msra.mxu0 0.0
    %1049 = vmatprep.subr.mxu0 0.0
    %1050 = vmatpush1.xpose.msra.mxu0 0.0
    %1051 = vmatprep.subr.mxu0 0.0
    %1052 = vmatpush1.xpose.msra.mxu0 0.0
    %1053 = vmatprep.subr.mxu0 0.0
    %1054 = vmatpush1.xpose.msra.mxu0 0.0
    %1055 = vmatprep.subr.mxu0 0.0
    %1056 = vmatpush1.xpose.msra.mxu0 0.0
    %1057 = vmatprep.subr.mxu0 0.0
    %1058 = vmatpush1.xpose.msra.mxu0 0.0
    %1059 = vmatprep.subr.mxu0 0.0
    %1060 = vmatpush1.xpose.msra.mxu0 0.0
    %1061 = vmatprep.subr.mxu0 0.0
    %1062 = vmatpush1.xpose.msra.mxu0 0.0
    %1063 = vmatprep.subr.mxu0 0.0
    %1064 = vmatpush1.xpose.msra.mxu0 0.0
    %1065 = vmatprep.subr.mxu0 0.0
    %1066 = vmatpush1.xpose.msra.mxu0 0.0
    %1067 = vmatprep.subr.mxu0 0.0
    %1068 = vmatpush1.xpose.msra.mxu0 0.0
    %1069 = vmatprep.subr.mxu0 0.0
    %1070 = vmatpush1.xpose.msra.mxu0 0.0
    %1071 = vmatprep.subr.mxu0 0.0
    %1072 = vmatpush1.xpose.msra.mxu0 0.0
    %1073 = vmatprep.subr.mxu0 0.0
    %1074 = vmatpush1.xpose.msra.mxu0 %v1041
    %1075 = vmatprep.subr.mxu0 0.0
    %1076 = vmatpush2.xpose.msra.mxu0 0.0
    %1077 = vmatprep.subr.mxu0 0.0
    %1078 = vmatpush2.xpose.msra.mxu0 0.0
    %1079 = vmatprep.subr.mxu0 0.0
    %1080 = vmatpush2.xpose.msra.mxu0 0.0
    %1081 = vmatprep.subr.mxu0 0.0
    %1082 = vmatpush2.xpose.msra.mxu0 0.0
    %1083 = vmatprep.subr.mxu0 0.0
    %1084 = vmatpush2.xpose.msra.mxu0 0.0
    %1085 = vmatprep.subr.mxu0 0.0
    %1086 = vmatpush2.xpose.msra.mxu0 0.0
    %1087 = vmatprep.subr.mxu0 0.0
    %1088 = vmatpush2.xpose.msra.mxu0 0.0
    %1089 = vmatprep.subr.mxu0 0.0
    %1090 = vmatpush2.xpose.msra.mxu0 0.0
    %1091 = vmatprep.subr.mxu0 0.0
    %1092 = vmatpush2.xpose.msra.mxu0 0.0
    %1093 = vmatprep.subr.mxu0 0.0
    %1094 = vmatpush2.xpose.msra.mxu0 0.0
    %1095 = vmatprep.subr.mxu0 0.0
    %1096 = vmatpush2.xpose.msra.mxu0 0.0
    %1097 = vmatprep.subr.mxu0 0.0
    %1098 = vmatpush2.xpose.msra.mxu0 0.0
    %1099 = vmatprep.subr.mxu0 0.0
    %1100 = vmatpush2.xpose.msra.mxu0 0.0
    %1101 = vmatprep.subr.mxu0 0.0
    %1102 = vmatpush2.xpose.msra.mxu0 0.0
    %1103 = vmatprep.subr.mxu0 0.0
    %1104 = vmatpush2.xpose.msra.mxu0 0.0
    %1105 = vmatprep.subr.mxu0 0.0
    %1106 = vmatpush2.xpose.msra.mxu0 0.0
    %1107 = vmatprep.mubr.f32.mxu0 0.0
    %1108 = vmatmul.mubr.f32.gmra.mxu0 %v1039
    %v1109 = vpop.f32.mrf.mxu0
    %v1110 = vadd.f32 0.0, %v1109
    %v1111 = vpop.f32.mrf.mxu0
    %1112 = vdwg.mxu0
    %1113 = vrot.lane.b32.xlu0 %v700, 112
    %v1114 = vpop.permute.xlu0 %1113
    %1115 = vrot.lane.b32.xlu0 %v700, 80
    %v1116 = vpop.permute.xlu0 %1115
    %v1117 = vsel %vm706, %v1114, 0
    %v1119 = vsel %vm706, %v1116, 0
    %1121 = vmatprep.subr.mxu0 0.0
    %1122 = vmatpush1.xpose.msra.mxu0 0.0
    %1123 = vmatprep.subr.mxu0 0.0
    %1124 = vmatpush1.xpose.msra.mxu0 0.0
    %1125 = vmatprep.subr.mxu0 0.0
    %1126 = vmatpush1.xpose.msra.mxu0 0.0
    %1127 = vmatprep.subr.mxu0 0.0
    %1128 = vmatpush1.xpose.msra.mxu0 0.0
    %1129 = vmatprep.subr.mxu0 0.0
    %1130 = vmatpush1.xpose.msra.mxu0 0.0
    %1131 = vmatprep.subr.mxu0 0.0
    %1132 = vmatpush1.xpose.msra.mxu0 0.0
    %1133 = vmatprep.subr.mxu0 0.0
    %1134 = vmatpush1.xpose.msra.mxu0 0.0
    %1135 = vmatprep.subr.mxu0 0.0
    %1136 = vmatpush1.xpose.msra.mxu0 0.0
    %1137 = vmatprep.subr.mxu0 0.0
    %1138 = vmatpush1.xpose.msra.mxu0 0.0
    %1139 = vmatprep.subr.mxu0 0.0
    %1140 = vmatpush1.xpose.msra.mxu0 0.0
    %1141 = vmatprep.subr.mxu0 0.0
    %1142 = vmatpush1.xpose.msra.mxu0 0.0
    %1143 = vmatprep.subr.mxu0 0.0
    %1144 = vmatpush1.xpose.msra.mxu0 0.0
    %1145 = vmatprep.subr.mxu0 0.0
    %1146 = vmatpush1.xpose.msra.mxu0 0.0
    %1147 = vmatprep.subr.mxu0 0.0
    %1148 = vmatpush1.xpose.msra.mxu0 0.0
    %1149 = vmatprep.subr.mxu0 0.0
    %1150 = vmatpush1.xpose.msra.mxu0 0.0
    %1151 = vmatprep.subr.mxu0 0.0
    %1152 = vmatpush1.xpose.msra.mxu0 %v1119
    %1153 = vmatprep.subr.mxu0 0.0
    %1154 = vmatpush2.xpose.msra.mxu0 0.0
    %1155 = vmatprep.subr.mxu0 0.0
    %1156 = vmatpush2.xpose.msra.mxu0 0.0
    %1157 = vmatprep.subr.mxu0 0.0
    %1158 = vmatpush2.xpose.msra.mxu0 0.0
    %1159 = vmatprep.subr.mxu0 0.0
    %1160 = vmatpush2.xpose.msra.mxu0 0.0
    %1161 = vmatprep.subr.mxu0 0.0
    %1162 = vmatpush2.xpose.msra.mxu0 0.0
    %1163 = vmatprep.subr.mxu0 0.0
    %1164 = vmatpush2.xpose.msra.mxu0 0.0
    %1165 = vmatprep.subr.mxu0 0.0
    %1166 = vmatpush2.xpose.msra.mxu0 0.0
    %1167 = vmatprep.subr.mxu0 0.0
    %1168 = vmatpush2.xpose.msra.mxu0 0.0
    %1169 = vmatprep.subr.mxu0 0.0
    %1170 = vmatpush2.xpose.msra.mxu0 0.0
    %1171 = vmatprep.subr.mxu0 0.0
    %1172 = vmatpush2.xpose.msra.mxu0 0.0
    %1173 = vmatprep.subr.mxu0 0.0
    %1174 = vmatpush2.xpose.msra.mxu0 0.0
    %1175 = vmatprep.subr.mxu0 0.0
    %1176 = vmatpush2.xpose.msra.mxu0 0.0
    %1177 = vmatprep.subr.mxu0 0.0
    %1178 = vmatpush2.xpose.msra.mxu0 0.0
    %1179 = vmatprep.subr.mxu0 0.0
    %1180 = vmatpush2.xpose.msra.mxu0 0.0
    %1181 = vmatprep.subr.mxu0 0.0
    %1182 = vmatpush2.xpose.msra.mxu0 0.0
    %1183 = vmatprep.subr.mxu0 0.0
    %1184 = vmatpush2.xpose.msra.mxu0 0.0
    %1185 = vmatprep.mubr.f32.mxu0 0.0
    %1186 = vmatmul.mubr.f32.gmra.mxu0 %v1117
    %v1187 = vpop.f32.mrf.mxu0
    %v1188 = vadd.f32 0.0, %v1187
    %v1189 = vpop.f32.mrf.mxu0
    %1190 = vdwg.mxu0
    %v1191 = vmul.f32 %v1110, 0.25
    %v1192 = vmul.f32 %v1188, 0.25
    %v1193 = vsel %vm860, %v1191, -inf
    %1194 = vmax.xlane.f32.xlu0 %v1193
    %v1195 = vpop.xlane.xlu0 %1194
    %v1196 = vsel %vm860, %v1192, -inf
    %1197 = vmax.xlane.f32.xlu0 %v1196
    %v1198 = vpop.xlane.xlu0 %1197
    %v1199 = vsub.f32 %v1191, %v1195
    %v1200 = vsub.f32 %v1192, %v1198
    %v1201 = vmul.f32 %v1199, 1.442695
    %v1202 = vpow.pop %v1201
    %v1203 = vmul.f32 %v1200, 1.442695
    %v1204 = vpow.pop %v1203
    %v1205 = vsel %vm860, %v1202, 0.0
    %1206 = vadd.xlane.f32.xlu0 %v1205
    %v1207 = vpop.xlane.xlu0 %1206
    %v1208 = vsel %vm860, %v1204, 0.0
    %1209 = vadd.xlane.f32.xlu0 %v1208
    %v1210 = vpop.xlane.xlu0 %1209
    %v1211 = vrcp.pop %v1207
    %v1212 = vrcp.pop %v1210
    %v1213 = vmul.f32 %v1202, %v1211
    %v1214 = vmul.f32 %v1204, %v1212
    %1215 = vrot.lane.b32.xlu0 %v695, 48
    %v1216 = vpop.permute.xlu0 %1215
    %v1219 = vsel %vm860, %v1213, 0
    %1221 = vmatprep.subr.mxu0 0.0
    %1222 = vmatpush1.msra.mxu0 0.0
    %1223 = vmatprep.subr.mxu0 0.0
    %1224 = vmatpush1.msra.mxu0 0.0
    %1225 = vmatprep.subr.mxu0 0.0
    %1226 = vmatpush1.msra.mxu0 0.0
    %1227 = vmatprep.subr.mxu0 0.0
    %1228 = vmatpush1.msra.mxu0 0.0
    %1229 = vmatprep.subr.mxu0 0.0
    %1230 = vmatpush1.msra.mxu0 0.0
    %1231 = vmatprep.subr.mxu0 0.0
    %1232 = vmatpush1.msra.mxu0 0.0
    %1233 = vmatprep.subr.mxu0 0.0
    %1234 = vmatpush1.msra.mxu0 0.0
    %1235 = vmatprep.subr.mxu0 0.0
    %1236 = vmatpush1.msra.mxu0 0.0
    %1237 = vmatprep.subr.mxu0 0.0
    %1238 = vmatpush1.msra.mxu0 0.0
    %1239 = vmatprep.subr.mxu0 0.0
    %1240 = vmatpush1.msra.mxu0 0.0
    %1241 = vmatprep.subr.mxu0 0.0
    %1242 = vmatpush1.msra.mxu0 0.0
    %1243 = vmatprep.subr.mxu0 0.0
    %1244 = vmatpush1.msra.mxu0 0.0
    %1245 = vmatprep.subr.mxu0 0.0
    %1246 = vmatpush1.msra.mxu0 0.0
    %1247 = vmatprep.subr.mxu0 0.0
    %1248 = vmatpush1.msra.mxu0 0.0
    %1249 = vmatprep.subr.mxu0 0.0
    %1250 = vmatpush1.msra.mxu0 0.0
    %1251 = vmatprep.subr.mxu0 0.0
    %1252 = vmatpush1.msra.mxu0 %v1216
    %1253 = vmatprep.subr.mxu0 0.0
    %1254 = vmatpush2.msra.mxu0 0.0
    %1255 = vmatprep.subr.mxu0 0.0
    %1256 = vmatpush2.msra.mxu0 0.0
    %1257 = vmatprep.subr.mxu0 0.0
    %1258 = vmatpush2.msra.mxu0 0.0
    %1259 = vmatprep.subr.mxu0 0.0
    %1260 = vmatpush2.msra.mxu0 0.0
    %1261 = vmatprep.subr.mxu0 0.0
    %1262 = vmatpush2.msra.mxu0 0.0
    %1263 = vmatprep.subr.mxu0 0.0
    %1264 = vmatpush2.msra.mxu0 0.0
    %1265 = vmatprep.subr.mxu0 0.0
    %1266 = vmatpush2.msra.mxu0 0.0
    %1267 = vmatprep.subr.mxu0 0.0
    %1268 = vmatpush2.msra.mxu0 0.0
    %1269 = vmatprep.subr.mxu0 0.0
    %1270 = vmatpush2.msra.mxu0 0.0
    %1271 = vmatprep.subr.mxu0 0.0
    %1272 = vmatpush2.msra.mxu0 0.0
    %1273 = vmatprep.subr.mxu0 0.0
    %1274 = vmatpush2.msra.mxu0 0.0
    %1275 = vmatprep.subr.mxu0 0.0
    %1276 = vmatpush2.msra.mxu0 0.0
    %1277 = vmatprep.subr.mxu0 0.0
    %1278 = vmatpush2.msra.mxu0 0.0
    %1279 = vmatprep.subr.mxu0 0.0
    %1280 = vmatpush2.msra.mxu0 0.0
    %1281 = vmatprep.subr.mxu0 0.0
    %1282 = vmatpush2.msra.mxu0 0.0
    %1283 = vmatprep.subr.mxu0 0.0
    %1284 = vmatpush2.msra.mxu0 0.0
    %1285 = vmatprep.mubr.f32.mxu0 0.0
    %1286 = vmatmul.mubr.f32.gmra.mxu0 %v1219
    %v1287 = vpop.f32.mrf.mxu0
    %v1288 = vadd.f32 0.0, %v1287
    %v1289 = vpop.f32.mrf.mxu0
    %1290 = vdwg.mxu0
    %1291 = vrot.lane.b32.xlu0 %v700, 48
    %v1292 = vpop.permute.xlu0 %1291
    %v1295 = vsel %vm860, %v1214, 0
    %1297 = vmatprep.subr.mxu0 0.0
    %1298 = vmatpush1.msra.mxu0 0.0
    %1299 = vmatprep.subr.mxu0 0.0
    %1300 = vmatpush1.msra.mxu0 0.0
    %1301 = vmatprep.subr.mxu0 0.0
    %1302 = vmatpush1.msra.mxu0 0.0
    %1303 = vmatprep.subr.mxu0 0.0
    %1304 = vmatpush1.msra.mxu0 0.0
    %1305 = vmatprep.subr.mxu0 0.0
    %1306 = vmatpush1.msra.mxu0 0.0
    %1307 = vmatprep.subr.mxu0 0.0
    %1308 = vmatpush1.msra.mxu0 0.0
    %1309 = vmatprep.subr.mxu0 0.0
    %1310 = vmatpush1.msra.mxu0 0.0
    %1311 = vmatprep.subr.mxu0 0.0
    %1312 = vmatpush1.msra.mxu0 0.0
    %1313 = vmatprep.subr.mxu0 0.0
    %1314 = vmatpush1.msra.mxu0 0.0
    %1315 = vmatprep.subr.mxu0 0.0
    %1316 = vmatpush1.msra.mxu0 0.0
    %1317 = vmatprep.subr.mxu0 0.0
    %1318 = vmatpush1.msra.mxu0 0.0
    %1319 = vmatprep.subr.mxu0 0.0
    %1320 = vmatpush1.msra.mxu0 0.0
    %1321 = vmatprep.subr.mxu0 0.0
    %1322 = vmatpush1.msra.mxu0 0.0
    %1323 = vmatprep.subr.mxu0 0.0
    %1324 = vmatpush1.msra.mxu0 0.0
    %1325 = vmatprep.subr.mxu0 0.0
    %1326 = vmatpush1.msra.mxu0 0.0
    %1327 = vmatprep.subr.mxu0 0.0
    %1328 = vmatpush1.msra.mxu0 %v1292
    %1329 = vmatprep.subr.mxu0 0.0
    %1330 = vmatpush2.msra.mxu0 0.0
    %1331 = vmatprep.subr.mxu0 0.0
    %1332 = vmatpush2.msra.mxu0 0.0
    %1333 = vmatprep.subr.mxu0 0.0
    %1334 = vmatpush2.msra.mxu0 0.0
    %1335 = vmatprep.subr.mxu0 0.0
    %1336 = vmatpush2.msra.mxu0 0.0
    %1337 = vmatprep.subr.mxu0 0.0
    %1338 = vmatpush2.msra.mxu0 0.0
    %1339 = vmatprep.subr.mxu0 0.0
    %1340 = vmatpush2.msra.mxu0 0.0
    %1341 = vmatprep.subr.mxu0 0.0
    %1342 = vmatpush2.msra.mxu0 0.0
    %1343 = vmatprep.subr.mxu0 0.0
    %1344 = vmatpush2.msra.mxu0 0.0
    %1345 = vmatprep.subr.mxu0 0.0
    %1346 = vmatpush2.msra.mxu0 0.0
    %1347 = vmatprep.subr.mxu0 0.0
    %1348 = vmatpush2.msra.mxu0 0.0
    %1349 = vmatprep.subr.mxu0 0.0
    %1350 = vmatpush2.msra.mxu0 0.0
    %1351 = vmatprep.subr.mxu0 0.0
    %1352 = vmatpush2.msra.mxu0 0.0
    %1353 = vmatprep.subr.mxu0 0.0
    %1354 = vmatpush2.msra.mxu0 0.0
    %1355 = vmatprep.subr.mxu0 0.0
    %1356 = vmatpush2.msra.mxu0 0.0
    %1357 = vmatprep.subr.mxu0 0.0
    %1358 = vmatpush2.msra.mxu0 0.0
    %1359 = vmatprep.subr.mxu0 0.0
    %1360 = vmatpush2.msra.mxu0 0.0
    %1361 = vmatprep.mubr.f32.mxu0 0.0
    %1362 = vmatmul.mubr.f32.gmra.mxu0 %v1295
    %v1363 = vpop.f32.mrf.mxu0
    %v1364 = vadd.f32 0.0, %v1363
    %v1365 = vpop.f32.mrf.mxu0
    %1366 = vdwg.mxu0
    %v1368 = vsel %vm706, %v1288, 0
    %v1371 = vsel %vm706, %v1364, 0
    %1373 = vmatprep.subr.mxu0 0.0
    %1374 = vmatpush1.msra.mxu0 0.0
    %1375 = vmatprep.subr.mxu0 0.0
    %1376 = vmatpush1.msra.mxu0 0.0
    %1377 = vmatprep.subr.mxu0 0.0
    %1378 = vmatpush1.msra.mxu0 0.0
    %1379 = vmatprep.subr.mxu0 0.0
    %1380 = vmatpush1.msra.mxu0 0.0
    %1381 = vmatprep.subr.mxu0 0.0
    %1382 = vmatpush1.msra.mxu0 0.0
    %1383 = vmatprep.subr.mxu0 0.0
    %1384 = vmatpush1.msra.mxu0 0.0
    %1385 = vmatprep.subr.mxu0 0.0
    %1386 = vmatpush1.msra.mxu0 0.0
    %1387 = vmatprep.subr.mxu0 0.0
    %1388 = vmatpush1.msra.mxu0 0.0
    %1389 = vmatprep.subr.mxu0 0.0
    %1390 = vmatpush1.msra.mxu0 0.0
    %1391 = vmatprep.subr.mxu0 0.0
    %1392 = vmatpush1.msra.mxu0 0.0
    %1393 = vmatprep.subr.mxu0 0.0
    %1394 = vmatpush1.msra.mxu0 0.0
    %1395 = vmatprep.subr.mxu0 0.0
    %1396 = vmatpush1.msra.mxu0 0.0
    %1397 = vmatprep.subr.mxu0 0.0
    %1398 = vmatpush1.msra.mxu0 0.0
    %1399 = vmatprep.subr.mxu0 0.0
    %1400 = vmatpush1.msra.mxu0 0.0
    %1401 = vmatprep.subr.mxu0 0.0
    %1402 = vmatpush1.msra.mxu0 %v544
    %1403 = vmatprep.subr.mxu0 0.0
    %1404 = vmatpush1.msra.mxu0 %v543
    %1405 = vmatprep.subr.mxu0 0.0
    %1406 = vmatpush2.msra.mxu0 0.0
    %1407 = vmatprep.subr.mxu0 0.0
    %1408 = vmatpush2.msra.mxu0 0.0
    %1409 = vmatprep.subr.mxu0 0.0
    %1410 = vmatpush2.msra.mxu0 0.0
    %1411 = vmatprep.subr.mxu0 0.0
    %1412 = vmatpush2.msra.mxu0 0.0
    %1413 = vmatprep.subr.mxu0 0.0
    %1414 = vmatpush2.msra.mxu0 0.0
    %1415 = vmatprep.subr.mxu0 0.0
    %1416 = vmatpush2.msra.mxu0 0.0
    %1417 = vmatprep.subr.mxu0 0.0
    %1418 = vmatpush2.msra.mxu0 0.0
    %1419 = vmatprep.subr.mxu0 0.0
    %1420 = vmatpush2.msra.mxu0 0.0
    %1421 = vmatprep.subr.mxu0 0.0
    %1422 = vmatpush2.msra.mxu0 0.0
    %1423 = vmatprep.subr.mxu0 0.0
    %1424 = vmatpush2.msra.mxu0 0.0
    %1425 = vmatprep.subr.mxu0 0.0
    %1426 = vmatpush2.msra.mxu0 0.0
    %1427 = vmatprep.subr.mxu0 0.0
    %1428 = vmatpush2.msra.mxu0 0.0
    %1429 = vmatprep.subr.mxu0 0.0
    %1430 = vmatpush2.msra.mxu0 0.0
    %1431 = vmatprep.subr.mxu0 0.0
    %1432 = vmatpush2.msra.mxu0 0.0
    %1433 = vmatprep.subr.mxu0 0.0
    %1434 = vmatpush2.msra.mxu0 0.0
    %1435 = vmatprep.subr.mxu0 0.0
    %1436 = vmatpush2.msra.mxu0 0.0
    %1437 = vmatprep.mubr.f32.mxu0 0.0
    %1438 = vmatmul.mubr.f32.gmra.mxu0 %v1368
    %v1439 = vpop.f32.mrf.mxu0
    %v1440 = vadd.f32 0.0, %v1439
    %v1441 = vpop.f32.mrf.mxu0
    %1442 = vmatprep.mubr.f32.mxu0 0.0
    %1443 = vmatmul.mubr.f32.gmra.mxu0 %v1371
    %v1444 = vpop.f32.mrf.mxu0
    %v1445 = vadd.f32 0.0, %v1444
    %v1446 = vpop.f32.mrf.mxu0
    %1447 = vdwg.mxu0
    %v1449 = vsel %vm706, %v956, 0
    %v1452 = vsel %vm706, %v1032, 0
    %1454 = vmatprep.subr.mxu0 0.0
    %1455 = vmatpush1.msra.mxu0 0.0
    %1456 = vmatprep.subr.mxu0 0.0
    %1457 = vmatpush1.msra.mxu0 0.0
    %1458 = vmatprep.subr.mxu0 0.0
    %1459 = vmatpush1.msra.mxu0 0.0
    %1460 = vmatprep.subr.mxu0 0.0
    %1461 = vmatpush1.msra.mxu0 0.0
    %1462 = vmatprep.subr.mxu0 0.0
    %1463 = vmatpush1.msra.mxu0 0.0
    %1464 = vmatprep.subr.mxu0 0.0
    %1465 = vmatpush1.msra.mxu0 0.0
    %1466 = vmatprep.subr.mxu0 0.0
    %1467 = vmatpush1.msra.mxu0 0.0
    %1468 = vmatprep.subr.mxu0 0.0
    %1469 = vmatpush1.msra.mxu0 0.0
    %1470 = vmatprep.subr.mxu0 0.0
    %1471 = vmatpush1.msra.mxu0 0.0
    %1472 = vmatprep.subr.mxu0 0.0
    %1473 = vmatpush1.msra.mxu0 0.0
    %1474 = vmatprep.subr.mxu0 0.0
    %1475 = vmatpush1.msra.mxu0 0.0
    %1476 = vmatprep.subr.mxu0 0.0
    %1477 = vmatpush1.msra.mxu0 0.0
    %1478 = vmatprep.subr.mxu0 0.0
    %1479 = vmatpush1.msra.mxu0 0.0
    %1480 = vmatprep.subr.mxu0 0.0
    %1481 = vmatpush1.msra.mxu0 0.0
    %1482 = vmatprep.subr.mxu0 0.0
    %1483 = vmatpush1.msra.mxu0 %v542
    %1484 = vmatprep.subr.mxu0 0.0
    %1485 = vmatpush1.msra.mxu0 %v541
    %1486 = vmatprep.subr.mxu0 0.0
    %1487 = vmatpush2.msra.mxu0 0.0
    %1488 = vmatprep.subr.mxu0 0.0
    %1489 = vmatpush2.msra.mxu0 0.0
    %1490 = vmatprep.subr.mxu0 0.0
    %1491 = vmatpush2.msra.mxu0 0.0
    %1492 = vmatprep.subr.mxu0 0.0
    %1493 = vmatpush2.msra.mxu0 0.0
    %1494 = vmatprep.subr.mxu0 0.0
    %1495 = vmatpush2.msra.mxu0 0.0
    %1496 = vmatprep.subr.mxu0 0.0
    %1497 = vmatpush2.msra.mxu0 0.0
    %1498 = vmatprep.subr.mxu0 0.0
    %1499 = vmatpush2.msra.mxu0 0.0
    %1500 = vmatprep.subr.mxu0 0.0
    %1501 = vmatpush2.msra.mxu0 0.0
    %1502 = vmatprep.subr.mxu0 0.0
    %1503 = vmatpush2.msra.mxu0 0.0
    %1504 = vmatprep.subr.mxu0 0.0
    %1505 = vmatpush2.msra.mxu0 0.0
    %1506 = vmatprep.subr.mxu0 0.0
    %1507 = vmatpush2.msra.mxu0 0.0
    %1508 = vmatprep.subr.mxu0 0.0
    %1509 = vmatpush2.msra.mxu0 0.0
    %1510 = vmatprep.subr.mxu0 0.0
    %1511 = vmatpush2.msra.mxu0 0.0
    %1512 = vmatprep.subr.mxu0 0.0
    %1513 = vmatpush2.msra.mxu0 0.0
    %1514 = vmatprep.subr.mxu0 0.0
    %1515 = vmatpush2.msra.mxu0 0.0
    %1516 = vmatprep.subr.mxu0 0.0
    %1517 = vmatpush2.msra.mxu0 0.0
    %1518 = vmatprep.mubr.f32.mxu0 0.0
    %1519 = vmatmul.mubr.f32.gmra.mxu0 %v1449
    %v1520 = vpop.f32.mrf.mxu0
    %v1521 = vadd.f32 %v1440, %v1520
    %v1522 = vpop.f32.mrf.mxu0
    %1523 = vmatprep.mubr.f32.mxu0 0.0
    %1524 = vmatmul.mubr.f32.gmra.mxu0 %v1452
    %v1525 = vpop.f32.mrf.mxu0
    %v1526 = vadd.f32 %v1445, %v1525
    %v1527 = vpop.f32.mrf.mxu0
    %1528 = vdwg.mxu0
    %v1529 = vadd.f32 %v479, %v1521
    %v1530 = vadd.f32 %v480, %v1526
    %v1532 = vlaneseq
    %v1533 = vshrl.u32 %v1532, 7
    %v1534 = vsub.s32 0, %v1533
    %v1535 = vrot.slane %v549, %v1534
    %v1537 = vadd.f32 %v1529, %v1535
    %v1538 = vadd.f32 %v1530, %v1535
    %v1539 = vsel %vm252, %v1537, 0.0
    %1540 = vadd.xlane.f32.xlu0 %v1539
    %v1541 = vpop.xlane.xlu0 %1540
    %v1542 = vsel %vm252, %v1538, 0.0
    %1543 = vadd.xlane.f32.xlu0 %v1542
    %v1544 = vpop.xlane.xlu0 %1543
    %v1545 = vmul.f32 %v1541, %v585
    %v1546 = vmul.f32 %v1544, %v585
    %v1547 = vsub.f32 %v1537, %v1545
    %v1548 = vsub.f32 %v1538, %v1546
    %v1549 = vmul.f32 %v1547, %v1547
    %v1550 = vmul.f32 %v1548, %v1548
    %v1551 = vsel %vm252, %v1549, 0.0
    %1552 = vadd.xlane.f32.xlu0 %v1551
    %v1553 = vpop.xlane.xlu0 %1552
    %v1554 = vsel %vm252, %v1550, 0.0
    %1555 = vadd.xlane.f32.xlu0 %v1554
    %v1556 = vpop.xlane.xlu0 %1555
    %v1557 = vmul.f32 %v1553, %v585
    %v1558 = vmul.f32 %v1556, %v585
    %v1559 = vadd.f32 %v1557, 1e-05
    %v1560 = vadd.f32 %v1558, 1e-05
    %v1561 = vrsqrt.pop %v1559
    %v1562 = vrsqrt.pop %v1560
    %v1563 = vmul.f32 %v1547, %v1561
    %v1564 = vmul.f32 %v1548, %v1562
    %v1566 = vlaneseq
    %v1567 = vshrl.u32 %v1566, 7
    %v1568 = vsub.s32 0, %v1567
    %v1569 = vrot.slane %v529, %v1568
    %v1571 = vmul.f32 %v1563, %v1569
    %v1572 = vmul.f32 %v1564, %v1569
    %v1574 = vlaneseq
    %v1575 = vshrl.u32 %v1574, 7
    %v1576 = vsub.s32 0, %v1575
    %v1577 = vrot.slane %v531, %v1576
    %v1579 = vadd.f32 %v1571, %v1577
    %v1580 = vadd.f32 %v1572, %v1577
    %v1582 = vlaneseq
    %v1583 = vshrl.u32 %v1582, 7
    %v1584 = vsub.s32 0, %v1583
    %v1585 = vrot.slane %v559, %v1584
    %v1588 = vsel %vm252, %v1579, 0
    %v1591 = vsel %vm252, %v1580, 0
    %1593 = vmatprep.subr.mxu0 0.0
    %1594 = vmatpush1.msra.mxu0 0.0
    %1595 = vmatprep.subr.mxu0 0.0
    %1596 = vmatpush1.msra.mxu0 0.0
    %1597 = vmatprep.subr.mxu0 0.0
    %1598 = vmatpush1.msra.mxu0 0.0
    %1599 = vmatprep.subr.mxu0 0.0
    %1600 = vmatpush1.msra.mxu0 0.0
    %1601 = vmatprep.subr.mxu0 0.0
    %1602 = vmatpush1.msra.mxu0 0.0
    %1603 = vmatprep.subr.mxu0 0.0
    %1604 = vmatpush1.msra.mxu0 0.0
    %1605 = vmatprep.subr.mxu0 0.0
    %1606 = vmatpush1.msra.mxu0 0.0
    %1607 = vmatprep.subr.mxu0 0.0
    %1608 = vmatpush1.msra.mxu0 0.0
    %1609 = vmatprep.subr.mxu0 0.0
    %1610 = vmatpush1.msra.mxu0 0.0
    %1611 = vmatprep.subr.mxu0 0.0
    %1612 = vmatpush1.msra.mxu0 0.0
    %1613 = vmatprep.subr.mxu0 0.0
    %1614 = vmatpush1.msra.mxu0 0.0
    %1615 = vmatprep.subr.mxu0 0.0
    %1616 = vmatpush1.msra.mxu0 0.0
    %1617 = vmatprep.subr.mxu0 0.0
    %1618 = vmatpush1.msra.mxu0 %v554
    %1619 = vmatprep.subr.mxu0 0.0
    %1620 = vmatpush1.msra.mxu0 %v553
    %1621 = vmatprep.subr.mxu0 0.0
    %1622 = vmatpush1.msra.mxu0 %v552
    %1623 = vmatprep.subr.mxu0 0.0
    %1624 = vmatpush1.msra.mxu0 %v551
    %1625 = vmatprep.subr.mxu0 0.0
    %1626 = vmatpush2.msra.mxu0 0.0
    %1627 = vmatprep.subr.mxu0 0.0
    %1628 = vmatpush2.msra.mxu0 0.0
    %1629 = vmatprep.subr.mxu0 0.0
    %1630 = vmatpush2.msra.mxu0 0.0
    %1631 = vmatprep.subr.mxu0 0.0
    %1632 = vmatpush2.msra.mxu0 0.0
    %1633 = vmatprep.subr.mxu0 0.0
    %1634 = vmatpush2.msra.mxu0 0.0
    %1635 = vmatprep.subr.mxu0 0.0
    %1636 = vmatpush2.msra.mxu0 0.0
    %1637 = vmatprep.subr.mxu0 0.0
    %1638 = vmatpush2.msra.mxu0 0.0
    %1639 = vmatprep.subr.mxu0 0.0
    %1640 = vmatpush2.msra.mxu0 0.0
    %1641 = vmatprep.subr.mxu0 0.0
    %1642 = vmatpush2.msra.mxu0 0.0
    %1643 = vmatprep.subr.mxu0 0.0
    %1644 = vmatpush2.msra.mxu0 0.0
    %1645 = vmatprep.subr.mxu0 0.0
    %1646 = vmatpush2.msra.mxu0 0.0
    %1647 = vmatprep.subr.mxu0 0.0
    %1648 = vmatpush2.msra.mxu0 0.0
    %1649 = vmatprep.subr.mxu0 0.0
    %1650 = vmatpush2.msra.mxu0 0.0
    %1651 = vmatprep.subr.mxu0 0.0
    %1652 = vmatpush2.msra.mxu0 0.0
    %1653 = vmatprep.subr.mxu0 0.0
    %1654 = vmatpush2.msra.mxu0 0.0
    %1655 = vmatprep.subr.mxu0 0.0
    %1656 = vmatpush2.msra.mxu0 0.0
    %1657 = vmatprep.mubr.f32.mxu0 0.0
    %1658 = vmatmul.mubr.f32.gmra.mxu0 %v1588
    %v1659 = vpop.f32.mrf.mxu0
    %v1660 = vadd.f32 %v1585, %v1659
    %v1661 = vpop.f32.mrf.mxu0
    %1662 = vmatprep.mubr.f32.mxu0 0.0
    %1663 = vmatmul.mubr.f32.gmra.mxu0 %v1591
    %v1664 = vpop.f32.mrf.mxu0
    %v1665 = vadd.f32 %v1585, %v1664
    %v1666 = vpop.f32.mrf.mxu0
    %1667 = vdwg.mxu0
    %v1668 = vmax.f32 %v1660, 0.0
    %v1669 = vmax.f32 %v1665, 0.0
    %vm1670 = vcmask 523264
    %v1672 = vsel %vm1670, %v1668, 0
    %v1675 = vsel %vm1670, %v1669, 0
    %1677 = vmatprep.subr.mxu0 0.0
    %1678 = vmatpush1.msra.mxu0 0.0
    %1679 = vmatprep.subr.mxu0 0.0
    %1680 = vmatpush1.msra.mxu0 0.0
    %1681 = vmatprep.subr.mxu0 0.0
    %1682 = vmatpush1.msra.mxu0 0.0
    %1683 = vmatprep.subr.mxu0 0.0
    %1684 = vmatpush1.msra.mxu0 0.0
    %1685 = vmatprep.subr.mxu0 0.0
    %1686 = vmatpush1.msra.mxu0 0.0
    %1687 = vmatprep.subr.mxu0 0.0
    %1688 = vmatpush1.msra.mxu0 0.0
    %1689 = vmatprep.subr.mxu0 0.0
    %1690 = vmatpush1.msra.mxu0 0.0
    %1691 = vmatprep.subr.mxu0 0.0
    %1692 = vmatpush1.msra.mxu0 0.0
    %1693 = vmatprep.subr.mxu0 0.0
    %1694 = vmatpush1.msra.mxu0 %v568
    %1695 = vmatprep.subr.mxu0 0.0
    %1696 = vmatpush1.msra.mxu0 %v567
    %1697 = vmatprep.subr.mxu0 0.0
    %1698 = vmatpush1.msra.mxu0 %v566
    %1699 = vmatprep.subr.mxu0 0.0
    %1700 = vmatpush1.msra.mxu0 %v565
    %1701 = vmatprep.subr.mxu0 0.0
    %1702 = vmatpush1.msra.mxu0 %v564
    %1703 = vmatprep.subr.mxu0 0.0
    %1704 = vmatpush1.msra.mxu0 %v563
    %1705 = vmatprep.subr.mxu0 0.0
    %1706 = vmatpush1.msra.mxu0 %v562
    %1707 = vmatprep.subr.mxu0 0.0
    %1708 = vmatpush1.msra.mxu0 %v561
    %1709 = vmatprep.subr.mxu0 0.0
    %1710 = vmatpush2.msra.mxu0 0.0
    %1711 = vmatprep.subr.mxu0 0.0
    %1712 = vmatpush2.msra.mxu0 0.0
    %1713 = vmatprep.subr.mxu0 0.0
    %1714 = vmatpush2.msra.mxu0 0.0
    %1715 = vmatprep.subr.mxu0 0.0
    %1716 = vmatpush2.msra.mxu0 0.0
    %1717 = vmatprep.subr.mxu0 0.0
    %1718 = vmatpush2.msra.mxu0 0.0
    %1719 = vmatprep.subr.mxu0 0.0
    %1720 = vmatpush2.msra.mxu0 0.0
    %1721 = vmatprep.subr.mxu0 0.0
    %1722 = vmatpush2.msra.mxu0 0.0
    %1723 = vmatprep.subr.mxu0 0.0
    %1724 = vmatpush2.msra.mxu0 0.0
    %1725 = vmatprep.subr.mxu0 0.0
    %1726 = vmatpush2.msra.mxu0 0.0
    %1727 = vmatprep.subr.mxu0 0.0
    %1728 = vmatpush2.msra.mxu0 0.0
    %1729 = vmatprep.subr.mxu0 0.0
    %1730 = vmatpush2.msra.mxu0 0.0
    %1731 = vmatprep.subr.mxu0 0.0
    %1732 = vmatpush2.msra.mxu0 0.0
    %1733 = vmatprep.subr.mxu0 0.0
    %1734 = vmatpush2.msra.mxu0 0.0
    %1735 = vmatprep.subr.mxu0 0.0
    %1736 = vmatpush2.msra.mxu0 0.0
    %1737 = vmatprep.subr.mxu0 0.0
    %1738 = vmatpush2.msra.mxu0 0.0
    %1739 = vmatprep.subr.mxu0 0.0
    %1740 = vmatpush2.msra.mxu0 0.0
    %1741 = vmatprep.mubr.f32.mxu0 0.0
    %1742 = vmatmul.mubr.f32.gmra.mxu0 %v1672
    %v1743 = vpop.f32.mrf.mxu0
    %v1744 = vadd.f32 0.0, %v1743
    %v1745 = vpop.f32.mrf.mxu0
    %1746 = vmatprep.mubr.f32.mxu0 0.0
    %1747 = vmatmul.mubr.f32.gmra.mxu0 %v1675
    %v1748 = vpop.f32.mrf.mxu0
    %v1749 = vadd.f32 0.0, %v1748
    %v1750 = vpop.f32.mrf.mxu0
    %1751 = vdwg.mxu0
    %v1752 = vadd.f32 %v1537, %v1744
    %v1753 = vadd.f32 %v1538, %v1749
    %v1755 = vlaneseq
    %v1756 = vshrl.u32 %v1755, 7
    %v1757 = vsub.s32 0, %v1756
    %v1758 = vrot.slane %v577, %v1757
    %v1760 = vadd.f32 %v1752, %v1758
    %v1761 = vadd.f32 %v1753, %v1758
    %v1762 = vsel %vm252, %v1760, 0.0
    %1763 = vadd.xlane.f32.xlu0 %v1762
    %v1764 = vpop.xlane.xlu0 %1763
    %v1765 = vsel %vm252, %v1761, 0.0
    %1766 = vadd.xlane.f32.xlu0 %v1765
    %v1767 = vpop.xlane.xlu0 %1766
    %v1768 = vmul.f32 %v1764, %v585
    %v1769 = vmul.f32 %v1767, %v585
    %v1770 = vsub.f32 %v1760, %v1768
    %v1771 = vsub.f32 %v1761, %v1769
    %v1772 = vmul.f32 %v1770, %v1770
    %v1773 = vmul.f32 %v1771, %v1771
    %v1774 = vsel %vm252, %v1772, 0.0
    %1775 = vadd.xlane.f32.xlu0 %v1774
    %v1776 = vpop.xlane.xlu0 %1775
    %v1777 = vsel %vm252, %v1773, 0.0
    %1778 = vadd.xlane.f32.xlu0 %v1777
    %v1779 = vpop.xlane.xlu0 %1778
    %v1780 = vmul.f32 %v1776, %v585
    %v1781 = vmul.f32 %v1779, %v585
    %v1782 = vadd.f32 %v1780, 1e-05
    %v1783 = vadd.f32 %v1781, 1e-05
    %v1784 = vrsqrt.pop %v1782
    %v1785 = vrsqrt.pop %v1783
    %v1786 = vmul.f32 %v1770, %v1784
    %v1787 = vmul.f32 %v1771, %v1785
    %v1789 = vlaneseq
    %v1790 = vshrl.u32 %v1789, 7
    %v1791 = vsub.s32 0, %v1790
    %v1792 = vrot.slane %v526, %v1791
    %v1794 = vmul.f32 %v1786, %v1792
    %v1795 = vmul.f32 %v1787, %v1792
    %v1797 = vlaneseq
    %v1798 = vshrl.u32 %v1797, 7
    %v1799 = vsub.s32 0, %v1798
    %v1800 = vrot.slane %v528, %v1799
    %v1802 = vadd.f32 %v1794, %v1800
    %v1803 = vadd.f32 %v1795, %v1800
    %v1805 = vsel %vm252, %v1802, 0
    %v1808 = vsel %vm252, %v1803, 0
    %1810 = vmatprep.subr.mxu0 0.0
    %1811 = vmatpush1.msra.mxu0 0.0
    %1812 = vmatprep.subr.mxu0 0.0
    %1813 = vmatpush1.msra.mxu0 0.0
    %1814 = vmatprep.subr.mxu0 0.0
    %1815 = vmatpush1.msra.mxu0 0.0
    %1816 = vmatprep.subr.mxu0 0.0
    %1817 = vmatpush1.msra.mxu0 0.0
    %1818 = vmatprep.subr.mxu0 0.0
    %1819 = vmatpush1.msra.mxu0 0.0
    %1820 = vmatprep.subr.mxu0 0.0
    %1821 = vmatpush1.msra.mxu0 0.0
    %1822 = vmatprep.subr.mxu0 0.0
    %1823 = vmatpush1.msra.mxu0 0.0
    %1824 = vmatprep.subr.mxu0 0.0
    %1825 = vmatpush1.msra.mxu0 0.0
    %1826 = vmatprep.subr.mxu0 0.0
    %1827 = vmatpush1.msra.mxu0 0.0
    %1828 = vmatprep.subr.mxu0 0.0
    %1829 = vmatpush1.msra.mxu0 0.0
    %1830 = vmatprep.subr.mxu0 0.0
    %1831 = vmatpush1.msra.mxu0 0.0
    %1832 = vmatprep.subr.mxu0 0.0
    %1833 = vmatpush1.msra.mxu0 0.0
    %1834 = vmatprep.subr.mxu0 0.0
    %1835 = vmatpush1.msra.mxu0 %v540
    %1836 = vmatprep.subr.mxu0 0.0
    %1837 = vmatpush1.msra.mxu0 %v539
    %1838 = vmatprep.subr.mxu0 0.0
    %1839 = vmatpush1.msra.mxu0 %v538
    %1840 = vmatprep.subr.mxu0 0.0
    %1841 = vmatpush1.msra.mxu0 %v537
    %1842 = vmatprep.subr.mxu0 0.0
    %1843 = vmatpush2.msra.mxu0 0.0
    %1844 = vmatprep.subr.mxu0 0.0
    %1845 = vmatpush2.msra.mxu0 0.0
    %1846 = vmatprep.subr.mxu0 0.0
    %1847 = vmatpush2.msra.mxu0 0.0
    %1848 = vmatprep.subr.mxu0 0.0
    %1849 = vmatpush2.msra.mxu0 0.0
    %1850 = vmatprep.subr.mxu0 0.0
    %1851 = vmatpush2.msra.mxu0 0.0
    %1852 = vmatprep.subr.mxu0 0.0
    %1853 = vmatpush2.msra.mxu0 0.0
    %1854 = vmatprep.subr.mxu0 0.0
    %1855 = vmatpush2.msra.mxu0 0.0
    %1856 = vmatprep.subr.mxu0 0.0
    %1857 = vmatpush2.msra.mxu0 0.0
    %1858 = vmatprep.subr.mxu0 0.0
    %1859 = vmatpush2.msra.mxu0 0.0
    %1860 = vmatprep.subr.mxu0 0.0
    %1861 = vmatpush2.msra.mxu0 0.0
    %1862 = vmatprep.subr.mxu0 0.0
    %1863 = vmatpush2.msra.mxu0 0.0
    %1864 = vmatprep.subr.mxu0 0.0
    %1865 = vmatpush2.msra.mxu0 0.0
    %1866 = vmatprep.subr.mxu0 0.0
    %1867 = vmatpush2.msra.mxu0 0.0
    %1868 = vmatprep.subr.mxu0 0.0
    %1869 = vmatpush2.msra.mxu0 0.0
    %1870 = vmatprep.subr.mxu0 0.0
    %1871 = vmatpush2.msra.mxu0 0.0
    %1872 = vmatprep.subr.mxu0 0.0
    %1873 = vmatpush2.msra.mxu0 0.0
    %1874 = vmatprep.mubr.f32.mxu0 0.0
    %1875 = vmatmul.mubr.f32.gmra.mxu0 %v1805
    %v1876 = vpop.f32.mrf.mxu0
    %v1877 = vadd.f32 0.0, %v1876
    %v1878 = vpop.f32.mrf.mxu0
    %1879 = vmatprep.mubr.f32.mxu0 0.0
    %1880 = vmatmul.mubr.f32.gmra.mxu0 %v1808
    %v1881 = vpop.f32.mrf.mxu0
    %v1882 = vadd.f32 0.0, %v1881
    %v1883 = vpop.f32.mrf.mxu0
    %1884 = vdwg.mxu0
    %1886 = vrot.lane.b32.xlu0 %v1877, 96
    %v1887 = vpop.permute.xlu0 %1886
    %v1888 = vsel %vm706, %v1877, 0
    %v1890 = vsel %vm706, %v1887, 0
    %1892 = vmatprep.subr.mxu0 0.0
    %1893 = vmatpush1.xpose.msra.mxu0 0.0
    %1894 = vmatprep.subr.mxu0 0.0
    %1895 = vmatpush1.xpose.msra.mxu0 0.0
    %1896 = vmatprep.subr.mxu0 0.0
    %1897 = vmatpush1.xpose.msra.mxu0 0.0
    %1898 = vmatprep.subr.mxu0 0.0
    %1899 = vmatpush1.xpose.msra.mxu0 0.0
    %1900 = vmatprep.subr.mxu0 0.0
    %1901 = vmatpush1.xpose.msra.mxu0 0.0
    %1902 = vmatprep.subr.mxu0 0.0
    %1903 = vmatpush1.xpose.msra.mxu0 0.0
    %1904 = vmatprep.subr.mxu0 0.0
    %1905 = vmatpush1.xpose.msra.mxu0 0.0
    %1906 = vmatprep.subr.mxu0 0.0
    %1907 = vmatpush1.xpose.msra.mxu0 0.0
    %1908 = vmatprep.subr.mxu0 0.0
    %1909 = vmatpush1.xpose.msra.mxu0 0.0
    %1910 = vmatprep.subr.mxu0 0.0
    %1911 = vmatpush1.xpose.msra.mxu0 0.0
    %1912 = vmatprep.subr.mxu0 0.0
    %1913 = vmatpush1.xpose.msra.mxu0 0.0
    %1914 = vmatprep.subr.mxu0 0.0
    %1915 = vmatpush1.xpose.msra.mxu0 0.0
    %1916 = vmatprep.subr.mxu0 0.0
    %1917 = vmatpush1.xpose.msra.mxu0 0.0
    %1918 = vmatprep.subr.mxu0 0.0
    %1919 = vmatpush1.xpose.msra.mxu0 0.0
    %1920 = vmatprep.subr.mxu0 0.0
    %1921 = vmatpush1.xpose.msra.mxu0 0.0
    %1922 = vmatprep.subr.mxu0 0.0
    %1923 = vmatpush1.xpose.msra.mxu0 %v1890
    %1924 = vmatprep.subr.mxu0 0.0
    %1925 = vmatpush2.xpose.msra.mxu0 0.0
    %1926 = vmatprep.subr.mxu0 0.0
    %1927 = vmatpush2.xpose.msra.mxu0 0.0
    %1928 = vmatprep.subr.mxu0 0.0
    %1929 = vmatpush2.xpose.msra.mxu0 0.0
    %1930 = vmatprep.subr.mxu0 0.0
    %1931 = vmatpush2.xpose.msra.mxu0 0.0
    %1932 = vmatprep.subr.mxu0 0.0
    %1933 = vmatpush2.xpose.msra.mxu0 0.0
    %1934 = vmatprep.subr.mxu0 0.0
    %1935 = vmatpush2.xpose.msra.mxu0 0.0
    %1936 = vmatprep.subr.mxu0 0.0
    %1937 = vmatpush2.xpose.msra.mxu0 0.0
    %1938 = vmatprep.subr.mxu0 0.0
    %1939 = vmatpush2.xpose.msra.mxu0 0.0
    %1940 = vmatprep.subr.mxu0 0.0
    %1941 = vmatpush2.xpose.msra.mxu0 0.0
    %1942 = vmatprep.subr.mxu0 0.0
    %1943 = vmatpush2.xpose.msra.mxu0 0.0
    %1944 = vmatprep.subr.mxu0 0.0
    %1945 = vmatpush2.xpose.msra.mxu0 0.0
    %1946 = vmatprep.subr.mxu0 0.0
    %1947 = vmatpush2.xpose.msra.mxu0 0.0
    %1948 = vmatprep.subr.mxu0 0.0
    %1949 = vmatpush2.xpose.msra.mxu0 0.0
    %1950 = vmatprep.subr.mxu0 0.0
    %1951 = vmatpush2.xpose.msra.mxu0 0.0
    %1952 = vmatprep.subr.mxu0 0.0
    %1953 = vmatpush2.xpose.msra.mxu0 0.0
    %1954 = vmatprep.subr.mxu0 0.0
    %1955 = vmatpush2.xpose.msra.mxu0 0.0
    %1956 = vmatprep.mubr.f32.mxu0 0.0
    %1957 = vmatmul.mubr.f32.gmra.mxu0 %v1888
    %v1958 = vpop.f32.mrf.mxu0
    %v1959 = vadd.f32 0.0, %v1958
    %v1960 = vpop.f32.mrf.mxu0
    %1961 = vdwg.mxu0
    %1963 = vrot.lane.b32.xlu0 %v1882, 96
    %v1964 = vpop.permute.xlu0 %1963
    %v1965 = vsel %vm706, %v1882, 0
    %v1967 = vsel %vm706, %v1964, 0
    %1969 = vmatprep.subr.mxu0 0.0
    %1970 = vmatpush1.xpose.msra.mxu0 0.0
    %1971 = vmatprep.subr.mxu0 0.0
    %1972 = vmatpush1.xpose.msra.mxu0 0.0
    %1973 = vmatprep.subr.mxu0 0.0
    %1974 = vmatpush1.xpose.msra.mxu0 0.0
    %1975 = vmatprep.subr.mxu0 0.0
    %1976 = vmatpush1.xpose.msra.mxu0 0.0
    %1977 = vmatprep.subr.mxu0 0.0
    %1978 = vmatpush1.xpose.msra.mxu0 0.0
    %1979 = vmatprep.subr.mxu0 0.0
    %1980 = vmatpush1.xpose.msra.mxu0 0.0
    %1981 = vmatprep.subr.mxu0 0.0
    %1982 = vmatpush1.xpose.msra.mxu0 0.0
    %1983 = vmatprep.subr.mxu0 0.0
    %1984 = vmatpush1.xpose.msra.mxu0 0.0
    %1985 = vmatprep.subr.mxu0 0.0
    %1986 = vmatpush1.xpose.msra.mxu0 0.0
    %1987 = vmatprep.subr.mxu0 0.0
    %1988 = vmatpush1.xpose.msra.mxu0 0.0
    %1989 = vmatprep.subr.mxu0 0.0
    %1990 = vmatpush1.xpose.msra.mxu0 0.0
    %1991 = vmatprep.subr.mxu0 0.0
    %1992 = vmatpush1.xpose.msra.mxu0 0.0
    %1993 = vmatprep.subr.mxu0 0.0
    %1994 = vmatpush1.xpose.msra.mxu0 0.0
    %1995 = vmatprep.subr.mxu0 0.0
    %1996 = vmatpush1.xpose.msra.mxu0 0.0
    %1997 = vmatprep.subr.mxu0 0.0
    %1998 = vmatpush1.xpose.msra.mxu0 0.0
    %1999 = vmatprep.subr.mxu0 0.0
    %2000 = vmatpush1.xpose.msra.mxu0 %v1967
    %2001 = vmatprep.subr.mxu0 0.0
    %2002 = vmatpush2.xpose.msra.mxu0 0.0
    %2003 = vmatprep.subr.mxu0 0.0
    %2004 = vmatpush2.xpose.msra.mxu0 0.0
    %2005 = vmatprep.subr.mxu0 0.0
    %2006 = vmatpush2.xpose.msra.mxu0 0.0
    %2007 = vmatprep.subr.mxu0 0.0
    %2008 = vmatpush2.xpose.msra.mxu0 0.0
    %2009 = vmatprep.subr.mxu0 0.0
    %2010 = vmatpush2.xpose.msra.mxu0 0.0
    %2011 = vmatprep.subr.mxu0 0.0
    %2012 = vmatpush2.xpose.msra.mxu0 0.0
    %2013 = vmatprep.subr.mxu0 0.0
    %2014 = vmatpush2.xpose.msra.mxu0 0.0
    %2015 = vmatprep.subr.mxu0 0.0
    %2016 = vmatpush2.xpose.msra.mxu0 0.0
    %2017 = vmatprep.subr.mxu0 0.0
    %2018 = vmatpush2.xpose.msra.mxu0 0.0
    %2019 = vmatprep.subr.mxu0 0.0
    %2020 = vmatpush2.xpose.msra.mxu0 0.0
    %2021 = vmatprep.subr.mxu0 0.0
    %2022 = vmatpush2.xpose.msra.mxu0 0.0
    %2023 = vmatprep.subr.mxu0 0.0
    %2024 = vmatpush2.xpose.msra.mxu0 0.0
    %2025 = vmatprep.subr.mxu0 0.0
    %2026 = vmatpush2.xpose.msra.mxu0 0.0
    %2027 = vmatprep.subr.mxu0 0.0
    %2028 = vmatpush2.xpose.msra.mxu0 0.0
    %2029 = vmatprep.subr.mxu0 0.0
    %2030 = vmatpush2.xpose.msra.mxu0 0.0
    %2031 = vmatprep.subr.mxu0 0.0
    %2032 = vmatpush2.xpose.msra.mxu0 0.0
    %2033 = vmatprep.mubr.f32.mxu0 0.0
    %2034 = vmatmul.mubr.f32.gmra.mxu0 %v1965
    %v2035 = vpop.f32.mrf.mxu0
    %v2036 = vadd.f32 0.0, %v2035
    %v2037 = vpop.f32.mrf.mxu0
    %2038 = vdwg.mxu0
    %v2039 = vmul.f32 %v1959, 0.25
    %v2040 = vmul.f32 %v2036, 0.25
    %v2041 = vsel %vm860, %v2039, -inf
    %2042 = vmax.xlane.f32.xlu0 %v2041
    %v2043 = vpop.xlane.xlu0 %2042
    %v2044 = vsel %vm860, %v2040, -inf
    %2045 = vmax.xlane.f32.xlu0 %v2044
    %v2046 = vpop.xlane.xlu0 %2045
    %v2047 = vsub.f32 %v2039, %v2043
    %v2048 = vsub.f32 %v2040, %v2046
    %v2049 = vmul.f32 %v2047, 1.442695
    %v2050 = vpow.pop %v2049
    %v2051 = vmul.f32 %v2048, 1.442695
    %v2052 = vpow.pop %v2051
    %v2053 = vsel %vm860, %v2050, 0.0
    %2054 = vadd.xlane.f32.xlu0 %v2053
    %v2055 = vpop.xlane.xlu0 %2054
    %v2056 = vsel %vm860, %v2052, 0.0
    %2057 = vadd.xlane.f32.xlu0 %v2056
    %v2058 = vpop.xlane.xlu0 %2057
    %v2059 = vrcp.pop %v2055
    %v2060 = vrcp.pop %v2058
    %v2061 = vmul.f32 %v2050, %v2059
    %v2062 = vmul.f32 %v2052, %v2060
    %2063 = vrot.lane.b32.xlu0 %v1877, 64
    %v2064 = vpop.permute.xlu0 %2063
    %v2067 = vsel %vm860, %v2061, 0
    %2069 = vmatprep.subr.mxu0 0.0
    %2070 = vmatpush1.msra.mxu0 0.0
    %2071 = vmatprep.subr.mxu0 0.0
    %2072 = vmatpush1.msra.mxu0 0.0
    %2073 = vmatprep.subr.mxu0 0.0
    %2074 = vmatpush1.msra.mxu0 0.0
    %2075 = vmatprep.subr.mxu0 0.0
    %2076 = vmatpush1.msra.mxu0 0.0
    %2077 = vmatprep.subr.mxu0 0.0
    %2078 = vmatpush1.msra.mxu0 0.0
    %2079 = vmatprep.subr.mxu0 0.0
    %2080 = vmatpush1.msra.mxu0 0.0
    %2081 = vmatprep.subr.mxu0 0.0
    %2082 = vmatpush1.msra.mxu0 0.0
    %2083 = vmatprep.subr.mxu0 0.0
    %2084 = vmatpush1.msra.mxu0 0.0
    %2085 = vmatprep.subr.mxu0 0.0
    %2086 = vmatpush1.msra.mxu0 0.0
    %2087 = vmatprep.subr.mxu0 0.0
    %2088 = vmatpush1.msra.mxu0 0.0
    %2089 = vmatprep.subr.mxu0 0.0
    %2090 = vmatpush1.msra.mxu0 0.0
    %2091 = vmatprep.subr.mxu0 0.0
    %2092 = vmatpush1.msra.mxu0 0.0
    %2093 = vmatprep.subr.mxu0 0.0
    %2094 = vmatpush1.msra.mxu0 0.0
    %2095 = vmatprep.subr.mxu0 0.0
    %2096 = vmatpush1.msra.mxu0 0.0
    %2097 = vmatprep.subr.mxu0 0.0
    %2098 = vmatpush1.msra.mxu0 0.0
    %2099 = vmatprep.subr.mxu0 0.0
    %2100 = vmatpush1.msra.mxu0 %v2064
    %2101 = vmatprep.subr.mxu0 0.0
    %2102 = vmatpush2.msra.mxu0 0.0
    %2103 = vmatprep.subr.mxu0 0.0
    %2104 = vmatpush2.msra.mxu0 0.0
    %2105 = vmatprep.subr.mxu0 0.0
    %2106 = vmatpush2.msra.mxu0 0.0
    %2107 = vmatprep.subr.mxu0 0.0
    %2108 = vmatpush2.msra.mxu0 0.0
    %2109 = vmatprep.subr.mxu0 0.0
    %2110 = vmatpush2.msra.mxu0 0.0
    %2111 = vmatprep.subr.mxu0 0.0
    %2112 = vmatpush2.msra.mxu0 0.0
    %2113 = vmatprep.subr.mxu0 0.0
    %2114 = vmatpush2.msra.mxu0 0.0
    %2115 = vmatprep.subr.mxu0 0.0
    %2116 = vmatpush2.msra.mxu0 0.0
    %2117 = vmatprep.subr.mxu0 0.0
    %2118 = vmatpush2.msra.mxu0 0.0
    %2119 = vmatprep.subr.mxu0 0.0
    %2120 = vmatpush2.msra.mxu0 0.0
    %2121 = vmatprep.subr.mxu0 0.0
    %2122 = vmatpush2.msra.mxu0 0.0
    %2123 = vmatprep.subr.mxu0 0.0
    %2124 = vmatpush2.msra.mxu0 0.0
    %2125 = vmatprep.subr.mxu0 0.0
    %2126 = vmatpush2.msra.mxu0 0.0
    %2127 = vmatprep.subr.mxu0 0.0
    %2128 = vmatpush2.msra.mxu0 0.0
    %2129 = vmatprep.subr.mxu0 0.0
    %2130 = vmatpush2.msra.mxu0 0.0
    %2131 = vmatprep.subr.mxu0 0.0
    %2132 = vmatpush2.msra.mxu0 0.0
    %2133 = vmatprep.mubr.f32.mxu0 0.0
    %2134 = vmatmul.mubr.f32.gmra.mxu0 %v2067
    %v2135 = vpop.f32.mrf.mxu0
    %v2136 = vadd.f32 0.0, %v2135
    %v2137 = vpop.f32.mrf.mxu0
    %2138 = vdwg.mxu0
    %2139 = vrot.lane.b32.xlu0 %v1882, 64
    %v2140 = vpop.permute.xlu0 %2139
    %v2143 = vsel %vm860, %v2062, 0
    %2145 = vmatprep.subr.mxu0 0.0
    %2146 = vmatpush1.msra.mxu0 0.0
    %2147 = vmatprep.subr.mxu0 0.0
    %2148 = vmatpush1.msra.mxu0 0.0
    %2149 = vmatprep.subr.mxu0 0.0
    %2150 = vmatpush1.msra.mxu0 0.0
    %2151 = vmatprep.subr.mxu0 0.0
    %2152 = vmatpush1.msra.mxu0 0.0
    %2153 = vmatprep.subr.mxu0 0.0
    %2154 = vmatpush1.msra.mxu0 0.0
    %2155 = vmatprep.subr.mxu0 0.0
    %2156 = vmatpush1.msra.mxu0 0.0
    %2157 = vmatprep.subr.mxu0 0.0
    %2158 = vmatpush1.msra.mxu0 0.0
    %2159 = vmatprep.subr.mxu0 0.0
    %2160 = vmatpush1.msra.mxu0 0.0
    %2161 = vmatprep.subr.mxu0 0.0
    %2162 = vmatpush1.msra.mxu0 0.0
    %2163 = vmatprep.subr.mxu0 0.0
    %2164 = vmatpush1.msra.mxu0 0.0
    %2165 = vmatprep.subr.mxu0 0.0
    %2166 = vmatpush1.msra.mxu0 0.0
    %2167 = vmatprep.subr.mxu0 0.0
    %2168 = vmatpush1.msra.mxu0 0.0
    %2169 = vmatprep.subr.mxu0 0.0
    %2170 = vmatpush1.msra.mxu0 0.0
    %2171 = vmatprep.subr.mxu0 0.0
    %2172 = vmatpush1.msra.mxu0 0.0
    %2173 = vmatprep.subr.mxu0 0.0
    %2174 = vmatpush1.msra.mxu0 0.0
    %2175 = vmatprep.subr.mxu0 0.0
    %2176 = vmatpush1.msra.mxu0 %v2140
    %2177 = vmatprep.subr.mxu0 0.0
    %2178 = vmatpush2.msra.mxu0 0.0
    %2179 = vmatprep.subr.mxu0 0.0
    %2180 = vmatpush2.msra.mxu0 0.0
    %2181 = vmatprep.subr.mxu0 0.0
    %2182 = vmatpush2.msra.mxu0 0.0
    %2183 = vmatprep.subr.mxu0 0.0
    %2184 = vmatpush2.msra.mxu0 0.0
    %2185 = vmatprep.subr.mxu0 0.0
    %2186 = vmatpush2.msra.mxu0 0.0
    %2187 = vmatprep.subr.mxu0 0.0
    %2188 = vmatpush2.msra.mxu0 0.0
    %2189 = vmatprep.subr.mxu0 0.0
    %2190 = vmatpush2.msra.mxu0 0.0
    %2191 = vmatprep.subr.mxu0 0.0
    %2192 = vmatpush2.msra.mxu0 0.0
    %2193 = vmatprep.subr.mxu0 0.0
    %2194 = vmatpush2.msra.mxu0 0.0
    %2195 = vmatprep.subr.mxu0 0.0
    %2196 = vmatpush2.msra.mxu0 0.0
    %2197 = vmatprep.subr.mxu0 0.0
    %2198 = vmatpush2.msra.mxu0 0.0
    %2199 = vmatprep.subr.mxu0 0.0
    %2200 = vmatpush2.msra.mxu0 0.0
    %2201 = vmatprep.subr.mxu0 0.0
    %2202 = vmatpush2.msra.mxu0 0.0
    %2203 = vmatprep.subr.mxu0 0.0
    %2204 = vmatpush2.msra.mxu0 0.0
    %2205 = vmatprep.subr.mxu0 0.0
    %2206 = vmatpush2.msra.mxu0 0.0
    %2207 = vmatprep.subr.mxu0 0.0
    %2208 = vmatpush2.msra.mxu0 0.0
    %2209 = vmatprep.mubr.f32.mxu0 0.0
    %2210 = vmatmul.mubr.f32.gmra.mxu0 %v2143
    %v2211 = vpop.f32.mrf.mxu0
    %v2212 = vadd.f32 0.0, %v2211
    %v2213 = vpop.f32.mrf.mxu0
    %2214 = vdwg.mxu0
    %2215 = vrot.lane.b32.xlu0 %v1877, 112
    %v2216 = vpop.permute.xlu0 %2215
    %2217 = vrot.lane.b32.xlu0 %v1877, 80
    %v2218 = vpop.permute.xlu0 %2217
    %v2219 = vsel %vm706, %v2216, 0
    %v2221 = vsel %vm706, %v2218, 0
    %2223 = vmatprep.subr.mxu0 0.0
    %2224 = vmatpush1.xpose.msra.mxu0 0.0
    %2225 = vmatprep.subr.mxu0 0.0
    %2226 = vmatpush1.xpose.msra.mxu0 0.0
    %2227 = vmatprep.subr.mxu0 0.0
    %2228 = vmatpush1.xpose.msra.mxu0 0.0
    %2229 = vmatprep.subr.mxu0 0.0
    %2230 = vmatpush1.xpose.msra.mxu0 0.0
    %2231 = vmatprep.subr.mxu0 0.0
    %2232 = vmatpush1.xpose.msra.mxu0 0.0
    %2233 = vmatprep.subr.mxu0 0.0
    %2234 = vmatpush1.xpose.msra.mxu0 0.0
    %2235 = vmatprep.subr.mxu0 0.0
    %2236 = vmatpush1.xpose.msra.mxu0 0.0
    %2237 = vmatprep.subr.mxu0 0.0
    %2238 = vmatpush1.xpose.msra.mxu0 0.0
    %2239 = vmatprep.subr.mxu0 0.0
    %2240 = vmatpush1.xpose.msra.mxu0 0.0
    %2241 = vmatprep.subr.mxu0 0.0
    %2242 = vmatpush1.xpose.msra.mxu0 0.0
    %2243 = vmatprep.subr.mxu0 0.0
    %2244 = vmatpush1.xpose.msra.mxu0 0.0
    %2245 = vmatprep.subr.mxu0 0.0
    %2246 = vmatpush1.xpose.msra.mxu0 0.0
    %2247 = vmatprep.subr.mxu0 0.0
    %2248 = vmatpush1.xpose.msra.mxu0 0.0
    %2249 = vmatprep.subr.mxu0 0.0
    %2250 = vmatpush1.xpose.msra.mxu0 0.0
    %2251 = vmatprep.subr.mxu0 0.0
    %2252 = vmatpush1.xpose.msra.mxu0 0.0
    %2253 = vmatprep.subr.mxu0 0.0
    %2254 = vmatpush1.xpose.msra.mxu0 %v2221
    %2255 = vmatprep.subr.mxu0 0.0
    %2256 = vmatpush2.xpose.msra.mxu0 0.0
    %2257 = vmatprep.subr.mxu0 0.0
    %2258 = vmatpush2.xpose.msra.mxu0 0.0
    %2259 = vmatprep.subr.mxu0 0.0
    %2260 = vmatpush2.xpose.msra.mxu0 0.0
    %2261 = vmatprep.subr.mxu0 0.0
    %2262 = vmatpush2.xpose.msra.mxu0 0.0
    %2263 = vmatprep.subr.mxu0 0.0
    %2264 = vmatpush2.xpose.msra.mxu0 0.0
    %2265 = vmatprep.subr.mxu0 0.0
    %2266 = vmatpush2.xpose.msra.mxu0 0.0
    %2267 = vmatprep.subr.mxu0 0.0
    %2268 = vmatpush2.xpose.msra.mxu0 0.0
    %2269 = vmatprep.subr.mxu0 0.0
    %2270 = vmatpush2.xpose.msra.mxu0 0.0
    %2271 = vmatprep.subr.mxu0 0.0
    %2272 = vmatpush2.xpose.msra.mxu0 0.0
    %2273 = vmatprep.subr.mxu0 0.0
    %2274 = vmatpush2.xpose.msra.mxu0 0.0
    %2275 = vmatprep.subr.mxu0 0.0
    %2276 = vmatpush2.xpose.msra.mxu0 0.0
    %2277 = vmatprep.subr.mxu0 0.0
    %2278 = vmatpush2.xpose.msra.mxu0 0.0
    %2279 = vmatprep.subr.mxu0 0.0
    %2280 = vmatpush2.xpose.msra.mxu0 0.0
    %2281 = vmatprep.subr.mxu0 0.0
    %2282 = vmatpush2.xpose.msra.mxu0 0.0
    %2283 = vmatprep.subr.mxu0 0.0
    %2284 = vmatpush2.xpose.msra.mxu0 0.0
    %2285 = vmatprep.subr.mxu0 0.0
    %2286 = vmatpush2.xpose.msra.mxu0 0.0
    %2287 = vmatprep.mubr.f32.mxu0 0.0
    %2288 = vmatmul.mubr.f32.gmra.mxu0 %v2219
    %v2289 = vpop.f32.mrf.mxu0
    %v2290 = vadd.f32 0.0, %v2289
    %v2291 = vpop.f32.mrf.mxu0
    %2292 = vdwg.mxu0
    %2293 = vrot.lane.b32.xlu0 %v1882, 112
    %v2294 = vpop.permute.xlu0 %2293
    %2295 = vrot.lane.b32.xlu0 %v1882, 80
    %v2296 = vpop.permute.xlu0 %2295
    %v2297 = vsel %vm706, %v2294, 0
    %v2299 = vsel %vm706, %v2296, 0
    %2301 = vmatprep.subr.mxu0 0.0
    %2302 = vmatpush1.xpose.msra.mxu0 0.0
    %2303 = vmatprep.subr.mxu0 0.0
    %2304 = vmatpush1.xpose.msra.mxu0 0.0
    %2305 = vmatprep.subr.mxu0 0.0
    %2306 = vmatpush1.xpose.msra.mxu0 0.0
    %2307 = vmatprep.subr.mxu0 0.0
    %2308 = vmatpush1.xpose.msra.mxu0 0.0
    %2309 = vmatprep.subr.mxu0 0.0
    %2310 = vmatpush1.xpose.msra.mxu0 0.0
    %2311 = vmatprep.subr.mxu0 0.0
    %2312 = vmatpush1.xpose.msra.mxu0 0.0
    %2313 = vmatprep.subr.mxu0 0.0
    %2314 = vmatpush1.xpose.msra.mxu0 0.0
    %2315 = vmatprep.subr.mxu0 0.0
    %2316 = vmatpush1.xpose.msra.mxu0 0.0
    %2317 = vmatprep.subr.mxu0 0.0
    %2318 = vmatpush1.xpose.msra.mxu0 0.0
    %2319 = vmatprep.subr.mxu0 0.0
    %2320 = vmatpush1.xpose.msra.mxu0 0.0
    %2321 = vmatprep.subr.mxu0 0.0
    %2322 = vmatpush1.xpose.msra.mxu0 0.0
    %2323 = vmatprep.subr.mxu0 0.0
    %2324 = vmatpush1.xpose.msra.mxu0 0.0
    %2325 = vmatprep.subr.mxu0 0.0
    %2326 = vmatpush1.xpose.msra.mxu0 0.0
    %2327 = vmatprep.subr.mxu0 0.0
    %2328 = vmatpush1.xpose.msra.mxu0 0.0
    %2329 = vmatprep.subr.mxu0 0.0
    %2330 = vmatpush1.xpose.msra.mxu0 0.0
    %2331 = vmatprep.subr.mxu0 0.0
    %2332 = vmatpush1.xpose.msra.mxu0 %v2299
    %2333 = vmatprep.subr.mxu0 0.0
    %2334 = vmatpush2.xpose.msra.mxu0 0.0
    %2335 = vmatprep.subr.mxu0 0.0
    %2336 = vmatpush2.xpose.msra.mxu0 0.0
    %2337 = vmatprep.subr.mxu0 0.0
    %2338 = vmatpush2.xpose.msra.mxu0 0.0
    %2339 = vmatprep.subr.mxu0 0.0
    %2340 = vmatpush2.xpose.msra.mxu0 0.0
    %2341 = vmatprep.subr.mxu0 0.0
    %2342 = vmatpush2.xpose.msra.mxu0 0.0
    %2343 = vmatprep.subr.mxu0 0.0
    %2344 = vmatpush2.xpose.msra.mxu0 0.0
    %2345 = vmatprep.subr.mxu0 0.0
    %2346 = vmatpush2.xpose.msra.mxu0 0.0
    %2347 = vmatprep.subr.mxu0 0.0
    %2348 = vmatpush2.xpose.msra.mxu0 0.0
    %2349 = vmatprep.subr.mxu0 0.0
    %2350 = vmatpush2.xpose.msra.mxu0 0.0
    %2351 = vmatprep.subr.mxu0 0.0
    %2352 = vmatpush2.xpose.msra.mxu0 0.0
    %2353 = vmatprep.subr.mxu0 0.0
    %2354 = vmatpush2.xpose.msra.mxu0 0.0
    %2355 = vmatprep.subr.mxu0 0.0
    %2356 = vmatpush2.xpose.msra.mxu0 0.0
    %2357 = vmatprep.subr.mxu0 0.0
    %2358 = vmatpush2.xpose.msra.mxu0 0.0
    %2359 = vmatprep.subr.mxu0 0.0
    %2360 = vmatpush2.xpose.msra.mxu0 0.0
    %2361 = vmatprep.subr.mxu0 0.0
    %2362 = vmatpush2.xpose.msra.mxu0 0.0
    %2363 = vmatprep.subr.mxu0 0.0
    %2364 = vmatpush2.xpose.msra.mxu0 0.0
    %2365 = vmatprep.mubr.f32.mxu0 0.0
    %2366 = vmatmul.mubr.f32.gmra.mxu0 %v2297
    %v2367 = vpop.f32.mrf.mxu0
    %v2368 = vadd.f32 0.0, %v2367
    %v2369 = vpop.f32.mrf.mxu0
    %2370 = vdwg.mxu0
    %v2371 = vmul.f32 %v2290, 0.25
    %v2372 = vmul.f32 %v2368, 0.25
    %v2373 = vsel %vm860, %v2371, -inf
    %2374 = vmax.xlane.f32.xlu0 %v2373
    %v2375 = vpop.xlane.xlu0 %2374
    %v2376 = vsel %vm860, %v2372, -inf
    %2377 = vmax.xlane.f32.xlu0 %v2376
    %v2378 = vpop.xlane.xlu0 %2377
    %v2379 = vsub.f32 %v2371, %v2375
    %v2380 = vsub.f32 %v2372, %v2378
    %v2381 = vmul.f32 %v2379, 1.442695
    %v2382 = vpow.pop %v2381
    %v2383 = vmul.f32 %v2380, 1.442695
    %v2384 = vpow.pop %v2383
    %v2385 = vsel %vm860, %v2382, 0.0
    %2386 = vadd.xlane.f32.xlu0 %v2385
    %v2387 = vpop.xlane.xlu0 %2386
    %v2388 = vsel %vm860, %v2384, 0.0
    %2389 = vadd.xlane.f32.xlu0 %v2388
    %v2390 = vpop.xlane.xlu0 %2389
    %v2391 = vrcp.pop %v2387
    %v2392 = vrcp.pop %v2390
    %v2393 = vmul.f32 %v2382, %v2391
    %v2394 = vmul.f32 %v2384, %v2392
    %2395 = vrot.lane.b32.xlu0 %v1877, 48
    %v2396 = vpop.permute.xlu0 %2395
    %v2399 = vsel %vm860, %v2393, 0
    %2401 = vmatprep.subr.mxu0 0.0
    %2402 = vmatpush1.msra.mxu0 0.0
    %2403 = vmatprep.subr.mxu0 0.0
    %2404 = vmatpush1.msra.mxu0 0.0
    %2405 = vmatprep.subr.mxu0 0.0
    %2406 = vmatpush1.msra.mxu0 0.0
    %2407 = vmatprep.subr.mxu0 0.0
    %2408 = vmatpush1.msra.mxu0 0.0
    %2409 = vmatprep.subr.mxu0 0.0
    %2410 = vmatpush1.msra.mxu0 0.0
    %2411 = vmatprep.subr.mxu0 0.0
    %2412 = vmatpush1.msra.mxu0 0.0
    %2413 = vmatprep.subr.mxu0 0.0
    %2414 = vmatpush1.msra.mxu0 0.0
    %2415 = vmatprep.subr.mxu0 0.0
    %2416 = vmatpush1.msra.mxu0 0.0
    %2417 = vmatprep.subr.mxu0 0.0
    %2418 = vmatpush1.msra.mxu0 0.0
    %2419 = vmatprep.subr.mxu0 0.0
    %2420 = vmatpush1.msra.mxu0 0.0
    %2421 = vmatprep.subr.mxu0 0.0
    %2422 = vmatpush1.msra.mxu0 0.0
    %2423 = vmatprep.subr.mxu0 0.0
    %2424 = vmatpush1.msra.mxu0 0.0
    %2425 = vmatprep.subr.mxu0 0.0
    %2426 = vmatpush1.msra.mxu0 0.0
    %2427 = vmatprep.subr.mxu0 0.0
    %2428 = vmatpush1.msra.mxu0 0.0
    %2429 = vmatprep.subr.mxu0 0.0
    %2430 = vmatpush1.msra.mxu0 0.0
    %2431 = vmatprep.subr.mxu0 0.0
    %2432 = vmatpush1.msra.mxu0 %v2396
    %2433 = vmatprep.subr.mxu0 0.0
    %2434 = vmatpush2.msra.mxu0 0.0
    %2435 = vmatprep.subr.mxu0 0.0
    %2436 = vmatpush2.msra.mxu0 0.0
    %2437 = vmatprep.subr.mxu0 0.0
    %2438 = vmatpush2.msra.mxu0 0.0
    %2439 = vmatprep.subr.mxu0 0.0
    %2440 = vmatpush2.msra.mxu0 0.0
    %2441 = vmatprep.subr.mxu0 0.0
    %2442 = vmatpush2.msra.mxu0 0.0
    %2443 = vmatprep.subr.mxu0 0.0
    %2444 = vmatpush2.msra.mxu0 0.0
    %2445 = vmatprep.subr.mxu0 0.0
    %2446 = vmatpush2.msra.mxu0 0.0
    %2447 = vmatprep.subr.mxu0 0.0
    %2448 = vmatpush2.msra.mxu0 0.0
    %2449 = vmatprep.subr.mxu0 0.0
    %2450 = vmatpush2.msra.mxu0 0.0
    %2451 = vmatprep.subr.mxu0 0.0
    %2452 = vmatpush2.msra.mxu0 0.0
    %2453 = vmatprep.subr.mxu0 0.0
    %2454 = vmatpush2.msra.mxu0 0.0
    %2455 = vmatprep.subr.mxu0 0.0
    %2456 = vmatpush2.msra.mxu0 0.0
    %2457 = vmatprep.subr.mxu0 0.0
    %2458 = vmatpush2.msra.mxu0 0.0
    %2459 = vmatprep.subr.mxu0 0.0
    %2460 = vmatpush2.msra.mxu0 0.0
    %2461 = vmatprep.subr.mxu0 0.0
    %2462 = vmatpush2.msra.mxu0 0.0
    %2463 = vmatprep.subr.mxu0 0.0
    %2464 = vmatpush2.msra.mxu0 0.0
    %2465 = vmatprep.mubr.f32.mxu0 0.0
    %2466 = vmatmul.mubr.f32.gmra.mxu0 %v2399
    %v2467 = vpop.f32.mrf.mxu0
    %v2468 = vadd.f32 0.0, %v2467
    %v2469 = vpop.f32.mrf.mxu0
    %2470 = vdwg.mxu0
    %2471 = vrot.lane.b32.xlu0 %v1882, 48
    %v2472 = vpop.permute.xlu0 %2471
    %v2475 = vsel %vm860, %v2394, 0
    %2477 = vmatprep.subr.mxu0 0.0
    %2478 = vmatpush1.msra.mxu0 0.0
    %2479 = vmatprep.subr.mxu0 0.0
    %2480 = vmatpush1.msra.mxu0 0.0
    %2481 = vmatprep.subr.mxu0 0.0
    %2482 = vmatpush1.msra.mxu0 0.0
    %2483 = vmatprep.subr.mxu0 0.0
    %2484 = vmatpush1.msra.mxu0 0.0
    %2485 = vmatprep.subr.mxu0 0.0
    %2486 = vmatpush1.msra.mxu0 0.0
    %2487 = vmatprep.subr.mxu0 0.0
    %2488 = vmatpush1.msra.mxu0 0.0
    %2489 = vmatprep.subr.mxu0 0.0
    %2490 = vmatpush1.msra.mxu0 0.0
    %2491 = vmatprep.subr.mxu0 0.0
    %2492 = vmatpush1.msra.mxu0 0.0
    %2493 = vmatprep.subr.mxu0 0.0
    %2494 = vmatpush1.msra.mxu0 0.0
    %2495 = vmatprep.subr.mxu0 0.0
    %2496 = vmatpush1.msra.mxu0 0.0
    %2497 = vmatprep.subr.mxu0 0.0
    %2498 = vmatpush1.msra.mxu0 0.0
    %2499 = vmatprep.subr.mxu0 0.0
    %2500 = vmatpush1.msra.mxu0 0.0
    %2501 = vmatprep.subr.mxu0 0.0
    %2502 = vmatpush1.msra.mxu0 0.0
    %2503 = vmatprep.subr.mxu0 0.0
    %2504 = vmatpush1.msra.mxu0 0.0
    %2505 = vmatprep.subr.mxu0 0.0
    %2506 = vmatpush1.msra.mxu0 0.0
    %2507 = vmatprep.subr.mxu0 0.0
    %2508 = vmatpush1.msra.mxu0 %v2472
    %2509 = vmatprep.subr.mxu0 0.0
    %2510 = vmatpush2.msra.mxu0 0.0
    %2511 = vmatprep.subr.mxu0 0.0
    %2512 = vmatpush2.msra.mxu0 0.0
    %2513 = vmatprep.subr.mxu0 0.0
    %2514 = vmatpush2.msra.mxu0 0.0
    %2515 = vmatprep.subr.mxu0 0.0
    %2516 = vmatpush2.msra.mxu0 0.0
    %2517 = vmatprep.subr.mxu0 0.0
    %2518 = vmatpush2.msra.mxu0 0.0
    %2519 = vmatprep.subr.mxu0 0.0
    %2520 = vmatpush2.msra.mxu0 0.0
    %2521 = vmatprep.subr.mxu0 0.0
    %2522 = vmatpush2.msra.mxu0 0.0
    %2523 = vmatprep.subr.mxu0 0.0
    %2524 = vmatpush2.msra.mxu0 0.0
    %2525 = vmatprep.subr.mxu0 0.0
    %2526 = vmatpush2.msra.mxu0 0.0
    %2527 = vmatprep.subr.mxu0 0.0
    %2528 = vmatpush2.msra.mxu0 0.0
    %2529 = vmatprep.subr.mxu0 0.0
    %2530 = vmatpush2.msra.mxu0 0.0
    %2531 = vmatprep.subr.mxu0 0.0
    %2532 = vmatpush2.msra.mxu0 0.0
    %2533 = vmatprep.subr.mxu0 0.0
    %2534 = vmatpush2.msra.mxu0 0.0
    %2535 = vmatprep.subr.mxu0 0.0
    %2536 = vmatpush2.msra.mxu0 0.0
    %2537 = vmatprep.subr.mxu0 0.0
    %2538 = vmatpush2.msra.mxu0 0.0
    %2539 = vmatprep.subr.mxu0 0.0
    %2540 = vmatpush2.msra.mxu0 0.0
    %2541 = vmatprep.mubr.f32.mxu0 0.0
    %2542 = vmatmul.mubr.f32.gmra.mxu0 %v2475
    %v2543 = vpop.f32.mrf.mxu0
    %v2544 = vadd.f32 0.0, %v2543
    %v2545 = vpop.f32.mrf.mxu0
    %2546 = vdwg.mxu0
    %v2548 = vsel %vm706, %v2468, 0
    %v2551 = vsel %vm706, %v2544, 0
    %2553 = vmatprep.subr.mxu0 0.0
    %2554 = vmatpush1.msra.mxu0 0.0
    %2555 = vmatprep.subr.mxu0 0.0
    %2556 = vmatpush1.msra.mxu0 0.0
    %2557 = vmatprep.subr.mxu0 0.0
    %2558 = vmatpush1.msra.mxu0 0.0
    %2559 = vmatprep.subr.mxu0 0.0
    %2560 = vmatpush1.msra.mxu0 0.0
    %2561 = vmatprep.subr.mxu0 0.0
    %2562 = vmatpush1.msra.mxu0 0.0
    %2563 = vmatprep.subr.mxu0 0.0
    %2564 = vmatpush1.msra.mxu0 0.0
    %2565 = vmatprep.subr.mxu0 0.0
    %2566 = vmatpush1.msra.mxu0 0.0
    %2567 = vmatprep.subr.mxu0 0.0
    %2568 = vmatpush1.msra.mxu0 0.0
    %2569 = vmatprep.subr.mxu0 0.0
    %2570 = vmatpush1.msra.mxu0 0.0
    %2571 = vmatprep.subr.mxu0 0.0
    %2572 = vmatpush1.msra.mxu0 0.0
    %2573 = vmatprep.subr.mxu0 0.0
    %2574 = vmatpush1.msra.mxu0 0.0
    %2575 = vmatprep.subr.mxu0 0.0
    %2576 = vmatpush1.msra.mxu0 0.0
    %2577 = vmatprep.subr.mxu0 0.0
    %2578 = vmatpush1.msra.mxu0 0.0
    %2579 = vmatprep.subr.mxu0 0.0
    %2580 = vmatpush1.msra.mxu0 0.0
    %2581 = vmatprep.subr.mxu0 0.0
    %2582 = vmatpush1.msra.mxu0 %v548
    %2583 = vmatprep.subr.mxu0 0.0
    %2584 = vmatpush1.msra.mxu0 %v547
    %2585 = vmatprep.subr.mxu0 0.0
    %2586 = vmatpush2.msra.mxu0 0.0
    %2587 = vmatprep.subr.mxu0 0.0
    %2588 = vmatpush2.msra.mxu0 0.0
    %2589 = vmatprep.subr.mxu0 0.0
    %2590 = vmatpush2.msra.mxu0 0.0
    %2591 = vmatprep.subr.mxu0 0.0
    %2592 = vmatpush2.msra.mxu0 0.0
    %2593 = vmatprep.subr.mxu0 0.0
    %2594 = vmatpush2.msra.mxu0 0.0
    %2595 = vmatprep.subr.mxu0 0.0
    %2596 = vmatpush2.msra.mxu0 0.0
    %2597 = vmatprep.subr.mxu0 0.0
    %2598 = vmatpush2.msra.mxu0 0.0
    %2599 = vmatprep.subr.mxu0 0.0
    %2600 = vmatpush2.msra.mxu0 0.0
    %2601 = vmatprep.subr.mxu0 0.0
    %2602 = vmatpush2.msra.mxu0 0.0
    %2603 = vmatprep.subr.mxu0 0.0
    %2604 = vmatpush2.msra.mxu0 0.0
    %2605 = vmatprep.subr.mxu0 0.0
    %2606 = vmatpush2.msra.mxu0 0.0
    %2607 = vmatprep.subr.mxu0 0.0
    %2608 = vmatpush2.msra.mxu0 0.0
    %2609 = vmatprep.subr.mxu0 0.0
    %2610 = vmatpush2.msra.mxu0 0.0
    %2611 = vmatprep.subr.mxu0 0.0
    %2612 = vmatpush2.msra.mxu0 0.0
    %2613 = vmatprep.subr.mxu0 0.0
    %2614 = vmatpush2.msra.mxu0 0.0
    %2615 = vmatprep.subr.mxu0 0.0
    %2616 = vmatpush2.msra.mxu0 0.0
    %2617 = vmatprep.mubr.f32.mxu0 0.0
    %2618 = vmatmul.mubr.f32.gmra.mxu0 %v2548
    %v2619 = vpop.f32.mrf.mxu0
    %v2620 = vadd.f32 0.0, %v2619
    %v2621 = vpop.f32.mrf.mxu0
    %2622 = vmatprep.mubr.f32.mxu0 0.0
    %2623 = vmatmul.mubr.f32.gmra.mxu0 %v2551
    %v2624 = vpop.f32.mrf.mxu0
    %v2625 = vadd.f32 0.0, %v2624
    %v2626 = vpop.f32.mrf.mxu0
    %2627 = vdwg.mxu0
    %v2629 = vsel %vm706, %v2136, 0
    %v2632 = vsel %vm706, %v2212, 0
    %2634 = vmatprep.subr.mxu0 0.0
    %2635 = vmatpush1.msra.mxu0 0.0
    %2636 = vmatprep.subr.mxu0 0.0
    %2637 = vmatpush1.msra.mxu0 0.0
    %2638 = vmatprep.subr.mxu0 0.0
    %2639 = vmatpush1.msra.mxu0 0.0
    %2640 = vmatprep.subr.mxu0 0.0
    %2641 = vmatpush1.msra.mxu0 0.0
    %2642 = vmatprep.subr.mxu0 0.0
    %2643 = vmatpush1.msra.mxu0 0.0
    %2644 = vmatprep.subr.mxu0 0.0
    %2645 = vmatpush1.msra.mxu0 0.0
    %2646 = vmatprep.subr.mxu0 0.0
    %2647 = vmatpush1.msra.mxu0 0.0
    %2648 = vmatprep.subr.mxu0 0.0
    %2649 = vmatpush1.msra.mxu0 0.0
    %2650 = vmatprep.subr.mxu0 0.0
    %2651 = vmatpush1.msra.mxu0 0.0
    %2652 = vmatprep.subr.mxu0 0.0
    %2653 = vmatpush1.msra.mxu0 0.0
    %2654 = vmatprep.subr.mxu0 0.0
    %2655 = vmatpush1.msra.mxu0 0.0
    %2656 = vmatprep.subr.mxu0 0.0
    %2657 = vmatpush1.msra.mxu0 0.0
    %2658 = vmatprep.subr.mxu0 0.0
    %2659 = vmatpush1.msra.mxu0 0.0
    %2660 = vmatprep.subr.mxu0 0.0
    %2661 = vmatpush1.msra.mxu0 0.0
    %2662 = vmatprep.subr.mxu0 0.0
    %2663 = vmatpush1.msra.mxu0 %v546
    %2664 = vmatprep.subr.mxu0 0.0
    %2665 = vmatpush1.msra.mxu0 %v545
    %2666 = vmatprep.subr.mxu0 0.0
    %2667 = vmatpush2.msra.mxu0 0.0
    %2668 = vmatprep.subr.mxu0 0.0
    %2669 = vmatpush2.msra.mxu0 0.0
    %2670 = vmatprep.subr.mxu0 0.0
    %2671 = vmatpush2.msra.mxu0 0.0
    %2672 = vmatprep.subr.mxu0 0.0
    %2673 = vmatpush2.msra.mxu0 0.0
    %2674 = vmatprep.subr.mxu0 0.0
    %2675 = vmatpush2.msra.mxu0 0.0
    %2676 = vmatprep.subr.mxu0 0.0
    %2677 = vmatpush2.msra.mxu0 0.0
    %2678 = vmatprep.subr.mxu0 0.0
    %2679 = vmatpush2.msra.mxu0 0.0
    %2680 = vmatprep.subr.mxu0 0.0
    %2681 = vmatpush2.msra.mxu0 0.0
    %2682 = vmatprep.subr.mxu0 0.0
    %2683 = vmatpush2.msra.mxu0 0.0
    %2684 = vmatprep.subr.mxu0 0.0
    %2685 = vmatpush2.msra.mxu0 0.0
    %2686 = vmatprep.subr.mxu0 0.0
    %2687 = vmatpush2.msra.mxu0 0.0
    %2688 = vmatprep.subr.mxu0 0.0
    %2689 = vmatpush2.msra.mxu0 0.0
    %2690 = vmatprep.subr.mxu0 0.0
    %2691 = vmatpush2.msra.mxu0 0.0
    %2692 = vmatprep.subr.mxu0 0.0
    %2693 = vmatpush2.msra.mxu0 0.0
    %2694 = vmatprep.subr.mxu0 0.0
    %2695 = vmatpush2.msra.mxu0 0.0
    %2696 = vmatprep.subr.mxu0 0.0
    %2697 = vmatpush2.msra.mxu0 0.0
    %2698 = vmatprep.mubr.f32.mxu0 0.0
    %2699 = vmatmul.mubr.f32.gmra.mxu0 %v2629
    %v2700 = vpop.f32.mrf.mxu0
    %v2701 = vadd.f32 %v2620, %v2700
    %v2702 = vpop.f32.mrf.mxu0
    %2703 = vmatprep.mubr.f32.mxu0 0.0
    %2704 = vmatmul.mubr.f32.gmra.mxu0 %v2632
    %v2705 = vpop.f32.mrf.mxu0
    %v2706 = vadd.f32 %v2625, %v2705
    %v2707 = vpop.f32.mrf.mxu0
    %2708 = vdwg.mxu0
    %v2709 = vadd.f32 %v1760, %v2701
    %v2710 = vadd.f32 %v1761, %v2706
    %v2712 = vlaneseq
    %v2713 = vshrl.u32 %v2712, 7
    %v2714 = vsub.s32 0, %v2713
    %v2715 = vrot.slane %v550, %v2714
    %v2717 = vadd.f32 %v2709, %v2715
    %v2718 = vadd.f32 %v2710, %v2715
    %v2719 = vsel %vm252, %v2717, 0.0
    %2720 = vadd.xlane.f32.xlu0 %v2719
    %v2721 = vpop.xlane.xlu0 %2720
    %v2722 = vsel %vm252, %v2718, 0.0
    %2723 = vadd.xlane.f32.xlu0 %v2722
    %v2724 = vpop.xlane.xlu0 %2723
    %v2725 = vmul.f32 %v2721, %v585
    %v2726 = vmul.f32 %v2724, %v585
    %v2727 = vsub.f32 %v2717, %v2725
    %v2728 = vsub.f32 %v2718, %v2726
    %v2729 = vmul.f32 %v2727, %v2727
    %v2730 = vmul.f32 %v2728, %v2728
    %v2731 = vsel %vm252, %v2729, 0.0
    %2732 = vadd.xlane.f32.xlu0 %v2731
    %v2733 = vpop.xlane.xlu0 %2732
    %v2734 = vsel %vm252, %v2730, 0.0
    %2735 = vadd.xlane.f32.xlu0 %v2734
    %v2736 = vpop.xlane.xlu0 %2735
    %v2737 = vmul.f32 %v2733, %v585
    %v2738 = vmul.f32 %v2736, %v585
    %v2739 = vadd.f32 %v2737, 1e-05
    %v2740 = vadd.f32 %v2738, 1e-05
    %v2741 = vrsqrt.pop %v2739
    %v2742 = vrsqrt.pop %v2740
    %v2743 = vmul.f32 %v2727, %v2741
    %v2744 = vmul.f32 %v2728, %v2742
    %v2746 = vlaneseq
    %v2747 = vshrl.u32 %v2746, 7
    %v2748 = vsub.s32 0, %v2747
    %v2749 = vrot.slane %v530, %v2748
    %v2751 = vmul.f32 %v2743, %v2749
    %v2752 = vmul.f32 %v2744, %v2749
    %v2754 = vlaneseq
    %v2755 = vshrl.u32 %v2754, 7
    %v2756 = vsub.s32 0, %v2755
    %v2757 = vrot.slane %v532, %v2756
    %v2759 = vadd.f32 %v2751, %v2757
    %v2760 = vadd.f32 %v2752, %v2757
    %v2762 = vlaneseq
    %v2763 = vshrl.u32 %v2762, 7
    %v2764 = vsub.s32 0, %v2763
    %v2765 = vrot.slane %v560, %v2764
    %v2768 = vsel %vm252, %v2759, 0
    %v2771 = vsel %vm252, %v2760, 0
    %2773 = vmatprep.subr.mxu0 0.0
    %2774 = vmatpush1.msra.mxu0 0.0
    %2775 = vmatprep.subr.mxu0 0.0
    %2776 = vmatpush1.msra.mxu0 0.0
    %2777 = vmatprep.subr.mxu0 0.0
    %2778 = vmatpush1.msra.mxu0 0.0
    %2779 = vmatprep.subr.mxu0 0.0
    %2780 = vmatpush1.msra.mxu0 0.0
    %2781 = vmatprep.subr.mxu0 0.0
    %2782 = vmatpush1.msra.mxu0 0.0
    %2783 = vmatprep.subr.mxu0 0.0
    %2784 = vmatpush1.msra.mxu0 0.0
    %2785 = vmatprep.subr.mxu0 0.0
    %2786 = vmatpush1.msra.mxu0 0.0
    %2787 = vmatprep.subr.mxu0 0.0
    %2788 = vmatpush1.msra.mxu0 0.0
    %2789 = vmatprep.subr.mxu0 0.0
    %2790 = vmatpush1.msra.mxu0 0.0
    %2791 = vmatprep.subr.mxu0 0.0
    %2792 = vmatpush1.msra.mxu0 0.0
    %2793 = vmatprep.subr.mxu0 0.0
    %2794 = vmatpush1.msra.mxu0 0.0
    %2795 = vmatprep.subr.mxu0 0.0
    %2796 = vmatpush1.msra.mxu0 0.0
    %2797 = vmatprep.subr.mxu0 0.0
    %2798 = vmatpush1.msra.mxu0 %v558
    %2799 = vmatprep.subr.mxu0 0.0
    %2800 = vmatpush1.msra.mxu0 %v557
    %2801 = vmatprep.subr.mxu0 0.0
    %2802 = vmatpush1.msra.mxu0 %v556
    %2803 = vmatprep.subr.mxu0 0.0
    %2804 = vmatpush1.msra.mxu0 %v555
    %2805 = vmatprep.subr.mxu0 0.0
    %2806 = vmatpush2.msra.mxu0 0.0
    %2807 = vmatprep.subr.mxu0 0.0
    %2808 = vmatpush2.msra.mxu0 0.0
    %2809 = vmatprep.subr.mxu0 0.0
    %2810 = vmatpush2.msra.mxu0 0.0
    %2811 = vmatprep.subr.mxu0 0.0
    %2812 = vmatpush2.msra.mxu0 0.0
    %2813 = vmatprep.subr.mxu0 0.0
    %2814 = vmatpush2.msra.mxu0 0.0
    %2815 = vmatprep.subr.mxu0 0.0
    %2816 = vmatpush2.msra.mxu0 0.0
    %2817 = vmatprep.subr.mxu0 0.0
    %2818 = vmatpush2.msra.mxu0 0.0
    %2819 = vmatprep.subr.mxu0 0.0
    %2820 = vmatpush2.msra.mxu0 0.0
    %2821 = vmatprep.subr.mxu0 0.0
    %2822 = vmatpush2.msra.mxu0 0.0
    %2823 = vmatprep.subr.mxu0 0.0
    %2824 = vmatpush2.msra.mxu0 0.0
    %2825 = vmatprep.subr.mxu0 0.0
    %2826 = vmatpush2.msra.mxu0 0.0
    %2827 = vmatprep.subr.mxu0 0.0
    %2828 = vmatpush2.msra.mxu0 0.0
    %2829 = vmatprep.subr.mxu0 0.0
    %2830 = vmatpush2.msra.mxu0 0.0
    %2831 = vmatprep.subr.mxu0 0.0
    %2832 = vmatpush2.msra.mxu0 0.0
    %2833 = vmatprep.subr.mxu0 0.0
    %2834 = vmatpush2.msra.mxu0 0.0
    %2835 = vmatprep.subr.mxu0 0.0
    %2836 = vmatpush2.msra.mxu0 0.0
    %2837 = vmatprep.mubr.f32.mxu0 0.0
    %2838 = vmatmul.mubr.f32.gmra.mxu0 %v2768
    %v2839 = vpop.f32.mrf.mxu0
    %v2840 = vadd.f32 %v2765, %v2839
    %v2841 = vpop.f32.mrf.mxu0
    %2842 = vmatprep.mubr.f32.mxu0 0.0
    %2843 = vmatmul.mubr.f32.gmra.mxu0 %v2771
    %v2844 = vpop.f32.mrf.mxu0
    %v2845 = vadd.f32 %v2765, %v2844
    %v2846 = vpop.f32.mrf.mxu0
    %2847 = vdwg.mxu0
    %v2848 = vmax.f32 %v2840, 0.0
    %v2849 = vmax.f32 %v2845, 0.0
    %v2851 = vsel %vm1670, %v2848, 0
    %v2854 = vsel %vm1670, %v2849, 0
    %2856 = vmatprep.subr.mxu0 0.0
    %2857 = vmatpush1.msra.mxu0 0.0
    %2858 = vmatprep.subr.mxu0 0.0
    %2859 = vmatpush1.msra.mxu0 0.0
    %2860 = vmatprep.subr.mxu0 0.0
    %2861 = vmatpush1.msra.mxu0 0.0
    %2862 = vmatprep.subr.mxu0 0.0
    %2863 = vmatpush1.msra.mxu0 0.0
    %2864 = vmatprep.subr.mxu0 0.0
    %2865 = vmatpush1.msra.mxu0 0.0
    %2866 = vmatprep.subr.mxu0 0.0
    %2867 = vmatpush1.msra.mxu0 0.0
    %2868 = vmatprep.subr.mxu0 0.0
    %2869 = vmatpush1.msra.mxu0 0.0
    %2870 = vmatprep.subr.mxu0 0.0
    %2871 = vmatpush1.msra.mxu0 0.0
    %2872 = vmatprep.subr.mxu0 0.0
    %2873 = vmatpush1.msra.mxu0 %v576
    %2874 = vmatprep.subr.mxu0 0.0
    %2875 = vmatpush1.msra.mxu0 %v575
    %2876 = vmatprep.subr.mxu0 0.0
    %2877 = vmatpush1.msra.mxu0 %v574
    %2878 = vmatprep.subr.mxu0 0.0
    %2879 = vmatpush1.msra.mxu0 %v573
    %2880 = vmatprep.subr.mxu0 0.0
    %2881 = vmatpush1.msra.mxu0 %v572
    %2882 = vmatprep.subr.mxu0 0.0
    %2883 = vmatpush1.msra.mxu0 %v571
    %2884 = vmatprep.subr.mxu0 0.0
    %2885 = vmatpush1.msra.mxu0 %v570
    %2886 = vmatprep.subr.mxu0 0.0
    %2887 = vmatpush1.msra.mxu0 %v569
    %2888 = vmatprep.subr.mxu0 0.0
    %2889 = vmatpush2.msra.mxu0 0.0
    %2890 = vmatprep.subr.mxu0 0.0
    %2891 = vmatpush2.msra.mxu0 0.0
    %2892 = vmatprep.subr.mxu0 0.0
    %2893 = vmatpush2.msra.mxu0 0.0
    %2894 = vmatprep.subr.mxu0 0.0
    %2895 = vmatpush2.msra.mxu0 0.0
    %2896 = vmatprep.subr.mxu0 0.0
    %2897 = vmatpush2.msra.mxu0 0.0
    %2898 = vmatprep.subr.mxu0 0.0
    %2899 = vmatpush2.msra.mxu0 0.0
    %2900 = vmatprep.subr.mxu0 0.0
    %2901 = vmatpush2.msra.mxu0 0.0
    %2902 = vmatprep.subr.mxu0 0.0
    %2903 = vmatpush2.msra.mxu0 0.0
    %2904 = vmatprep.subr.mxu0 0.0
    %2905 = vmatpush2.msra.mxu0 0.0
    %2906 = vmatprep.subr.mxu0 0.0
    %2907 = vmatpush2.msra.mxu0 0.0
    %2908 = vmatprep.subr.mxu0 0.0
    %2909 = vmatpush2.msra.mxu0 0.0
    %2910 = vmatprep.subr.mxu0 0.0
    %2911 = vmatpush2.msra.mxu0 0.0
    %2912 = vmatprep.subr.mxu0 0.0
    %2913 = vmatpush2.msra.mxu0 0.0
    %2914 = vmatprep.subr.mxu0 0.0
    %2915 = vmatpush2.msra.mxu0 0.0
    %2916 = vmatprep.subr.mxu0 0.0
    %2917 = vmatpush2.msra.mxu0 0.0
    %2918 = vmatprep.subr.mxu0 0.0
    %2919 = vmatpush2.msra.mxu0 0.0
    %2920 = vmatprep.mubr.f32.mxu0 0.0
    %2921 = vmatmul.mubr.f32.gmra.mxu0 %v2851
    %v2922 = vpop.f32.mrf.mxu0
    %v2923 = vadd.f32 0.0, %v2922
    %v2924 = vpop.f32.mrf.mxu0
    %2925 = vmatprep.mubr.f32.mxu0 0.0
    %2926 = vmatmul.mubr.f32.gmra.mxu0 %v2854
    %v2927 = vpop.f32.mrf.mxu0
    %v2928 = vadd.f32 0.0, %v2927
    %v2929 = vpop.f32.mrf.mxu0
    %2930 = vdwg.mxu0
    %v2931 = vadd.f32 %v2717, %v2923
    %v2932 = vadd.f32 %v2718, %v2928
    %v2934 = vlaneseq
    %v2935 = vshrl.u32 %v2934, 7
    %v2936 = vsub.s32 0, %v2935
    %v2937 = vrot.slane %v578, %v2936
    %v2939 = vadd.f32 %v2931, %v2937
    %v2940 = vadd.f32 %v2932, %v2937
    %v2941 = vld [vmem:[%s18] sm:$0xff]
    %v2942 = vld [vmem:[%s18 + $0x8] sm:$0xff]
    %v2943 = vld [vmem:[%s18 + $0x10] sm:$0xff]
    %v2944 = vld [vmem:[%s18 + $0x18] sm:$0xff]
    %v2945 = vld [vmem:[%s19] sm:$0x1]
    %v2947 = vlaneseq
    %v2948 = vshrl.u32 %v2947, 7
    %v2949 = vsub.s32 0, %v2948
    %v2950 = vrot.slane %v2945, %v2949
    %v2953 = vsel %vm252, %v2939, 0
    %v2956 = vsel %vm252, %v2940, 0
    %2958 = vmatprep.subr.mxu0 0.0
    %2959 = vmatpush1.msra.mxu0 0.0
    %2960 = vmatprep.subr.mxu0 0.0
    %2961 = vmatpush1.msra.mxu0 0.0
    %2962 = vmatprep.subr.mxu0 0.0
    %2963 = vmatpush1.msra.mxu0 0.0
    %2964 = vmatprep.subr.mxu0 0.0
    %2965 = vmatpush1.msra.mxu0 0.0
    %2966 = vmatprep.subr.mxu0 0.0
    %2967 = vmatpush1.msra.mxu0 0.0
    %2968 = vmatprep.subr.mxu0 0.0
    %2969 = vmatpush1.msra.mxu0 0.0
    %2970 = vmatprep.subr.mxu0 0.0
    %2971 = vmatpush1.msra.mxu0 0.0
    %2972 = vmatprep.subr.mxu0 0.0
    %2973 = vmatpush1.msra.mxu0 0.0
    %2974 = vmatprep.subr.mxu0 0.0
    %2975 = vmatpush1.msra.mxu0 0.0
    %2976 = vmatprep.subr.mxu0 0.0
    %2977 = vmatpush1.msra.mxu0 0.0
    %2978 = vmatprep.subr.mxu0 0.0
    %2979 = vmatpush1.msra.mxu0 0.0
    %2980 = vmatprep.subr.mxu0 0.0
    %2981 = vmatpush1.msra.mxu0 0.0
    %2982 = vmatprep.subr.mxu0 0.0
    %2983 = vmatpush1.msra.mxu0 %v2944
    %2984 = vmatprep.subr.mxu0 0.0
    %2985 = vmatpush1.msra.mxu0 %v2943
    %2986 = vmatprep.subr.mxu0 0.0
    %2987 = vmatpush1.msra.mxu0 %v2942
    %2988 = vmatprep.subr.mxu0 0.0
    %2989 = vmatpush1.msra.mxu0 %v2941
    %2990 = vmatprep.subr.mxu0 0.0
    %2991 = vmatpush2.msra.mxu0 0.0
    %2992 = vmatprep.subr.mxu0 0.0
    %2993 = vmatpush2.msra.mxu0 0.0
    %2994 = vmatprep.subr.mxu0 0.0
    %2995 = vmatpush2.msra.mxu0 0.0
    %2996 = vmatprep.subr.mxu0 0.0
    %2997 = vmatpush2.msra.mxu0 0.0
    %2998 = vmatprep.subr.mxu0 0.0
    %2999 = vmatpush2.msra.mxu0 0.0
    %3000 = vmatprep.subr.mxu0 0.0
    %3001 = vmatpush2.msra.mxu0 0.0
    %3002 = vmatprep.subr.mxu0 0.0
    %3003 = vmatpush2.msra.mxu0 0.0
    %3004 = vmatprep.subr.mxu0 0.0
    %3005 = vmatpush2.msra.mxu0 0.0
    %3006 = vmatprep.subr.mxu0 0.0
    %3007 = vmatpush2.msra.mxu0 0.0
    %3008 = vmatprep.subr.mxu0 0.0
    %3009 = vmatpush2.msra.mxu0 0.0
    %3010 = vmatprep.subr.mxu0 0.0
    %3011 = vmatpush2.msra.mxu0 0.0
    %3012 = vmatprep.subr.mxu0 0.0
    %3013 = vmatpush2.msra.mxu0 0.0
    %3014 = vmatprep.subr.mxu0 0.0
    %3015 = vmatpush2.msra.mxu0 0.0
    %3016 = vmatprep.subr.mxu0 0.0
    %3017 = vmatpush2.msra.mxu0 0.0
    %3018 = vmatprep.subr.mxu0 0.0
    %3019 = vmatpush2.msra.mxu0 0.0
    %3020 = vmatprep.subr.mxu0 0.0
    %3021 = vmatpush2.msra.mxu0 0.0
    %3022 = vmatprep.mubr.f32.mxu0 0.0
    %3023 = vmatmul.mubr.f32.gmra.mxu0 %v2953
    %v3024 = vpop.f32.mrf.mxu0
    %v3025 = vadd.f32 %v2950, %v3024
    %v3026 = vpop.f32.mrf.mxu0
    %3027 = vmatprep.mubr.f32.mxu0 0.0
    %3028 = vmatmul.mubr.f32.gmra.mxu0 %v2956
    %v3029 = vpop.f32.mrf.mxu0
    %v3030 = vadd.f32 %v2950, %v3029
    %v3031 = vpop.f32.mrf.mxu0
    %3032 = vdwg.mxu0
    %v3033 = vmax.f32 %v3025, 0.0
    %v3034 = vmax.f32 %v3030, 0.0
    %v3035 = vld [vmem:[%s20] sm:$0x1]
    %v3037 = vlaneseq
    %v3038 = vshrl.u32 %v3037, 7
    %v3039 = vsub.s32 0, %v3038
    %v3040 = vrot.slane %v3035, %v3039
    %v3042 = vmul.f32 %v3033, %v3040
    %v3043 = vmul.f32 %v3034, %v3040
    %v3044 = vsel %vm706, %v3042, 0.0
    %3045 = vadd.xlane.f32.xlu0 %v3044
    %v3046 = vpop.xlane.xlu0 %3045
    %v3047 = vsel %vm706, %v3043, 0.0
    %3048 = vadd.xlane.f32.xlu0 %v3047
    %v3049 = vpop.xlane.xlu0 %3048
    %v3050 = vld [vmem:[#allocation2] sm:$0x1]
    %v3052 = vlaneseq
    %v3053 = vshrl.u32 %v3052, 7
    %v3054 = vsub.s32 0, %v3053
    %v3055 = vrot.slane %v3050, %v3054
    %3056 = vset.pattern.permute.xlu0 0
    %3057 = vperm.xlu0 %3056, %v3055
    %v3058 = vpop.permute.xlu0 %3057
    %v3060 = vadd.f32 %v3046, %v3058
    %v3061 = vadd.f32 %v3049, %v3058
    %v3062 = vsub.f32 0.0, %v3060
    %v3063 = vsub.f32 0.0, %v3061
    %v3064 = vmul.f32 %v3062, 1.442695
    %v3065 = vpow.pop %v3064
    %v3066 = vmul.f32 %v3063, 1.442695
    %v3067 = vpow.pop %v3066
    %v3068 = vadd.f32 %v3065, 1.0
    %v3069 = vadd.f32 %v3067, 1.0
    %v3070 = vrcp.pop %v3068
    %v3071 = vrcp.pop %v3069
    %v3074 = vlaneseq
    %v3075 = vand.u32 %v3074, 127
    %v3076 = vlaneseq
    %v3077 = vshrl.u32 %v3076, 7
    %v3078 = vsub.s32 %v3075, %v3077
    %v3079 = vrot.slane %v3070, %v3078
    %v3080 = vlaneseq
    %v3081 = vshrl.u32 %v3080, 7
    %v3082 = vsub.s32 %v3075, %v3081
    %v3083 = vrot.slane %v3071, %v3082
    %vm3084 = vcmask 1041409
    %v3085 = vsel %vm3084, %v3083, %v3079
    %vm3087 = vcmask 58368
    %3088 = vst.msk [vmem:[#allocation14] sm:$0x3] %vm3087, %v3085
    // Predicated region
    $region114: #{sl_module_eib_forward.1} parent=1 // pred_check
      _
    $region115: #{sl_module_eib_forward.1} parent=1 // pred_check_branch
      %3090 = sbr.rel (0) target = $region117
    $region116: #{sl_module_eib_forward.1} parent=1 // pred_region
      %s3092 = ssub.s32 32, 32
      %3093 = vsyncadd [#allocation5], %s3092
      %s3095 = sshll.u32 [#allocation14], 4
      %s3096 = int_to_ptr.vmem [resolvable:$true] %s3095
      %3098 = dma.vmem_to_hbm [thread:$0]  %s3096, 32, %s22, [#allocation5]
    $region117: #{sl_module_eib_forward.1} parent=1 // pred_fallthru
      _
    // Predicated region
    $region118: #{sl_module_eib_forward.1} parent=1 // pred_check
      _
    $region119: #{sl_module_eib_forward.1} parent=1 // pred_check_branch
      %3100 = sbr.rel (0) target = $region121
    $region120: #{sl_module_eib_forward.1} parent=1 // pred_region
      %s3102 = ssub.s32 16, 16
      %3103 = vsyncadd [#allocation16], %s3102
      %s3105 = sshll.u32 [#allocation15], 4
      %s3106 = int_to_ptr.vmem [resolvable:$true] %s3105
      %3108 = dma.vmem_to_hbm [thread:$0]  %s3106, 16, %s23, [#allocation16]
    $region121: #{sl_module_eib_forward.1} parent=1 // pred_fallthru
      _
    // Predicated region
    $region122: #{sl_module_eib_forward.1} parent=1 // pred_check
      _
    $region123: #{sl_module_eib_forward.1} parent=1 // pred_check_branch
      %3110 = sbr.rel (0) target = $region125
    $region124: #{sl_module_eib_forward.1} parent=1 // pred_region
      %3111 = dma.done [#allocation5], 32
    $region125: #{sl_module_eib_forward.1} parent=1 // pred_fallthru
      _
    // Predicated region
    $region126: #{sl_module_eib_forward.1} parent=1 // pred_check
      _
    $region127: #{sl_module_eib_forward.1} parent=1 // pred_check_branch
      %3113 = sbr.rel (0) target = $region129
    $region128: #{sl_module_eib_forward.1} parent=1 // pred_region
      %3114 = dma.done [#allocation16], 16
    $region129: #{sl_module_eib_forward.1} parent=1 // pred_fallthru
      _
    %3115 = vsyncpa [#allocation4], 1
    %3116 = vsyncpa [#allocation7], 1
    %3117 = vsyncpa [#allocation10], 1
    %3118 = vsyncpa [#allocation13], 1
    %3119 = vsyncpa [#allocation5], 1
    %3120 = vsyncpa [#allocation16], 1

</llo_original>
